<compile_context>
chip_gen: v7x
topology: tpu7x:2x2x1
jax: 0.10.0
libtpu: 0.0.40
codegen_flags: <defaults>
</compile_context>

<pallas_src>
import functools

import jax
import jax.numpy as jnp
from jax import lax
from jax.experimental import pallas as pl
from jax.experimental.pallas import tpu as pltpu

EPS = 1e-5
FEAT = 512
N_HIDDEN = 4
OUT_PAD = 128  # lane-dense padding for the final 512 -> 1 projection


def domain_classifier_kernel(h_ref, w_ref, g_ref, beta_ref, w5_ref, b5_ref,
                             out_ref):
    # Whole forward in one invocation: all refs are resident VMEM blocks.
    x = h_ref[...].astype(jnp.bfloat16)                       # (B,512) bf16
    inv_b = 1.0 / x.shape[0]

    for i in range(N_HIDDEN):                                 # static unroll
        # Linear(512,512).  Bias omitted: training-mode BN subtracts the batch
        # mean immediately after, cancelling any per-feature constant exactly.
        y = jnp.dot(x, w_ref[i], preferred_element_type=jnp.float32)  # (B,512) f32

        # One-pass batch statistics (training mode, biased variance), clamped
        # against catastrophic cancellation going slightly negative.
        mean = jnp.sum(y, axis=0, keepdims=True) * inv_b      # (1,512)
        ex2 = jnp.sum(y * y, axis=0, keepdims=True) * inv_b   # E[y^2]
        var = jnp.maximum(ex2 - mean * mean, 0.0)

        # Fold BN affine into a single per-feature scale/shift; ReLU epilogue.
        scale = g_ref[i] * lax.rsqrt(var + EPS)               # (1,512)
        shift = beta_ref[i] - mean * scale
        x = jnp.maximum(y * scale + shift, 0.0).astype(jnp.bfloat16)

    # Final Linear(512,1), padded to 128 lanes (column 0 is the real one).
    out_ref[...] = (
        jnp.dot(x, w5_ref[...], preferred_element_type=jnp.float32)
        + b5_ref[...]
    ).astype(out_ref.dtype)


def pack_params(params):
    """One-time parameter packing -- hoisted out of the per-call path.

    Returns (w_stack, g_stack, beta_stack, w5_pad, b5_pad).
    Hidden-layer Linear biases (params[4*i+1]) are intentionally not packed:
    training-mode BN's mean subtraction cancels them exactly.
    """
    w_stack = jnp.stack(
        [params[4 * i] for i in range(N_HIDDEN)]).astype(jnp.bfloat16)      # (4,512,512)
    g_stack = jnp.stack([params[4 * i + 2] for i in range(N_HIDDEN)])       # (4,1,512)
    beta_stack = jnp.stack([params[4 * i + 3] for i in range(N_HIDDEN)])    # (4,1,512)
    w5, b5 = params[16], params[17]
    w5_pad = (jnp.zeros((FEAT, OUT_PAD), jnp.float32)
              .at[:, :1].set(w5).astype(jnp.bfloat16))                      # (512,128)
    b5_pad = jnp.zeros((1, OUT_PAD), jnp.float32).at[:, :1].set(b5)         # (1,128)
    return (w_stack, g_stack, beta_stack, w5_pad, b5_pad)


@jax.jit
def domain_classifier_forward(h, packed):
    """h: (B, 512) float32.  packed: output of pack_params (done once)."""
    w_stack, g_stack, beta_stack, w5_pad, b5_pad = packed
    B = h.shape[0]

    # VMEM budget scales with B (BN forces the whole batch into one block):
    # ~2.3 MiB resident weights + a handful of (B,512) activation buffers.
    act_bytes = B * FEAT * 4
    vmem_limit = int(min(64 << 20, (8 << 20) + 16 * act_bytes))

    out_padded = pl.pallas_call(
        domain_classifier_kernel,
        out_shape=jax.ShapeDtypeStruct((B, OUT_PAD), jnp.float32),
        # No grid: single invocation, every input is a resident full-array
        # VMEM block (single DMA each, no double buffering).
        compiler_params=pltpu.CompilerParams(vmem_limit_bytes=vmem_limit),
    )(h, w_stack, g_stack, beta_stack, w5_pad, b5_pad)

    return out_padded[:, :1]


def init_params(key):
    """Deterministic synthetic parameters mirroring the PyTorch module shapes."""
    params = []
    keys = jax.random.split(key, 10)
    k_i = 0
    for _ in range(N_HIDDEN):
        # Linear(512, 512): weight stored transposed (in, out); bias (1, 512)
        w = jax.random.normal(keys[k_i], (FEAT, FEAT), jnp.float32) * 0.02
        b = jax.random.normal(keys[k_i + 1], (1, FEAT), jnp.float32) * 0.02
        k_i += 2
        gamma = jnp.ones((1, FEAT), jnp.float32)    # BatchNorm1d weight
        beta = jnp.zeros((1, FEAT), jnp.float32)    # BatchNorm1d bias
        params.extend([w, b, gamma, beta])
    # Final Linear(512, 1)
    w5 = jax.random.normal(keys[k_i], (FEAT, 1), jnp.float32) * 0.02
    b5 = jax.random.normal(keys[k_i + 1], (1, 1), jnp.float32) * 0.02
    params.extend([w5, b5])
    return params


def reference_forward(h, params):
    """Pure-JAX f32 reference (keeps biases, two-pass variance).

    Weights are rounded through bf16 to match the kernel's declared weight
    quantization; everything else (biases included) follows the PyTorch module
    in training mode, demonstrating the bias-dropping in the kernel is exact.
    """
    def q(w):
        return w.astype(jnp.bfloat16).astype(jnp.float32)

    x = h
    for i in range(N_HIDDEN):
        w, b, g, be = params[4 * i: 4 * i + 4]
        y = x @ q(w) + b
        mean = jnp.mean(y, axis=0, keepdims=True)
        var = jnp.mean((y - mean) ** 2, axis=0, keepdims=True)
        y = (y - mean) / jnp.sqrt(var + EPS) * g + be
        x = jnp.maximum(y, 0.0)
    w5, b5 = params[16], params[17]
    return x @ q(w5) + b5


if __name__ == "__main__":
    key = jax.random.PRNGKey(0)
    k_h, k_p = jax.random.split(key)

    B = 8  # small batch for the check; feature dim fixed at 512 by the module
    h = jax.random.normal(k_h, (B, FEAT), jnp.float32)
    params = init_params(k_p)

    # Pack once (init-time), reuse across calls.
    packed = jax.block_until_ready(pack_params(params))

    out = domain_classifier_forward(h, packed)
    out = jax.block_until_ready(out)

    ref = reference_forward(h, params)
    assert out.shape == (B, 1), out.shape
    # Activations are cast to bf16 at each matmul input and variance is
    # one-pass inside the kernel, hence the loosened tolerance vs. pure f32.
    assert jnp.allclose(out, ref, atol=3e-2, rtol=3e-2), (
        "mismatch vs reference: max abs err = %e"
        % float(jnp.max(jnp.abs(out - ref)))
    )

    print("KERNEL_OK")
</pallas_src>

<mosaic_0001>
module attributes {stable_mosaic.version = 11 : i64} {
  func.func @domain_classifier_kernel(%arg0: memref<8x512xf32, #tpu.memory_space<vmem>>, %arg1: memref<4x512x512xbf16, #tpu.memory_space<vmem>>, %arg2: memref<4x1x512xf32, #tpu.memory_space<vmem>>, %arg3: memref<4x1x512xf32, #tpu.memory_space<vmem>>, %arg4: memref<512x128xbf16, #tpu.memory_space<vmem>>, %arg5: memref<1x128xf32, #tpu.memory_space<vmem>>, %arg6: memref<8x128xf32, #tpu.memory_space<vmem>>) attributes {dimension_semantics = [], scalar_prefetch = 0 : i64, scratch_operands = 0 : i64, tpu.core_type = #tpu.core_type<tc>} {
    %c0 = arith.constant 0 : index
    %c0_0 = arith.constant 0 : index
    %0 = vector.load %arg0[%c0, %c0_0] : memref<8x512xf32, #tpu.memory_space<vmem>>, vector<8x512xf32>
    %1 = arith.truncf %0 : vector<8x512xf32> to vector<8x512xbf16>
    %c0_1 = arith.constant 0 : index
    %c0_2 = arith.constant 0 : index
    %c0_3 = arith.constant 0 : index
    %2 = vector.load %arg1[%c0_1, %c0_2, %c0_3] : memref<4x512x512xbf16, #tpu.memory_space<vmem>>, vector<1x512x512xbf16>
    %3 = vector.shape_cast %2 : vector<1x512x512xbf16> to vector<512x512xbf16>
    %cst = arith.constant dense<0.000000e+00> : vector<8x512xf32>
    %4 = tpu.matmul %1, %3, %cst {dimension_numbers = #tpu.dot_dimension_numbers<[1], [0], [0], [1], [0, 0, 1, 1], [], []>} : vector<8x512xbf16>, vector<512x512xbf16>, vector<8x512xf32> -> vector<8x512xf32>
    %cst_4 = arith.constant dense<0.000000e+00> : vector<512xf32>
    %5 = vector.multi_reduction <add>, %4, %cst_4 [0] : vector<8x512xf32> to vector<512xf32>
    %6 = vector.shape_cast %5 : vector<512xf32> to vector<1x512xf32>
    %cst_5 = arith.constant 1.250000e-01 : f32
    %7 = vector.broadcast %cst_5 : f32 to vector<1x512xf32>
    %8 = arith.mulf %6, %7 : vector<1x512xf32>
    %9 = arith.mulf %4, %4 : vector<8x512xf32>
    %cst_6 = arith.constant dense<0.000000e+00> : vector<512xf32>
    %10 = vector.multi_reduction <add>, %9, %cst_6 [0] : vector<8x512xf32> to vector<512xf32>
    %11 = vector.shape_cast %10 : vector<512xf32> to vector<1x512xf32>
    %cst_7 = arith.constant 1.250000e-01 : f32
    %12 = vector.broadcast %cst_7 : f32 to vector<1x512xf32>
    %13 = arith.mulf %11, %12 : vector<1x512xf32>
    %14 = arith.mulf %8, %8 : vector<1x512xf32>
    %15 = arith.subf %13, %14 : vector<1x512xf32>
    %cst_8 = arith.constant 0.000000e+00 : f32
    %16 = vector.broadcast %cst_8 : f32 to vector<1x512xf32>
    %17 = arith.maximumf %15, %16 : vector<1x512xf32>
    %c0_9 = arith.constant 0 : index
    %c0_10 = arith.constant 0 : index
    %c0_11 = arith.constant 0 : index
    %18 = vector.load %arg2[%c0_9, %c0_10, %c0_11] : memref<4x1x512xf32, #tpu.memory_space<vmem>>, vector<1x1x512xf32>
    %19 = vector.shape_cast %18 : vector<1x1x512xf32> to vector<1x512xf32>
    %cst_12 = arith.constant 9.99999974E-6 : f32
    %20 = vector.broadcast %cst_12 : f32 to vector<1x512xf32>
    %21 = arith.addf %17, %20 : vector<1x512xf32>
    %22 = math.rsqrt %21 : vector<1x512xf32>
    %23 = arith.mulf %19, %22 : vector<1x512xf32>
    %c0_13 = arith.constant 0 : index
    %c0_14 = arith.constant 0 : index
    %c0_15 = arith.constant 0 : index
    %24 = vector.load %arg3[%c0_13, %c0_14, %c0_15] : memref<4x1x512xf32, #tpu.memory_space<vmem>>, vector<1x1x512xf32>
    %25 = vector.shape_cast %24 : vector<1x1x512xf32> to vector<1x512xf32>
    %26 = arith.mulf %8, %23 : vector<1x512xf32>
    %27 = arith.subf %25, %26 : vector<1x512xf32>
    %28 = vector.broadcast %23 : vector<1x512xf32> to vector<8x512xf32>
    %29 = arith.mulf %4, %28 : vector<8x512xf32>
    %30 = vector.broadcast %27 : vector<1x512xf32> to vector<8x512xf32>
    %31 = arith.addf %29, %30 : vector<8x512xf32>
    %cst_16 = arith.constant 0.000000e+00 : f32
    %32 = vector.broadcast %cst_16 : f32 to vector<8x512xf32>
    %33 = arith.maximumf %31, %32 : vector<8x512xf32>
    %34 = arith.truncf %33 : vector<8x512xf32> to vector<8x512xbf16>
    %c1 = arith.constant 1 : index
    %c0_17 = arith.constant 0 : index
    %c0_18 = arith.constant 0 : index
    %35 = vector.load %arg1[%c1, %c0_17, %c0_18] : memref<4x512x512xbf16, #tpu.memory_space<vmem>>, vector<1x512x512xbf16>
    %36 = vector.shape_cast %35 : vector<1x512x512xbf16> to vector<512x512xbf16>
    %cst_19 = arith.constant dense<0.000000e+00> : vector<8x512xf32>
    %37 = tpu.matmul %34, %36, %cst_19 {dimension_numbers = #tpu.dot_dimension_numbers<[1], [0], [0], [1], [0, 0, 1, 1], [], []>} : vector<8x512xbf16>, vector<512x512xbf16>, vector<8x512xf32> -> vector<8x512xf32>
    %cst_20 = arith.constant dense<0.000000e+00> : vector<512xf32>
    %38 = vector.multi_reduction <add>, %37, %cst_20 [0] : vector<8x512xf32> to vector<512xf32>
    %39 = vector.shape_cast %38 : vector<512xf32> to vector<1x512xf32>
    %cst_21 = arith.constant 1.250000e-01 : f32
    %40 = vector.broadcast %cst_21 : f32 to vector<1x512xf32>
    %41 = arith.mulf %39, %40 : vector<1x512xf32>
    %42 = arith.mulf %37, %37 : vector<8x512xf32>
    %cst_22 = arith.constant dense<0.000000e+00> : vector<512xf32>
    %43 = vector.multi_reduction <add>, %42, %cst_22 [0] : vector<8x512xf32> to vector<512xf32>
    %44 = vector.shape_cast %43 : vector<512xf32> to vector<1x512xf32>
    %cst_23 = arith.constant 1.250000e-01 : f32
    %45 = vector.broadcast %cst_23 : f32 to vector<1x512xf32>
    %46 = arith.mulf %44, %45 : vector<1x512xf32>
    %47 = arith.mulf %41, %41 : vector<1x512xf32>
    %48 = arith.subf %46, %47 : vector<1x512xf32>
    %cst_24 = arith.constant 0.000000e+00 : f32
    %49 = vector.broadcast %cst_24 : f32 to vector<1x512xf32>
    %50 = arith.maximumf %48, %49 : vector<1x512xf32>
    %c1_25 = arith.constant 1 : index
    %c0_26 = arith.constant 0 : index
    %c0_27 = arith.constant 0 : index
    %51 = vector.load %arg2[%c1_25, %c0_26, %c0_27] : memref<4x1x512xf32, #tpu.memory_space<vmem>>, vector<1x1x512xf32>
    %52 = vector.shape_cast %51 : vector<1x1x512xf32> to vector<1x512xf32>
    %cst_28 = arith.constant 9.99999974E-6 : f32
    %53 = vector.broadcast %cst_28 : f32 to vector<1x512xf32>
    %54 = arith.addf %50, %53 : vector<1x512xf32>
    %55 = math.rsqrt %54 : vector<1x512xf32>
    %56 = arith.mulf %52, %55 : vector<1x512xf32>
    %c1_29 = arith.constant 1 : index
    %c0_30 = arith.constant 0 : index
    %c0_31 = arith.constant 0 : index
    %57 = vector.load %arg3[%c1_29, %c0_30, %c0_31] : memref<4x1x512xf32, #tpu.memory_space<vmem>>, vector<1x1x512xf32>
    %58 = vector.shape_cast %57 : vector<1x1x512xf32> to vector<1x512xf32>
    %59 = arith.mulf %41, %56 : vector<1x512xf32>
    %60 = arith.subf %58, %59 : vector<1x512xf32>
    %61 = vector.broadcast %56 : vector<1x512xf32> to vector<8x512xf32>
    %62 = arith.mulf %37, %61 : vector<8x512xf32>
    %63 = vector.broadcast %60 : vector<1x512xf32> to vector<8x512xf32>
    %64 = arith.addf %62, %63 : vector<8x512xf32>
    %cst_32 = arith.constant 0.000000e+00 : f32
    %65 = vector.broadcast %cst_32 : f32 to vector<8x512xf32>
    %66 = arith.maximumf %64, %65 : vector<8x512xf32>
    %67 = arith.truncf %66 : vector<8x512xf32> to vector<8x512xbf16>
    %c2 = arith.constant 2 : index
    %c0_33 = arith.constant 0 : index
    %c0_34 = arith.constant 0 : index
    %68 = vector.load %arg1[%c2, %c0_33, %c0_34] : memref<4x512x512xbf16, #tpu.memory_space<vmem>>, vector<1x512x512xbf16>
    %69 = vector.shape_cast %68 : vector<1x512x512xbf16> to vector<512x512xbf16>
    %cst_35 = arith.constant dense<0.000000e+00> : vector<8x512xf32>
    %70 = tpu.matmul %67, %69, %cst_35 {dimension_numbers = #tpu.dot_dimension_numbers<[1], [0], [0], [1], [0, 0, 1, 1], [], []>} : vector<8x512xbf16>, vector<512x512xbf16>, vector<8x512xf32> -> vector<8x512xf32>
    %cst_36 = arith.constant dense<0.000000e+00> : vector<512xf32>
    %71 = vector.multi_reduction <add>, %70, %cst_36 [0] : vector<8x512xf32> to vector<512xf32>
    %72 = vector.shape_cast %71 : vector<512xf32> to vector<1x512xf32>
    %cst_37 = arith.constant 1.250000e-01 : f32
    %73 = vector.broadcast %cst_37 : f32 to vector<1x512xf32>
    %74 = arith.mulf %72, %73 : vector<1x512xf32>
    %75 = arith.mulf %70, %70 : vector<8x512xf32>
    %cst_38 = arith.constant dense<0.000000e+00> : vector<512xf32>
    %76 = vector.multi_reduction <add>, %75, %cst_38 [0] : vector<8x512xf32> to vector<512xf32>
    %77 = vector.shape_cast %76 : vector<512xf32> to vector<1x512xf32>
    %cst_39 = arith.constant 1.250000e-01 : f32
    %78 = vector.broadcast %cst_39 : f32 to vector<1x512xf32>
    %79 = arith.mulf %77, %78 : vector<1x512xf32>
    %80 = arith.mulf %74, %74 : vector<1x512xf32>
    %81 = arith.subf %79, %80 : vector<1x512xf32>
    %cst_40 = arith.constant 0.000000e+00 : f32
    %82 = vector.broadcast %cst_40 : f32 to vector<1x512xf32>
    %83 = arith.maximumf %81, %82 : vector<1x512xf32>
    %c2_41 = arith.constant 2 : index
    %c0_42 = arith.constant 0 : index
    %c0_43 = arith.constant 0 : index
    %84 = vector.load %arg2[%c2_41, %c0_42, %c0_43] : memref<4x1x512xf32, #tpu.memory_space<vmem>>, vector<1x1x512xf32>
    %85 = vector.shape_cast %84 : vector<1x1x512xf32> to vector<1x512xf32>
    %cst_44 = arith.constant 9.99999974E-6 : f32
    %86 = vector.broadcast %cst_44 : f32 to vector<1x512xf32>
    %87 = arith.addf %83, %86 : vector<1x512xf32>
    %88 = math.rsqrt %87 : vector<1x512xf32>
    %89 = arith.mulf %85, %88 : vector<1x512xf32>
    %c2_45 = arith.constant 2 : index
    %c0_46 = arith.constant 0 : index
    %c0_47 = arith.constant 0 : index
    %90 = vector.load %arg3[%c2_45, %c0_46, %c0_47] : memref<4x1x512xf32, #tpu.memory_space<vmem>>, vector<1x1x512xf32>
    %91 = vector.shape_cast %90 : vector<1x1x512xf32> to vector<1x512xf32>
    %92 = arith.mulf %74, %89 : vector<1x512xf32>
    %93 = arith.subf %91, %92 : vector<1x512xf32>
    %94 = vector.broadcast %89 : vector<1x512xf32> to vector<8x512xf32>
    %95 = arith.mulf %70, %94 : vector<8x512xf32>
    %96 = vector.broadcast %93 : vector<1x512xf32> to vector<8x512xf32>
    %97 = arith.addf %95, %96 : vector<8x512xf32>
    %cst_48 = arith.constant 0.000000e+00 : f32
    %98 = vector.broadcast %cst_48 : f32 to vector<8x512xf32>
    %99 = arith.maximumf %97, %98 : vector<8x512xf32>
    %100 = arith.truncf %99 : vector<8x512xf32> to vector<8x512xbf16>
    %c3 = arith.constant 3 : index
    %c0_49 = arith.constant 0 : index
    %c0_50 = arith.constant 0 : index
    %101 = vector.load %arg1[%c3, %c0_49, %c0_50] : memref<4x512x512xbf16, #tpu.memory_space<vmem>>, vector<1x512x512xbf16>
    %102 = vector.shape_cast %101 : vector<1x512x512xbf16> to vector<512x512xbf16>
    %cst_51 = arith.constant dense<0.000000e+00> : vector<8x512xf32>
    %103 = tpu.matmul %100, %102, %cst_51 {dimension_numbers = #tpu.dot_dimension_numbers<[1], [0], [0], [1], [0, 0, 1, 1], [], []>} : vector<8x512xbf16>, vector<512x512xbf16>, vector<8x512xf32> -> vector<8x512xf32>
    %cst_52 = arith.constant dense<0.000000e+00> : vector<512xf32>
    %104 = vector.multi_reduction <add>, %103, %cst_52 [0] : vector<8x512xf32> to vector<512xf32>
    %105 = vector.shape_cast %104 : vector<512xf32> to vector<1x512xf32>
    %cst_53 = arith.constant 1.250000e-01 : f32
    %106 = vector.broadcast %cst_53 : f32 to vector<1x512xf32>
    %107 = arith.mulf %105, %106 : vector<1x512xf32>
    %108 = arith.mulf %103, %103 : vector<8x512xf32>
    %cst_54 = arith.constant dense<0.000000e+00> : vector<512xf32>
    %109 = vector.multi_reduction <add>, %108, %cst_54 [0] : vector<8x512xf32> to vector<512xf32>
    %110 = vector.shape_cast %109 : vector<512xf32> to vector<1x512xf32>
    %cst_55 = arith.constant 1.250000e-01 : f32
    %111 = vector.broadcast %cst_55 : f32 to vector<1x512xf32>
    %112 = arith.mulf %110, %111 : vector<1x512xf32>
    %113 = arith.mulf %107, %107 : vector<1x512xf32>
    %114 = arith.subf %112, %113 : vector<1x512xf32>
    %cst_56 = arith.constant 0.000000e+00 : f32
    %115 = vector.broadcast %cst_56 : f32 to vector<1x512xf32>
    %116 = arith.maximumf %114, %115 : vector<1x512xf32>
    %c3_57 = arith.constant 3 : index
    %c0_58 = arith.constant 0 : index
    %c0_59 = arith.constant 0 : index
    %117 = vector.load %arg2[%c3_57, %c0_58, %c0_59] : memref<4x1x512xf32, #tpu.memory_space<vmem>>, vector<1x1x512xf32>
    %118 = vector.shape_cast %117 : vector<1x1x512xf32> to vector<1x512xf32>
    %cst_60 = arith.constant 9.99999974E-6 : f32
    %119 = vector.broadcast %cst_60 : f32 to vector<1x512xf32>
    %120 = arith.addf %116, %119 : vector<1x512xf32>
    %121 = math.rsqrt %120 : vector<1x512xf32>
    %122 = arith.mulf %118, %121 : vector<1x512xf32>
    %c3_61 = arith.constant 3 : index
    %c0_62 = arith.constant 0 : index
    %c0_63 = arith.constant 0 : index
    %123 = vector.load %arg3[%c3_61, %c0_62, %c0_63] : memref<4x1x512xf32, #tpu.memory_space<vmem>>, vector<1x1x512xf32>
    %124 = vector.shape_cast %123 : vector<1x1x512xf32> to vector<1x512xf32>
    %125 = arith.mulf %107, %122 : vector<1x512xf32>
    %126 = arith.subf %124, %125 : vector<1x512xf32>
    %127 = vector.broadcast %122 : vector<1x512xf32> to vector<8x512xf32>
    %128 = arith.mulf %103, %127 : vector<8x512xf32>
    %129 = vector.broadcast %126 : vector<1x512xf32> to vector<8x512xf32>
    %130 = arith.addf %128, %129 : vector<8x512xf32>
    %cst_64 = arith.constant 0.000000e+00 : f32
    %131 = vector.broadcast %cst_64 : f32 to vector<8x512xf32>
    %132 = arith.maximumf %130, %131 : vector<8x512xf32>
    %133 = arith.truncf %132 : vector<8x512xf32> to vector<8x512xbf16>
    %c0_65 = arith.constant 0 : index
    %c0_66 = arith.constant 0 : index
    %134 = vector.load %arg4[%c0_65, %c0_66] : memref<512x128xbf16, #tpu.memory_space<vmem>>, vector<512x128xbf16>
    %cst_67 = arith.constant dense<0.000000e+00> : vector<8x128xf32>
    %135 = tpu.matmul %133, %134, %cst_67 {dimension_numbers = #tpu.dot_dimension_numbers<[1], [0], [0], [1], [0, 0, 1, 1], [], []>} : vector<8x512xbf16>, vector<512x128xbf16>, vector<8x128xf32> -> vector<8x128xf32>
    %c0_68 = arith.constant 0 : index
    %c0_69 = arith.constant 0 : index
    %136 = vector.load %arg5[%c0_68, %c0_69] : memref<1x128xf32, #tpu.memory_space<vmem>>, vector<1x128xf32>
    %137 = vector.broadcast %136 : vector<1x128xf32> to vector<8x128xf32>
    %138 = arith.addf %135, %137 : vector<8x128xf32>
    %c0_70 = arith.constant 0 : index
    %c0_71 = arith.constant 0 : index
    %139 = vector.load %arg6[%c0_70, %c0_71] : memref<8x128xf32, #tpu.memory_space<vmem>>, vector<8x128xf32>
    tpu.vector_store %arg6[%c0_70, %c0_71], %138 {strides = array<i32>} : memref<8x128xf32, #tpu.memory_space<vmem>>, vector<8x128xf32>,
    return
  }
}

</mosaic_0001>

<llo_original>
// kernel: domain_classifier_forward.1
$region0: #{domain_classifier_forward.1}
  #allocation0 [shape = 'u32[]', space=smem, size = 0x4, offset = 0x4, fixed_abs, tag = 'smem constant byte address 0x4 - core index']
  #allocation1 [shape = 'u32[144,128]{1,0:T(1,128)}', space=vmem, size = 0x12000, scoped, tag = 'internal scratch']
  %s0 = inlined_call_operand.hbm [shape: f32[8,512], index: 0, kind: input, shape index: {}]
  %s1 = inlined_call_operand.hbm [shape: bf16[4,512,512], index: 1, kind: input, shape index: {}]
  %s2 = inlined_call_operand.hbm [shape: f32[4,1,512], index: 2, kind: input, shape index: {}]
  %s3 = inlined_call_operand.hbm [shape: f32[4,1,512], index: 3, kind: input, shape index: {}]
  %s4 = inlined_call_operand.hbm [shape: bf16[512,128], index: 4, kind: input, shape index: {}]
  %s5 = inlined_call_operand.hbm [shape: f32[1,128], index: 5, kind: input, shape index: {}]
  %s6 = inlined_call_operand.vmem [shape: f32[8,128], index: 6, kind: output, shape index: {}]
  %s7 = sld [smem:[#allocation0]]
  $region58: #{domain_classifier_forward.1} parent=0
    _
  %s9 = ssub.s32 1, %s7
  %s10 = scalar_select 0, %s9, %s7
  $region1: #{domain_classifier_forward.1} parent=0
    #allocation2 [shape = 'u8[16384]{0}', space=vmem, size = 0x4000, scoped, tag = 'input window, operand 0, single buffered']
    #allocation3 [shape = 's32[1]{0}', space=sflag, size = 0x4, scoped, tag = 'scoped memory for domain_classifier_forward.1']
    #allocation4 [shape = 'u8[2097152]{0}', space=vmem, size = 0x200000, scoped, tag = 'input window, operand 1, single buffered']
    #allocation5 [shape = 's32[1]{0}', space=sflag, size = 0x4, scoped, tag = 'scoped memory for domain_classifier_forward.1']
    #allocation6 [shape = 'u8[8192]{0}', space=vmem, size = 0x2000, scoped, tag = 'input window, operand 2, single buffered']
    #allocation7 [shape = 'u8[8192]{0}', space=vmem, size = 0x2000, scoped, tag = 'input window, operand 3, single buffered']
    #allocation8 [shape = 's32[1]{0}', space=sflag, size = 0x4, scoped, tag = 'scoped memory for domain_classifier_forward.1']
    #allocation9 [shape = 'u8[131072]{0}', space=vmem, size = 0x20000, scoped, tag = 'input window, operand 4, single buffered']
    #allocation10 [shape = 'u8[512]{0}', space=vmem, size = 0x400, scoped, tag = 'input window, operand 5, single buffered']
    #allocation11 [shape = 's32[1]{0}', space=sflag, size = 0x4, scoped, tag = 'scoped memory for domain_classifier_forward.1']
    %11 = vsyncpa [#allocation3], 0
    %12 = vsyncpa [#allocation5], 0
    %13 = vsyncpa [#allocation8], 0
    %14 = vsyncpa [#allocation11], 0
    // Predicated region
    $region2: #{domain_classifier_forward.1} parent=1 // pred_check
      _
    $region3: #{domain_classifier_forward.1} parent=1 // pred_check_branch
      %16 = sbr.rel (0) target = $region5
    $region4: #{domain_classifier_forward.1} parent=1 // pred_region
      %s18 = ssub.s32 512, 512
      %19 = vsyncadd [#allocation3], %s18
      %s21 = sshll.u32 [#allocation2], 4
      %s22 = int_to_ptr.vmem [resolvable:$true] %s21
      %24 = dma.hbm_to_vmem [thread:$0]  %s0, 512, %s22, [#allocation3]
    $region5: #{domain_classifier_forward.1} parent=1 // pred_fallthru
      _
    // Predicated region
    $region6: #{domain_classifier_forward.1} parent=1 // pred_check
      _
    $region7: #{domain_classifier_forward.1} parent=1 // pred_check_branch
      %26 = sbr.rel (0) target = $region9
    $region8: #{domain_classifier_forward.1} parent=1 // pred_region
      %s28 = ssub.s32 65536, 65536
      %29 = vsyncadd [#allocation5], %s28
      %s30 = sshll.u32 [#allocation4], 4
      %s31 = int_to_ptr.vmem [resolvable:$true] %s30
      %36 = dma.hbm_to_vmem [thread:$0]  %s1, 65536, %s31, [#allocation5], 256, 256, 16
    $region9: #{domain_classifier_forward.1} parent=1 // pred_fallthru
      _
    // Predicated region
    $region10: #{domain_classifier_forward.1} parent=1 // pred_check
      _
    $region11: #{domain_classifier_forward.1} parent=1 // pred_check_branch
      %38 = sbr.rel (0) target = $region13
    $region12: #{domain_classifier_forward.1} parent=1 // pred_region
      %s40 = ssub.s32 256, 256
      %41 = vsyncadd [#allocation5], %s40
      %s42 = sshll.u32 [#allocation6], 4
      %s43 = int_to_ptr.vmem [resolvable:$true] %s42
      %48 = dma.hbm_to_vmem [thread:$0]  %s2, 256, %s43, [#allocation5], 64, 64, 4
    $region13: #{domain_classifier_forward.1} parent=1 // pred_fallthru
      _
    // Predicated region
    $region14: #{domain_classifier_forward.1} parent=1 // pred_check
      _
    $region15: #{domain_classifier_forward.1} parent=1 // pred_check_branch
      %50 = sbr.rel (0) target = $region17
    $region16: #{domain_classifier_forward.1} parent=1 // pred_region
      %s52 = ssub.s32 256, 256
      %53 = vsyncadd [#allocation8], %s52
      %s54 = sshll.u32 [#allocation7], 4
      %s55 = int_to_ptr.vmem [resolvable:$true] %s54
      %60 = dma.hbm_to_vmem [thread:$0]  %s3, 256, %s55, [#allocation8], 64, 64, 4
    $region17: #{domain_classifier_forward.1} parent=1 // pred_fallthru
      _
    // Predicated region
    $region18: #{domain_classifier_forward.1} parent=1 // pred_check
      _
    $region19: #{domain_classifier_forward.1} parent=1 // pred_check_branch
      %62 = sbr.rel (0) target = $region21
    $region20: #{domain_classifier_forward.1} parent=1 // pred_region
      %s64 = ssub.s32 4096, 4096
      %65 = vsyncadd [#allocation8], %s64
      %s66 = sshll.u32 [#allocation9], 4
      %s67 = int_to_ptr.vmem [resolvable:$true] %s66
      %72 = dma.hbm_to_vmem [thread:$0]  %s4, 4096, %s67, [#allocation8], 64, 64, 4
    $region21: #{domain_classifier_forward.1} parent=1 // pred_fallthru
      _
    // Predicated region
    $region22: #{domain_classifier_forward.1} parent=1 // pred_check
      _
    $region23: #{domain_classifier_forward.1} parent=1 // pred_check_branch
      %74 = sbr.rel (0) target = $region25
    $region24: #{domain_classifier_forward.1} parent=1 // pred_region
      %s76 = ssub.s32 16, 16
      %77 = vsyncadd [#allocation11], %s76
      %s79 = sshll.u32 [#allocation10], 4
      %s80 = int_to_ptr.vmem [resolvable:$true] %s79
      %82 = dma.hbm_to_vmem [thread:$0]  %s5, 16, %s80, [#allocation11]
    $region25: #{domain_classifier_forward.1} parent=1 // pred_fallthru
      _
    // Predicated region
    $region26: #{domain_classifier_forward.1} parent=1 // pred_check
      _
    $region27: #{domain_classifier_forward.1} parent=1 // pred_check_branch
      %84 = sbr.rel (0) target = $region29
    $region28: #{domain_classifier_forward.1} parent=1 // pred_region
      %85 = dma.done [#allocation3], 512
    $region29: #{domain_classifier_forward.1} parent=1 // pred_fallthru
      _
    // Predicated region
    $region30: #{domain_classifier_forward.1} parent=1 // pred_check
      _
    $region31: #{domain_classifier_forward.1} parent=1 // pred_check_branch
      %87 = sbr.rel (0) target = $region33
    $region32: #{domain_classifier_forward.1} parent=1 // pred_region
      %88 = dma.done [#allocation5], 65536
    $region33: #{domain_classifier_forward.1} parent=1 // pred_fallthru
      _
    // Predicated region
    $region34: #{domain_classifier_forward.1} parent=1 // pred_check
      _
    $region35: #{domain_classifier_forward.1} parent=1 // pred_check_branch
      %90 = sbr.rel (0) target = $region37
    $region36: #{domain_classifier_forward.1} parent=1 // pred_region
      %91 = dma.done [#allocation5], 256
    $region37: #{domain_classifier_forward.1} parent=1 // pred_fallthru
      _
    // Predicated region
    $region38: #{domain_classifier_forward.1} parent=1 // pred_check
      _
    $region39: #{domain_classifier_forward.1} parent=1 // pred_check_branch
      %93 = sbr.rel (0) target = $region41
    $region40: #{domain_classifier_forward.1} parent=1 // pred_region
      %94 = dma.done [#allocation8], 256
    $region41: #{domain_classifier_forward.1} parent=1 // pred_fallthru
      _
    // Predicated region
    $region42: #{domain_classifier_forward.1} parent=1 // pred_check
      _
    $region43: #{domain_classifier_forward.1} parent=1 // pred_check_branch
      %96 = sbr.rel (0) target = $region45
    $region44: #{domain_classifier_forward.1} parent=1 // pred_region
      %97 = dma.done [#allocation8], 4096
    $region45: #{domain_classifier_forward.1} parent=1 // pred_fallthru
      _
    // Predicated region
    $region46: #{domain_classifier_forward.1} parent=1 // pred_check
      _
    $region47: #{domain_classifier_forward.1} parent=1 // pred_check_branch
      %99 = sbr.rel (0) target = $region49
    $region48: #{domain_classifier_forward.1} parent=1 // pred_region
      %100 = dma.done [#allocation11], 16
    $region49: #{domain_classifier_forward.1} parent=1 // pred_fallthru
      _
    %v102 = vld [vmem:[#allocation2] sm:$0xff]
    %v103 = vld [vmem:[#allocation2 + $0x8] sm:$0xff]
    %v104 = vld [vmem:[#allocation2 + $0x10] sm:$0xff]
    %v105 = vld [vmem:[#allocation2 + $0x18] sm:$0xff]
    %v106 = vpack.c.bf16 %v102, %v102
    %v107 = vpack.c.bf16 %v103, %v103
    %v108 = vpack.c.bf16 %v104, %v104
    %v109 = vpack.c.bf16 %v105, %v105
    %v110 = vld [vmem:[#allocation4] sm:$0xff]
    %v111 = vld [vmem:[#allocation4 + $0x8] sm:$0xff]
    %v112 = vld [vmem:[#allocation4 + $0x10] sm:$0xff]
    %v113 = vld [vmem:[#allocation4 + $0x18] sm:$0xff]
    %v114 = vld [vmem:[#allocation4 + $0x20] sm:$0xff]
    %v115 = vld [vmem:[#allocation4 + $0x28] sm:$0xff]
    %v116 = vld [vmem:[#allocation4 + $0x30] sm:$0xff]
    %v117 = vld [vmem:[#allocation4 + $0x38] sm:$0xff]
    %v118 = vld [vmem:[#allocation4 + $0x40] sm:$0xff]
    %v119 = vld [vmem:[#allocation4 + $0x48] sm:$0xff]
    %v120 = vld [vmem:[#allocation4 + $0x50] sm:$0xff]
    %v121 = vld [vmem:[#allocation4 + $0x58] sm:$0xff]
    %v122 = vld [vmem:[#allocation4 + $0x60] sm:$0xff]
    %v123 = vld [vmem:[#allocation4 + $0x68] sm:$0xff]
    %v124 = vld [vmem:[#allocation4 + $0x70] sm:$0xff]
    %v125 = vld [vmem:[#allocation4 + $0x78] sm:$0xff]
    %v126 = vld [vmem:[#allocation4 + $0x80] sm:$0xff]
    %v127 = vld [vmem:[#allocation4 + $0x88] sm:$0xff]
    %v128 = vld [vmem:[#allocation4 + $0x90] sm:$0xff]
    %v129 = vld [vmem:[#allocation4 + $0x98] sm:$0xff]
    %v130 = vld [vmem:[#allocation4 + $0xa0] sm:$0xff]
    %v131 = vld [vmem:[#allocation4 + $0xa8] sm:$0xff]
    %v132 = vld [vmem:[#allocation4 + $0xb0] sm:$0xff]
    %v133 = vld [vmem:[#allocation4 + $0xb8] sm:$0xff]
    %v134 = vld [vmem:[#allocation4 + $0xc0] sm:$0xff]
    %v135 = vld [vmem:[#allocation4 + $0xc8] sm:$0xff]
    %v136 = vld [vmem:[#allocation4 + $0xd0] sm:$0xff]
    %v137 = vld [vmem:[#allocation4 + $0xd8] sm:$0xff]
    %v138 = vld [vmem:[#allocation4 + $0xe0] sm:$0xff]
    %v139 = vld [vmem:[#allocation4 + $0xe8] sm:$0xff]
    %v140 = vld [vmem:[#allocation4 + $0xf0] sm:$0xff]
    %v141 = vld [vmem:[#allocation4 + $0xf8] sm:$0xff]
    %v142 = vld [vmem:[#allocation4 + $0x100] sm:$0xff]
    %v143 = vld [vmem:[#allocation4 + $0x108] sm:$0xff]
    %v144 = vld [vmem:[#allocation4 + $0x110] sm:$0xff]
    %v145 = vld [vmem:[#allocation4 + $0x118] sm:$0xff]
    %v146 = vld [vmem:[#allocation4 + $0x120] sm:$0xff]
    %v147 = vld [vmem:[#allocation4 + $0x128] sm:$0xff]
    %v148 = vld [vmem:[#allocation4 + $0x130] sm:$0xff]
    %v149 = vld [vmem:[#allocation4 + $0x138] sm:$0xff]
    %v150 = vld [vmem:[#allocation4 + $0x140] sm:$0xff]
    %v151 = vld [vmem:[#allocation4 + $0x148] sm:$0xff]
    %v152 = vld [vmem:[#allocation4 + $0x150] sm:$0xff]
    %v153 = vld [vmem:[#allocation4 + $0x158] sm:$0xff]
    %v154 = vld [vmem:[#allocation4 + $0x160] sm:$0xff]
    %v155 = vld [vmem:[#allocation4 + $0x168] sm:$0xff]
    %v156 = vld [vmem:[#allocation4 + $0x170] sm:$0xff]
    %v157 = vld [vmem:[#allocation4 + $0x178] sm:$0xff]
    %v158 = vld [vmem:[#allocation4 + $0x180] sm:$0xff]
    %v159 = vld [vmem:[#allocation4 + $0x188] sm:$0xff]
    %v160 = vld [vmem:[#allocation4 + $0x190] sm:$0xff]
    %v161 = vld [vmem:[#allocation4 + $0x198] sm:$0xff]
    %v162 = vld [vmem:[#allocation4 + $0x1a0] sm:$0xff]
    %v163 = vld [vmem:[#allocation4 + $0x1a8] sm:$0xff]
    %v164 = vld [vmem:[#allocation4 + $0x1b0] sm:$0xff]
    %v165 = vld [vmem:[#allocation4 + $0x1b8] sm:$0xff]
    %v166 = vld [vmem:[#allocation4 + $0x1c0] sm:$0xff]
    %v167 = vld [vmem:[#allocation4 + $0x1c8] sm:$0xff]
    %v168 = vld [vmem:[#allocation4 + $0x1d0] sm:$0xff]
    %v169 = vld [vmem:[#allocation4 + $0x1d8] sm:$0xff]
    %v170 = vld [vmem:[#allocation4 + $0x1e0] sm:$0xff]
    %v171 = vld [vmem:[#allocation4 + $0x1e8] sm:$0xff]
    %v172 = vld [vmem:[#allocation4 + $0x1f0] sm:$0xff]
    %v173 = vld [vmem:[#allocation4 + $0x1f8] sm:$0xff]
    %v174 = vld [vmem:[#allocation4 + $0x200] sm:$0xff]
    %v175 = vld [vmem:[#allocation4 + $0x208] sm:$0xff]
    %v176 = vld [vmem:[#allocation4 + $0x210] sm:$0xff]
    %v177 = vld [vmem:[#allocation4 + $0x218] sm:$0xff]
    %v178 = vld [vmem:[#allocation4 + $0x220] sm:$0xff]
    %v179 = vld [vmem:[#allocation4 + $0x228] sm:$0xff]
    %v180 = vld [vmem:[#allocation4 + $0x230] sm:$0xff]
    %v181 = vld [vmem:[#allocation4 + $0x238] sm:$0xff]
    %v182 = vld [vmem:[#allocation4 + $0x240] sm:$0xff]
    %v183 = vld [vmem:[#allocation4 + $0x248] sm:$0xff]
    %v184 = vld [vmem:[#allocation4 + $0x250] sm:$0xff]
    %v185 = vld [vmem:[#allocation4 + $0x258] sm:$0xff]
    %v186 = vld [vmem:[#allocation4 + $0x260] sm:$0xff]
    %v187 = vld [vmem:[#allocation4 + $0x268] sm:$0xff]
    %v188 = vld [vmem:[#allocation4 + $0x270] sm:$0xff]
    %v189 = vld [vmem:[#allocation4 + $0x278] sm:$0xff]
    %v190 = vld [vmem:[#allocation4 + $0x280] sm:$0xff]
    %v191 = vld [vmem:[#allocation4 + $0x288] sm:$0xff]
    %v192 = vld [vmem:[#allocation4 + $0x290] sm:$0xff]
    %v193 = vld [vmem:[#allocation4 + $0x298] sm:$0xff]
    %v194 = vld [vmem:[#allocation4 + $0x2a0] sm:$0xff]
    %v195 = vld [vmem:[#allocation4 + $0x2a8] sm:$0xff]
    %v196 = vld [vmem:[#allocation4 + $0x2b0] sm:$0xff]
    %v197 = vld [vmem:[#allocation4 + $0x2b8] sm:$0xff]
    %v198 = vld [vmem:[#allocation4 + $0x2c0] sm:$0xff]
    %v199 = vld [vmem:[#allocation4 + $0x2c8] sm:$0xff]
    %v200 = vld [vmem:[#allocation4 + $0x2d0] sm:$0xff]
    %v201 = vld [vmem:[#allocation4 + $0x2d8] sm:$0xff]
    %v202 = vld [vmem:[#allocation4 + $0x2e0] sm:$0xff]
    %v203 = vld [vmem:[#allocation4 + $0x2e8] sm:$0xff]
    %v204 = vld [vmem:[#allocation4 + $0x2f0] sm:$0xff]
    %v205 = vld [vmem:[#allocation4 + $0x2f8] sm:$0xff]
    %v206 = vld [vmem:[#allocation4 + $0x300] sm:$0xff]
    %v207 = vld [vmem:[#allocation4 + $0x308] sm:$0xff]
    %v208 = vld [vmem:[#allocation4 + $0x310] sm:$0xff]
    %v209 = vld [vmem:[#allocation4 + $0x318] sm:$0xff]
    %v210 = vld [vmem:[#allocation4 + $0x320] sm:$0xff]
    %v211 = vld [vmem:[#allocation4 + $0x328] sm:$0xff]
    %v212 = vld [vmem:[#allocation4 + $0x330] sm:$0xff]
    %v213 = vld [vmem:[#allocation4 + $0x338] sm:$0xff]
    %v214 = vld [vmem:[#allocation4 + $0x340] sm:$0xff]
    %v215 = vld [vmem:[#allocation4 + $0x348] sm:$0xff]
    %v216 = vld [vmem:[#allocation4 + $0x350] sm:$0xff]
    %v217 = vld [vmem:[#allocation4 + $0x358] sm:$0xff]
    %v218 = vld [vmem:[#allocation4 + $0x360] sm:$0xff]
    %v219 = vld [vmem:[#allocation4 + $0x368] sm:$0xff]
    %v220 = vld [vmem:[#allocation4 + $0x370] sm:$0xff]
    %v221 = vld [vmem:[#allocation4 + $0x378] sm:$0xff]
    %v222 = vld [vmem:[#allocation4 + $0x380] sm:$0xff]
    %v223 = vld [vmem:[#allocation4 + $0x388] sm:$0xff]
    %v224 = vld [vmem:[#allocation4 + $0x390] sm:$0xff]
    %v225 = vld [vmem:[#allocation4 + $0x398] sm:$0xff]
    %v226 = vld [vmem:[#allocation4 + $0x3a0] sm:$0xff]
    %v227 = vld [vmem:[#allocation4 + $0x3a8] sm:$0xff]
    %v228 = vld [vmem:[#allocation4 + $0x3b0] sm:$0xff]
    %v229 = vld [vmem:[#allocation4 + $0x3b8] sm:$0xff]
    %v230 = vld [vmem:[#allocation4 + $0x3c0] sm:$0xff]
    %v231 = vld [vmem:[#allocation4 + $0x3c8] sm:$0xff]
    %v232 = vld [vmem:[#allocation4 + $0x3d0] sm:$0xff]
    %v233 = vld [vmem:[#allocation4 + $0x3d8] sm:$0xff]
    %v234 = vld [vmem:[#allocation4 + $0x3e0] sm:$0xff]
    %v235 = vld [vmem:[#allocation4 + $0x3e8] sm:$0xff]
    %v236 = vld [vmem:[#allocation4 + $0x3f0] sm:$0xff]
    %v237 = vld [vmem:[#allocation4 + $0x3f8] sm:$0xff]
    %v366 = vunpack.c.l.b16 %v110
    %v367 = vunpack.c.h.b16 %v110
    %v368 = vunpack.c.l.b16 %v111
    %v369 = vunpack.c.h.b16 %v111
    %v370 = vunpack.c.l.b16 %v112
    %v371 = vunpack.c.h.b16 %v112
    %v372 = vunpack.c.l.b16 %v113
    %v373 = vunpack.c.h.b16 %v113
    %v374 = vunpack.c.l.b16 %v114
    %v375 = vunpack.c.h.b16 %v114
    %v376 = vunpack.c.l.b16 %v115
    %v377 = vunpack.c.h.b16 %v115
    %v378 = vunpack.c.l.b16 %v116
    %v379 = vunpack.c.h.b16 %v116
    %v380 = vunpack.c.l.b16 %v117
    %v381 = vunpack.c.h.b16 %v117
    %v382 = vunpack.c.l.b16 %v118
    %v383 = vunpack.c.h.b16 %v118
    %v384 = vunpack.c.l.b16 %v119
    %v385 = vunpack.c.h.b16 %v119
    %v386 = vunpack.c.l.b16 %v120
    %v387 = vunpack.c.h.b16 %v120
    %v388 = vunpack.c.l.b16 %v121
    %v389 = vunpack.c.h.b16 %v121
    %v390 = vunpack.c.l.b16 %v122
    %v391 = vunpack.c.h.b16 %v122
    %v392 = vunpack.c.l.b16 %v123
    %v393 = vunpack.c.h.b16 %v123
    %v394 = vunpack.c.l.b16 %v124
    %v395 = vunpack.c.h.b16 %v124
    %v396 = vunpack.c.l.b16 %v125
    %v397 = vunpack.c.h.b16 %v125
    %v398 = vunpack.c.l.b16 %v126
    %v399 = vunpack.c.h.b16 %v126
    %v400 = vunpack.c.l.b16 %v127
    %v401 = vunpack.c.h.b16 %v127
    %v402 = vunpack.c.l.b16 %v128
    %v403 = vunpack.c.h.b16 %v128
    %v404 = vunpack.c.l.b16 %v129
    %v405 = vunpack.c.h.b16 %v129
    %v406 = vunpack.c.l.b16 %v130
    %v407 = vunpack.c.h.b16 %v130
    %v408 = vunpack.c.l.b16 %v131
    %v409 = vunpack.c.h.b16 %v131
    %v410 = vunpack.c.l.b16 %v132
    %v411 = vunpack.c.h.b16 %v132
    %v412 = vunpack.c.l.b16 %v133
    %v413 = vunpack.c.h.b16 %v133
    %v414 = vunpack.c.l.b16 %v134
    %v415 = vunpack.c.h.b16 %v134
    %v416 = vunpack.c.l.b16 %v135
    %v417 = vunpack.c.h.b16 %v135
    %v418 = vunpack.c.l.b16 %v136
    %v419 = vunpack.c.h.b16 %v136
    %v420 = vunpack.c.l.b16 %v137
    %v421 = vunpack.c.h.b16 %v137
    %v422 = vunpack.c.l.b16 %v138
    %v423 = vunpack.c.h.b16 %v138
    %v424 = vunpack.c.l.b16 %v139
    %v425 = vunpack.c.h.b16 %v139
    %v426 = vunpack.c.l.b16 %v140
    %v427 = vunpack.c.h.b16 %v140
    %v428 = vunpack.c.l.b16 %v141
    %v429 = vunpack.c.h.b16 %v141
    %v430 = vunpack.c.l.b16 %v142
    %v431 = vunpack.c.h.b16 %v142
    %v432 = vunpack.c.l.b16 %v143
    %v433 = vunpack.c.h.b16 %v143
    %v434 = vunpack.c.l.b16 %v144
    %v435 = vunpack.c.h.b16 %v144
    %v436 = vunpack.c.l.b16 %v145
    %v437 = vunpack.c.h.b16 %v145
    %v438 = vunpack.c.l.b16 %v146
    %v439 = vunpack.c.h.b16 %v146
    %v440 = vunpack.c.l.b16 %v147
    %v441 = vunpack.c.h.b16 %v147
    %v442 = vunpack.c.l.b16 %v148
    %v443 = vunpack.c.h.b16 %v148
    %v444 = vunpack.c.l.b16 %v149
    %v445 = vunpack.c.h.b16 %v149
    %v446 = vunpack.c.l.b16 %v150
    %v447 = vunpack.c.h.b16 %v150
    %v448 = vunpack.c.l.b16 %v151
    %v449 = vunpack.c.h.b16 %v151
    %v450 = vunpack.c.l.b16 %v152
    %v451 = vunpack.c.h.b16 %v152
    %v452 = vunpack.c.l.b16 %v153
    %v453 = vunpack.c.h.b16 %v153
    %v454 = vunpack.c.l.b16 %v154
    %v455 = vunpack.c.h.b16 %v154
    %v456 = vunpack.c.l.b16 %v155
    %v457 = vunpack.c.h.b16 %v155
    %v458 = vunpack.c.l.b16 %v156
    %v459 = vunpack.c.h.b16 %v156
    %v460 = vunpack.c.l.b16 %v157
    %v461 = vunpack.c.h.b16 %v157
    %v462 = vunpack.c.l.b16 %v158
    %v463 = vunpack.c.h.b16 %v158
    %v464 = vunpack.c.l.b16 %v159
    %v465 = vunpack.c.h.b16 %v159
    %v466 = vunpack.c.l.b16 %v160
    %v467 = vunpack.c.h.b16 %v160
    %v468 = vunpack.c.l.b16 %v161
    %v469 = vunpack.c.h.b16 %v161
    %v470 = vunpack.c.l.b16 %v162
    %v471 = vunpack.c.h.b16 %v162
    %v472 = vunpack.c.l.b16 %v163
    %v473 = vunpack.c.h.b16 %v163
    %v474 = vunpack.c.l.b16 %v164
    %v475 = vunpack.c.h.b16 %v164
    %v476 = vunpack.c.l.b16 %v165
    %v477 = vunpack.c.h.b16 %v165
    %v478 = vunpack.c.l.b16 %v166
    %v479 = vunpack.c.h.b16 %v166
    %v480 = vunpack.c.l.b16 %v167
    %v481 = vunpack.c.h.b16 %v167
    %v482 = vunpack.c.l.b16 %v168
    %v483 = vunpack.c.h.b16 %v168
    %v484 = vunpack.c.l.b16 %v169
    %v485 = vunpack.c.h.b16 %v169
    %v486 = vunpack.c.l.b16 %v170
    %v487 = vunpack.c.h.b16 %v170
    %v488 = vunpack.c.l.b16 %v171
    %v489 = vunpack.c.h.b16 %v171
    %v490 = vunpack.c.l.b16 %v172
    %v491 = vunpack.c.h.b16 %v172
    %v492 = vunpack.c.l.b16 %v173
    %v493 = vunpack.c.h.b16 %v173
    %v494 = vunpack.c.l.b16 %v174
    %v495 = vunpack.c.h.b16 %v174
    %v496 = vunpack.c.l.b16 %v175
    %v497 = vunpack.c.h.b16 %v175
    %v498 = vunpack.c.l.b16 %v176
    %v499 = vunpack.c.h.b16 %v176
    %v500 = vunpack.c.l.b16 %v177
    %v501 = vunpack.c.h.b16 %v177
    %v502 = vunpack.c.l.b16 %v178
    %v503 = vunpack.c.h.b16 %v178
    %v504 = vunpack.c.l.b16 %v179
    %v505 = vunpack.c.h.b16 %v179
    %v506 = vunpack.c.l.b16 %v180
    %v507 = vunpack.c.h.b16 %v180
    %v508 = vunpack.c.l.b16 %v181
    %v509 = vunpack.c.h.b16 %v181
    %v510 = vunpack.c.l.b16 %v182
    %v511 = vunpack.c.h.b16 %v182
    %v512 = vunpack.c.l.b16 %v183
    %v513 = vunpack.c.h.b16 %v183
    %v514 = vunpack.c.l.b16 %v184
    %v515 = vunpack.c.h.b16 %v184
    %v516 = vunpack.c.l.b16 %v185
    %v517 = vunpack.c.h.b16 %v185
    %v518 = vunpack.c.l.b16 %v186
    %v519 = vunpack.c.h.b16 %v186
    %v520 = vunpack.c.l.b16 %v187
    %v521 = vunpack.c.h.b16 %v187
    %v522 = vunpack.c.l.b16 %v188
    %v523 = vunpack.c.h.b16 %v188
    %v524 = vunpack.c.l.b16 %v189
    %v525 = vunpack.c.h.b16 %v189
    %v526 = vunpack.c.l.b16 %v190
    %v527 = vunpack.c.h.b16 %v190
    %v528 = vunpack.c.l.b16 %v191
    %v529 = vunpack.c.h.b16 %v191
    %v530 = vunpack.c.l.b16 %v192
    %v531 = vunpack.c.h.b16 %v192
    %v532 = vunpack.c.l.b16 %v193
    %v533 = vunpack.c.h.b16 %v193
    %v534 = vunpack.c.l.b16 %v194
    %v535 = vunpack.c.h.b16 %v194
    %v536 = vunpack.c.l.b16 %v195
    %v537 = vunpack.c.h.b16 %v195
    %v538 = vunpack.c.l.b16 %v196
    %v539 = vunpack.c.h.b16 %v196
    %v540 = vunpack.c.l.b16 %v197
    %v541 = vunpack.c.h.b16 %v197
    %v542 = vunpack.c.l.b16 %v198
    %v543 = vunpack.c.h.b16 %v198
    %v544 = vunpack.c.l.b16 %v199
    %v545 = vunpack.c.h.b16 %v199
    %v546 = vunpack.c.l.b16 %v200
    %v547 = vunpack.c.h.b16 %v200
    %v548 = vunpack.c.l.b16 %v201
    %v549 = vunpack.c.h.b16 %v201
    %v550 = vunpack.c.l.b16 %v202
    %v551 = vunpack.c.h.b16 %v202
    %v552 = vunpack.c.l.b16 %v203
    %v553 = vunpack.c.h.b16 %v203
    %v554 = vunpack.c.l.b16 %v204
    %v555 = vunpack.c.h.b16 %v204
    %v556 = vunpack.c.l.b16 %v205
    %v557 = vunpack.c.h.b16 %v205
    %v558 = vunpack.c.l.b16 %v206
    %v559 = vunpack.c.h.b16 %v206
    %v560 = vunpack.c.l.b16 %v207
    %v561 = vunpack.c.h.b16 %v207
    %v562 = vunpack.c.l.b16 %v208
    %v563 = vunpack.c.h.b16 %v208
    %v564 = vunpack.c.l.b16 %v209
    %v565 = vunpack.c.h.b16 %v209
    %v566 = vunpack.c.l.b16 %v210
    %v567 = vunpack.c.h.b16 %v210
    %v568 = vunpack.c.l.b16 %v211
    %v569 = vunpack.c.h.b16 %v211
    %v570 = vunpack.c.l.b16 %v212
    %v571 = vunpack.c.h.b16 %v212
    %v572 = vunpack.c.l.b16 %v213
    %v573 = vunpack.c.h.b16 %v213
    %v574 = vunpack.c.l.b16 %v214
    %v575 = vunpack.c.h.b16 %v214
    %v576 = vunpack.c.l.b16 %v215
    %v577 = vunpack.c.h.b16 %v215
    %v578 = vunpack.c.l.b16 %v216
    %v579 = vunpack.c.h.b16 %v216
    %v580 = vunpack.c.l.b16 %v217
    %v581 = vunpack.c.h.b16 %v217
    %v582 = vunpack.c.l.b16 %v218
    %v583 = vunpack.c.h.b16 %v218
    %v584 = vunpack.c.l.b16 %v219
    %v585 = vunpack.c.h.b16 %v219
    %v586 = vunpack.c.l.b16 %v220
    %v587 = vunpack.c.h.b16 %v220
    %v588 = vunpack.c.l.b16 %v221
    %v589 = vunpack.c.h.b16 %v221
    %v590 = vunpack.c.l.b16 %v222
    %v591 = vunpack.c.h.b16 %v222
    %v592 = vunpack.c.l.b16 %v223
    %v593 = vunpack.c.h.b16 %v223
    %v594 = vunpack.c.l.b16 %v224
    %v595 = vunpack.c.h.b16 %v224
    %v596 = vunpack.c.l.b16 %v225
    %v597 = vunpack.c.h.b16 %v225
    %v598 = vunpack.c.l.b16 %v226
    %v599 = vunpack.c.h.b16 %v226
    %v600 = vunpack.c.l.b16 %v227
    %v601 = vunpack.c.h.b16 %v227
    %v602 = vunpack.c.l.b16 %v228
    %v603 = vunpack.c.h.b16 %v228
    %v604 = vunpack.c.l.b16 %v229
    %v605 = vunpack.c.h.b16 %v229
    %v606 = vunpack.c.l.b16 %v230
    %v607 = vunpack.c.h.b16 %v230
    %v608 = vunpack.c.l.b16 %v231
    %v609 = vunpack.c.h.b16 %v231
    %v610 = vunpack.c.l.b16 %v232
    %v611 = vunpack.c.h.b16 %v232
    %v612 = vunpack.c.l.b16 %v233
    %v613 = vunpack.c.h.b16 %v233
    %v614 = vunpack.c.l.b16 %v234
    %v615 = vunpack.c.h.b16 %v234
    %v616 = vunpack.c.l.b16 %v235
    %v617 = vunpack.c.h.b16 %v235
    %v618 = vunpack.c.l.b16 %v236
    %v619 = vunpack.c.h.b16 %v236
    %v620 = vunpack.c.l.b16 %v237
    %v621 = vunpack.c.h.b16 %v237
    %v622 = vpack.c.b16 %v370, %v366
    %v623 = vpack.c.b16 %v371, %v367
    %v624 = vpack.c.b16 %v372, %v368
    %v625 = vpack.c.b16 %v373, %v369
    %v626 = vpack.c.b16 %v378, %v374
    %v627 = vpack.c.b16 %v379, %v375
    %v628 = vpack.c.b16 %v380, %v376
    %v629 = vpack.c.b16 %v381, %v377
    %v630 = vpack.c.b16 %v386, %v382
    %v631 = vpack.c.b16 %v387, %v383
    %v632 = vpack.c.b16 %v388, %v384
    %v633 = vpack.c.b16 %v389, %v385
    %v634 = vpack.c.b16 %v394, %v390
    %v635 = vpack.c.b16 %v395, %v391
    %v636 = vpack.c.b16 %v396, %v392
    %v637 = vpack.c.b16 %v397, %v393
    %v638 = vpack.c.b16 %v402, %v398
    %v639 = vpack.c.b16 %v403, %v399
    %v640 = vpack.c.b16 %v404, %v400
    %v641 = vpack.c.b16 %v405, %v401
    %v642 = vpack.c.b16 %v410, %v406
    %v643 = vpack.c.b16 %v411, %v407
    %v644 = vpack.c.b16 %v412, %v408
    %v645 = vpack.c.b16 %v413, %v409
    %v646 = vpack.c.b16 %v418, %v414
    %v647 = vpack.c.b16 %v419, %v415
    %v648 = vpack.c.b16 %v420, %v416
    %v649 = vpack.c.b16 %v421, %v417
    %v650 = vpack.c.b16 %v426, %v422
    %v651 = vpack.c.b16 %v427, %v423
    %v652 = vpack.c.b16 %v428, %v424
    %v653 = vpack.c.b16 %v429, %v425
    %v654 = vpack.c.b16 %v434, %v430
    %v655 = vpack.c.b16 %v435, %v431
    %v656 = vpack.c.b16 %v436, %v432
    %v657 = vpack.c.b16 %v437, %v433
    %v658 = vpack.c.b16 %v442, %v438
    %v659 = vpack.c.b16 %v443, %v439
    %v660 = vpack.c.b16 %v444, %v440
    %v661 = vpack.c.b16 %v445, %v441
    %v662 = vpack.c.b16 %v450, %v446
    %v663 = vpack.c.b16 %v451, %v447
    %v664 = vpack.c.b16 %v452, %v448
    %v665 = vpack.c.b16 %v453, %v449
    %v666 = vpack.c.b16 %v458, %v454
    %v667 = vpack.c.b16 %v459, %v455
    %v668 = vpack.c.b16 %v460, %v456
    %v669 = vpack.c.b16 %v461, %v457
    %v670 = vpack.c.b16 %v466, %v462
    %v671 = vpack.c.b16 %v467, %v463
    %v672 = vpack.c.b16 %v468, %v464
    %v673 = vpack.c.b16 %v469, %v465
    %v674 = vpack.c.b16 %v474, %v470
    %v675 = vpack.c.b16 %v475, %v471
    %v676 = vpack.c.b16 %v476, %v472
    %v677 = vpack.c.b16 %v477, %v473
    %v678 = vpack.c.b16 %v482, %v478
    %v679 = vpack.c.b16 %v483, %v479
    %v680 = vpack.c.b16 %v484, %v480
    %v681 = vpack.c.b16 %v485, %v481
    %v682 = vpack.c.b16 %v490, %v486
    %v683 = vpack.c.b16 %v491, %v487
    %v684 = vpack.c.b16 %v492, %v488
    %v685 = vpack.c.b16 %v493, %v489
    %v686 = vpack.c.b16 %v498, %v494
    %v687 = vpack.c.b16 %v499, %v495
    %v688 = vpack.c.b16 %v500, %v496
    %v689 = vpack.c.b16 %v501, %v497
    %v690 = vpack.c.b16 %v506, %v502
    %v691 = vpack.c.b16 %v507, %v503
    %v692 = vpack.c.b16 %v508, %v504
    %v693 = vpack.c.b16 %v509, %v505
    %v694 = vpack.c.b16 %v514, %v510
    %v695 = vpack.c.b16 %v515, %v511
    %v696 = vpack.c.b16 %v516, %v512
    %v697 = vpack.c.b16 %v517, %v513
    %v698 = vpack.c.b16 %v522, %v518
    %v699 = vpack.c.b16 %v523, %v519
    %v700 = vpack.c.b16 %v524, %v520
    %v701 = vpack.c.b16 %v525, %v521
    %v702 = vpack.c.b16 %v530, %v526
    %v703 = vpack.c.b16 %v531, %v527
    %v704 = vpack.c.b16 %v532, %v528
    %v705 = vpack.c.b16 %v533, %v529
    %v706 = vpack.c.b16 %v538, %v534
    %v707 = vpack.c.b16 %v539, %v535
    %v708 = vpack.c.b16 %v540, %v536
    %v709 = vpack.c.b16 %v541, %v537
    %v710 = vpack.c.b16 %v546, %v542
    %v711 = vpack.c.b16 %v547, %v543
    %v712 = vpack.c.b16 %v548, %v544
    %v713 = vpack.c.b16 %v549, %v545
    %v714 = vpack.c.b16 %v554, %v550
    %v715 = vpack.c.b16 %v555, %v551
    %v716 = vpack.c.b16 %v556, %v552
    %v717 = vpack.c.b16 %v557, %v553
    %v718 = vpack.c.b16 %v562, %v558
    %v719 = vpack.c.b16 %v563, %v559
    %v720 = vpack.c.b16 %v564, %v560
    %v721 = vpack.c.b16 %v565, %v561
    %v722 = vpack.c.b16 %v570, %v566
    %v723 = vpack.c.b16 %v571, %v567
    %v724 = vpack.c.b16 %v572, %v568
    %v725 = vpack.c.b16 %v573, %v569
    %v726 = vpack.c.b16 %v578, %v574
    %v727 = vpack.c.b16 %v579, %v575
    %v728 = vpack.c.b16 %v580, %v576
    %v729 = vpack.c.b16 %v581, %v577
    %v730 = vpack.c.b16 %v586, %v582
    %v731 = vpack.c.b16 %v587, %v583
    %v732 = vpack.c.b16 %v588, %v584
    %v733 = vpack.c.b16 %v589, %v585
    %v734 = vpack.c.b16 %v594, %v590
    %v735 = vpack.c.b16 %v595, %v591
    %v736 = vpack.c.b16 %v596, %v592
    %v737 = vpack.c.b16 %v597, %v593
    %v738 = vpack.c.b16 %v602, %v598
    %v739 = vpack.c.b16 %v603, %v599
    %v740 = vpack.c.b16 %v604, %v600
    %v741 = vpack.c.b16 %v605, %v601
    %v742 = vpack.c.b16 %v610, %v606
    %v743 = vpack.c.b16 %v611, %v607
    %v744 = vpack.c.b16 %v612, %v608
    %v745 = vpack.c.b16 %v613, %v609
    %v746 = vpack.c.b16 %v618, %v614
    %v747 = vpack.c.b16 %v619, %v615
    %v748 = vpack.c.b16 %v620, %v616
    %v749 = vpack.c.b16 %v621, %v617
    %878 = vmatprep.subr.bf16.mxu0 %v623
    %879 = vmatpush1.bf16.msra.mxu0 %v622
    %880 = vmatprep.subr.bf16.mxu0 %v627
    %881 = vmatpush1.bf16.msra.mxu0 %v626
    %882 = vmatprep.subr.bf16.mxu0 %v631
    %883 = vmatpush1.bf16.msra.mxu0 %v630
    %884 = vmatprep.subr.bf16.mxu0 %v635
    %885 = vmatpush1.bf16.msra.mxu0 %v634
    %886 = vmatprep.subr.bf16.mxu0 %v639
    %887 = vmatpush1.bf16.msra.mxu0 %v638
    %888 = vmatprep.subr.bf16.mxu0 %v643
    %889 = vmatpush1.bf16.msra.mxu0 %v642
    %890 = vmatprep.subr.bf16.mxu0 %v647
    %891 = vmatpush1.bf16.msra.mxu0 %v646
    %892 = vmatprep.subr.bf16.mxu0 %v651
    %893 = vmatpush1.bf16.msra.mxu0 %v650
    %894 = vmatprep.subr.bf16.mxu0 %v655
    %895 = vmatpush1.bf16.msra.mxu0 %v654
    %896 = vmatprep.subr.bf16.mxu0 %v659
    %897 = vmatpush1.bf16.msra.mxu0 %v658
    %898 = vmatprep.subr.bf16.mxu0 %v663
    %899 = vmatpush1.bf16.msra.mxu0 %v662
    %900 = vmatprep.subr.bf16.mxu0 %v667
    %901 = vmatpush1.bf16.msra.mxu0 %v666
    %902 = vmatprep.subr.bf16.mxu0 %v671
    %903 = vmatpush1.bf16.msra.mxu0 %v670
    %904 = vmatprep.subr.bf16.mxu0 %v675
    %905 = vmatpush1.bf16.msra.mxu0 %v674
    %906 = vmatprep.subr.bf16.mxu0 %v679
    %907 = vmatpush1.bf16.msra.mxu0 %v678
    %908 = vmatprep.subr.bf16.mxu0 %v683
    %909 = vmatpush1.bf16.msra.mxu0 %v682
    %910 = vmatprep.mubr.bf16.mxu0 %v107
    %911 = vmatmul.mubr.bf16.gmra.mrb[0].mxu0 %v106
    %v912 = vpop.f32.mrb[0].mxu0
    %v913 = vadd.f32 0.0, %v912
    %v914 = vpop.f32.mrb[0].mxu0
    %v915 = vadd.f32 0.0, %v914
    %v916 = vpop.f32.mrb[0].mxu0
    %v917 = vpop.f32.mrb[0].mxu0
    %918 = vdwg.mxu0
    %919 = vmatprep.subr.bf16.mxu0 %v687
    %920 = vmatpush1.bf16.msra.mxu0 %v686
    %921 = vmatprep.subr.bf16.mxu0 %v691
    %922 = vmatpush1.bf16.msra.mxu0 %v690
    %923 = vmatprep.subr.bf16.mxu0 %v695
    %924 = vmatpush1.bf16.msra.mxu0 %v694
    %925 = vmatprep.subr.bf16.mxu0 %v699
    %926 = vmatpush1.bf16.msra.mxu0 %v698
    %927 = vmatprep.subr.bf16.mxu0 %v703
    %928 = vmatpush1.bf16.msra.mxu0 %v702
    %929 = vmatprep.subr.bf16.mxu0 %v707
    %930 = vmatpush1.bf16.msra.mxu0 %v706
    %931 = vmatprep.subr.bf16.mxu0 %v711
    %932 = vmatpush1.bf16.msra.mxu0 %v710
    %933 = vmatprep.subr.bf16.mxu0 %v715
    %934 = vmatpush1.bf16.msra.mxu0 %v714
    %935 = vmatprep.subr.bf16.mxu0 %v719
    %936 = vmatpush1.bf16.msra.mxu0 %v718
    %937 = vmatprep.subr.bf16.mxu0 %v723
    %938 = vmatpush1.bf16.msra.mxu0 %v722
    %939 = vmatprep.subr.bf16.mxu0 %v727
    %940 = vmatpush1.bf16.msra.mxu0 %v726
    %941 = vmatprep.subr.bf16.mxu0 %v731
    %942 = vmatpush1.bf16.msra.mxu0 %v730
    %943 = vmatprep.subr.bf16.mxu0 %v735
    %944 = vmatpush1.bf16.msra.mxu0 %v734
    %945 = vmatprep.subr.bf16.mxu0 %v739
    %946 = vmatpush1.bf16.msra.mxu0 %v738
    %947 = vmatprep.subr.bf16.mxu0 %v743
    %948 = vmatpush1.bf16.msra.mxu0 %v742
    %949 = vmatprep.subr.bf16.mxu0 %v747
    %950 = vmatpush1.bf16.msra.mxu0 %v746
    %951 = vmatprep.mubr.bf16.mxu0 %v109
    %952 = vmatmul.mubr.bf16.gmra.mrb[0].mxu0 %v108
    %v953 = vpop.f32.mrb[0].mxu0
    %v954 = vadd.f32 %v913, %v953
    %v955 = vpop.f32.mrb[0].mxu0
    %v956 = vadd.f32 %v915, %v955
    %v957 = vpop.f32.mrb[0].mxu0
    %v958 = vpop.f32.mrb[0].mxu0
    %959 = vdwg.mxu0
    %960 = vmatprep.subr.bf16.mxu0 %v625
    %961 = vmatpush1.bf16.msra.mxu0 %v624
    %962 = vmatprep.subr.bf16.mxu0 %v629
    %963 = vmatpush1.bf16.msra.mxu0 %v628
    %964 = vmatprep.subr.bf16.mxu0 %v633
    %965 = vmatpush1.bf16.msra.mxu0 %v632
    %966 = vmatprep.subr.bf16.mxu0 %v637
    %967 = vmatpush1.bf16.msra.mxu0 %v636
    %968 = vmatprep.subr.bf16.mxu0 %v641
    %969 = vmatpush1.bf16.msra.mxu0 %v640
    %970 = vmatprep.subr.bf16.mxu0 %v645
    %971 = vmatpush1.bf16.msra.mxu0 %v644
    %972 = vmatprep.subr.bf16.mxu0 %v649
    %973 = vmatpush1.bf16.msra.mxu0 %v648
    %974 = vmatprep.subr.bf16.mxu0 %v653
    %975 = vmatpush1.bf16.msra.mxu0 %v652
    %976 = vmatprep.subr.bf16.mxu0 %v657
    %977 = vmatpush1.bf16.msra.mxu0 %v656
    %978 = vmatprep.subr.bf16.mxu0 %v661
    %979 = vmatpush1.bf16.msra.mxu0 %v660
    %980 = vmatprep.subr.bf16.mxu0 %v665
    %981 = vmatpush1.bf16.msra.mxu0 %v664
    %982 = vmatprep.subr.bf16.mxu0 %v669
    %983 = vmatpush1.bf16.msra.mxu0 %v668
    %984 = vmatprep.subr.bf16.mxu0 %v673
    %985 = vmatpush1.bf16.msra.mxu0 %v672
    %986 = vmatprep.subr.bf16.mxu0 %v677
    %987 = vmatpush1.bf16.msra.mxu0 %v676
    %988 = vmatprep.subr.bf16.mxu0 %v681
    %989 = vmatpush1.bf16.msra.mxu0 %v680
    %990 = vmatprep.subr.bf16.mxu0 %v685
    %991 = vmatpush1.bf16.msra.mxu0 %v684
    %992 = vmatprep.mubr.bf16.mxu0 %v107
    %993 = vmatmul.mubr.bf16.gmra.mrb[0].mxu0 %v106
    %v994 = vpop.f32.mrb[0].mxu0
    %v995 = vadd.f32 0.0, %v994
    %v996 = vpop.f32.mrb[0].mxu0
    %v997 = vadd.f32 0.0, %v996
    %v998 = vpop.f32.mrb[0].mxu0
    %v999 = vpop.f32.mrb[0].mxu0
    %1000 = vdwg.mxu0
    %1001 = vmatprep.subr.bf16.mxu0 %v689
    %1002 = vmatpush1.bf16.msra.mxu0 %v688
    %1003 = vmatprep.subr.bf16.mxu0 %v693
    %1004 = vmatpush1.bf16.msra.mxu0 %v692
    %1005 = vmatprep.subr.bf16.mxu0 %v697
    %1006 = vmatpush1.bf16.msra.mxu0 %v696
    %1007 = vmatprep.subr.bf16.mxu0 %v701
    %1008 = vmatpush1.bf16.msra.mxu0 %v700
    %1009 = vmatprep.subr.bf16.mxu0 %v705
    %1010 = vmatpush1.bf16.msra.mxu0 %v704
    %1011 = vmatprep.subr.bf16.mxu0 %v709
    %1012 = vmatpush1.bf16.msra.mxu0 %v708
    %1013 = vmatprep.subr.bf16.mxu0 %v713
    %1014 = vmatpush1.bf16.msra.mxu0 %v712
    %1015 = vmatprep.subr.bf16.mxu0 %v717
    %1016 = vmatpush1.bf16.msra.mxu0 %v716
    %1017 = vmatprep.subr.bf16.mxu0 %v721
    %1018 = vmatpush1.bf16.msra.mxu0 %v720
    %1019 = vmatprep.subr.bf16.mxu0 %v725
    %1020 = vmatpush1.bf16.msra.mxu0 %v724
    %1021 = vmatprep.subr.bf16.mxu0 %v729
    %1022 = vmatpush1.bf16.msra.mxu0 %v728
    %1023 = vmatprep.subr.bf16.mxu0 %v733
    %1024 = vmatpush1.bf16.msra.mxu0 %v732
    %1025 = vmatprep.subr.bf16.mxu0 %v737
    %1026 = vmatpush1.bf16.msra.mxu0 %v736
    %1027 = vmatprep.subr.bf16.mxu0 %v741
    %1028 = vmatpush1.bf16.msra.mxu0 %v740
    %1029 = vmatprep.subr.bf16.mxu0 %v745
    %1030 = vmatpush1.bf16.msra.mxu0 %v744
    %1031 = vmatprep.subr.bf16.mxu0 %v749
    %1032 = vmatpush1.bf16.msra.mxu0 %v748
    %1033 = vmatprep.mubr.bf16.mxu0 %v109
    %1034 = vmatmul.mubr.bf16.gmra.mrb[0].mxu0 %v108
    %v1035 = vpop.f32.mrb[0].mxu0
    %v1036 = vadd.f32 %v995, %v1035
    %v1037 = vpop.f32.mrb[0].mxu0
    %v1038 = vadd.f32 %v997, %v1037
    %v1039 = vpop.f32.mrb[0].mxu0
    %v1040 = vpop.f32.mrb[0].mxu0
    %1041 = vdwg.mxu0
    %v1042 = vrot.slane %v954, 4
    %v1043 = vadd.f32 %v954, %v1042
    %v1044 = vrot.slane %v1043, 2
    %v1045 = vadd.f32 %v1043, %v1044
    %v1046 = vrot.slane %v1045, 1
    %v1047 = vadd.f32 %v1045, %v1046
    %v1048 = vrot.slane %v956, 4
    %v1049 = vadd.f32 %v956, %v1048
    %v1050 = vrot.slane %v1049, 2
    %v1051 = vadd.f32 %v1049, %v1050
    %v1052 = vrot.slane %v1051, 1
    %v1053 = vadd.f32 %v1051, %v1052
    %v1054 = vrot.slane %v1036, 4
    %v1055 = vadd.f32 %v1036, %v1054
    %v1056 = vrot.slane %v1055, 2
    %v1057 = vadd.f32 %v1055, %v1056
    %v1058 = vrot.slane %v1057, 1
    %v1059 = vadd.f32 %v1057, %v1058
    %v1060 = vrot.slane %v1038, 4
    %v1061 = vadd.f32 %v1038, %v1060
    %v1062 = vrot.slane %v1061, 2
    %v1063 = vadd.f32 %v1061, %v1062
    %v1064 = vrot.slane %v1063, 1
    %v1065 = vadd.f32 %v1063, %v1064
    %v1066 = vmul.f32 %v1047, 0.125
    %v1067 = vmul.f32 %v1053, 0.125
    %v1068 = vmul.f32 %v1059, 0.125
    %v1069 = vmul.f32 %v1065, 0.125
    %v1070 = vmul.f32 %v954, %v954
    %v1071 = vmul.f32 %v956, %v956
    %v1072 = vmul.f32 %v1036, %v1036
    %v1073 = vmul.f32 %v1038, %v1038
    %v1074 = vrot.slane %v1070, 4
    %v1075 = vadd.f32 %v1070, %v1074
    %v1076 = vrot.slane %v1075, 2
    %v1077 = vadd.f32 %v1075, %v1076
    %v1078 = vrot.slane %v1077, 1
    %v1079 = vadd.f32 %v1077, %v1078
    %v1080 = vrot.slane %v1071, 4
    %v1081 = vadd.f32 %v1071, %v1080
    %v1082 = vrot.slane %v1081, 2
    %v1083 = vadd.f32 %v1081, %v1082
    %v1084 = vrot.slane %v1083, 1
    %v1085 = vadd.f32 %v1083, %v1084
    %v1086 = vrot.slane %v1072, 4
    %v1087 = vadd.f32 %v1072, %v1086
    %v1088 = vrot.slane %v1087, 2
    %v1089 = vadd.f32 %v1087, %v1088
    %v1090 = vrot.slane %v1089, 1
    %v1091 = vadd.f32 %v1089, %v1090
    %v1092 = vrot.slane %v1073, 4
    %v1093 = vadd.f32 %v1073, %v1092
    %v1094 = vrot.slane %v1093, 2
    %v1095 = vadd.f32 %v1093, %v1094
    %v1096 = vrot.slane %v1095, 1
    %v1097 = vadd.f32 %v1095, %v1096
    %v1098 = vmul.f32 %v1079, 0.125
    %v1099 = vmul.f32 %v1085, 0.125
    %v1100 = vmul.f32 %v1091, 0.125
    %v1101 = vmul.f32 %v1097, 0.125
    %v1102 = vmul.f32 %v1066, %v1066
    %v1103 = vmul.f32 %v1067, %v1067
    %v1104 = vmul.f32 %v1068, %v1068
    %v1105 = vmul.f32 %v1069, %v1069
    %v1106 = vsub.f32 %v1098, %v1102
    %v1107 = vsub.f32 %v1099, %v1103
    %v1108 = vsub.f32 %v1100, %v1104
    %v1109 = vsub.f32 %v1101, %v1105
    %v1110 = vmax.f32 %v1106, 0.0
    %v1111 = vmax.f32 %v1107, 0.0
    %v1112 = vmax.f32 %v1108, 0.0
    %v1113 = vmax.f32 %v1109, 0.0
    %v1114 = vld [vmem:[#allocation6] sm:$0xf]
    %v1115 = vadd.f32 %v1110, 1e-05
    %v1116 = vadd.f32 %v1111, 1e-05
    %v1117 = vadd.f32 %v1112, 1e-05
    %v1118 = vadd.f32 %v1113, 1e-05
    %v1119 = vrsqrt.pop %v1115
    %v1120 = vrsqrt.pop %v1116
    %v1121 = vrsqrt.pop %v1117
    %v1122 = vrsqrt.pop %v1118
    %v1127 = vcombine.low %v1119, %v1120
    %v1128 = vcombine.low %v1121, %v1122
    %v1130 = vunpack.c.l.s4 1966171168
    %v1131 = vunpack.c.0.s8 %v1130
    %v1132 = vlaneseq
    %v1133 = vshrl.u32 %v1132, 7
    %v1134 = vsub.s32 %v1131, %v1133
    %v1135 = vrot.slane %v1127, %v1134
    %v1137 = vunpack.c.l.s4 1966171168
    %v1138 = vunpack.c.0.s8 %v1137
    %v1139 = vlaneseq
    %v1140 = vshrl.u32 %v1139, 7
    %v1141 = vsub.s32 %v1138, %v1140
    %v1142 = vrot.slane %v1128, %v1141
    %v1143 = vcombine.low %v1135, %v1142
    %v1145 = vunpack.c.l.s4 1966171168
    %v1146 = vunpack.c.0.s8 %v1145
    %v1147 = vlaneseq
    %v1148 = vshrl.u32 %v1147, 7
    %v1149 = vsub.s32 %v1146, %v1148
    %v1150 = vrot.slane %v1143, %v1149
    %v1152 = vmul.f32 %v1114, %v1150
    %v1153 = vld [vmem:[#allocation7] sm:$0xf]
    %v1155 = vlaneseq
    %v1156 = vshrl.u32 %v1155, 7
    %v1157 = vsub.s32 0, %v1156
    %v1158 = vrot.slane %v1152, %v1157
    %v1159 = vlaneseq
    %v1160 = vshrl.u32 %v1159, 7
    %v1161 = vsub.s32 1, %v1160
    %v1162 = vrot.slane %v1152, %v1161
    %v1163 = vlaneseq
    %v1164 = vshrl.u32 %v1163, 7
    %v1165 = vsub.s32 2, %v1164
    %v1166 = vrot.slane %v1152, %v1165
    %v1167 = vlaneseq
    %v1168 = vshrl.u32 %v1167, 7
    %v1169 = vsub.s32 3, %v1168
    %v1170 = vrot.slane %v1152, %v1169
    %v1175 = vmul.f32 %v1066, %v1158
    %v1176 = vmul.f32 %v1067, %v1162
    %v1177 = vmul.f32 %v1068, %v1166
    %v1178 = vmul.f32 %v1069, %v1170
    %v1183 = vcombine.low %v1175, %v1176
    %v1184 = vcombine.low %v1177, %v1178
    %v1186 = vunpack.c.l.s4 1966171168
    %v1187 = vunpack.c.0.s8 %v1186
    %v1188 = vlaneseq
    %v1189 = vshrl.u32 %v1188, 7
    %v1190 = vsub.s32 %v1187, %v1189
    %v1191 = vrot.slane %v1183, %v1190
    %v1193 = vunpack.c.l.s4 1966171168
    %v1194 = vunpack.c.0.s8 %v1193
    %v1195 = vlaneseq
    %v1196 = vshrl.u32 %v1195, 7
    %v1197 = vsub.s32 %v1194, %v1196
    %v1198 = vrot.slane %v1184, %v1197
    %v1199 = vcombine.low %v1191, %v1198
    %v1201 = vunpack.c.l.s4 1966171168
    %v1202 = vunpack.c.0.s8 %v1201
    %v1203 = vlaneseq
    %v1204 = vshrl.u32 %v1203, 7
    %v1205 = vsub.s32 %v1202, %v1204
    %v1206 = vrot.slane %v1199, %v1205
    %v1208 = vsub.f32 %v1153, %v1206
    %v1209 = vmul.f32 %v954, %v1158
    %v1210 = vmul.f32 %v956, %v1162
    %v1211 = vmul.f32 %v1036, %v1166
    %v1212 = vmul.f32 %v1038, %v1170
    %v1214 = vlaneseq
    %v1215 = vshrl.u32 %v1214, 7
    %v1216 = vsub.s32 0, %v1215
    %v1217 = vrot.slane %v1208, %v1216
    %v1218 = vlaneseq
    %v1219 = vshrl.u32 %v1218, 7
    %v1220 = vsub.s32 1, %v1219
    %v1221 = vrot.slane %v1208, %v1220
    %v1222 = vlaneseq
    %v1223 = vshrl.u32 %v1222, 7
    %v1224 = vsub.s32 2, %v1223
    %v1225 = vrot.slane %v1208, %v1224
    %v1226 = vlaneseq
    %v1227 = vshrl.u32 %v1226, 7
    %v1228 = vsub.s32 3, %v1227
    %v1229 = vrot.slane %v1208, %v1228
    %v1234 = vadd.f32 %v1209, %v1217
    %v1235 = vadd.f32 %v1210, %v1221
    %v1236 = vadd.f32 %v1211, %v1225
    %v1237 = vadd.f32 %v1212, %v1229
    %v1238 = vmax.f32 %v1234, 0.0
    %v1239 = vmax.f32 %v1235, 0.0
    %v1240 = vmax.f32 %v1236, 0.0
    %v1241 = vmax.f32 %v1237, 0.0
    %v1242 = vpack.c.bf16 %v1238, %v1238
    %v1243 = vpack.c.bf16 %v1239, %v1239
    %v1244 = vpack.c.bf16 %v1240, %v1240
    %v1245 = vpack.c.bf16 %v1241, %v1241
    %s1246 = scalar_lea.vmem [#allocation4], 1024
    %v1247 = vld [vmem:[%s1246] sm:$0xff]
    %v1248 = vld [vmem:[%s1246 + $0x8] sm:$0xff]
    %v1249 = vld [vmem:[%s1246 + $0x10] sm:$0xff]
    %v1250 = vld [vmem:[%s1246 + $0x18] sm:$0xff]
    %v1251 = vld [vmem:[%s1246 + $0x20] sm:$0xff]
    %v1252 = vld [vmem:[%s1246 + $0x28] sm:$0xff]
    %v1253 = vld [vmem:[%s1246 + $0x30] sm:$0xff]
    %v1254 = vld [vmem:[%s1246 + $0x38] sm:$0xff]
    %v1255 = vld [vmem:[%s1246 + $0x40] sm:$0xff]
    %v1256 = vld [vmem:[%s1246 + $0x48] sm:$0xff]
    %v1257 = vld [vmem:[%s1246 + $0x50] sm:$0xff]
    %v1258 = vld [vmem:[%s1246 + $0x58] sm:$0xff]
    %v1259 = vld [vmem:[%s1246 + $0x60] sm:$0xff]
    %v1260 = vld [vmem:[%s1246 + $0x68] sm:$0xff]
    %v1261 = vld [vmem:[%s1246 + $0x70] sm:$0xff]
    %v1262 = vld [vmem:[%s1246 + $0x78] sm:$0xff]
    %v1263 = vld [vmem:[%s1246 + $0x80] sm:$0xff]
    %v1264 = vld [vmem:[%s1246 + $0x88] sm:$0xff]
    %v1265 = vld [vmem:[%s1246 + $0x90] sm:$0xff]
    %v1266 = vld [vmem:[%s1246 + $0x98] sm:$0xff]
    %v1267 = vld [vmem:[%s1246 + $0xa0] sm:$0xff]
    %v1268 = vld [vmem:[%s1246 + $0xa8] sm:$0xff]
    %v1269 = vld [vmem:[%s1246 + $0xb0] sm:$0xff]
    %v1270 = vld [vmem:[%s1246 + $0xb8] sm:$0xff]
    %v1271 = vld [vmem:[%s1246 + $0xc0] sm:$0xff]
    %v1272 = vld [vmem:[%s1246 + $0xc8] sm:$0xff]
    %v1273 = vld [vmem:[%s1246 + $0xd0] sm:$0xff]
    %v1274 = vld [vmem:[%s1246 + $0xd8] sm:$0xff]
    %v1275 = vld [vmem:[%s1246 + $0xe0] sm:$0xff]
    %v1276 = vld [vmem:[%s1246 + $0xe8] sm:$0xff]
    %v1277 = vld [vmem:[%s1246 + $0xf0] sm:$0xff]
    %v1278 = vld [vmem:[%s1246 + $0xf8] sm:$0xff]
    %v1279 = vld [vmem:[%s1246 + $0x100] sm:$0xff]
    %v1280 = vld [vmem:[%s1246 + $0x108] sm:$0xff]
    %v1281 = vld [vmem:[%s1246 + $0x110] sm:$0xff]
    %v1282 = vld [vmem:[%s1246 + $0x118] sm:$0xff]
    %v1283 = vld [vmem:[%s1246 + $0x120] sm:$0xff]
    %v1284 = vld [vmem:[%s1246 + $0x128] sm:$0xff]
    %v1285 = vld [vmem:[%s1246 + $0x130] sm:$0xff]
    %v1286 = vld [vmem:[%s1246 + $0x138] sm:$0xff]
    %v1287 = vld [vmem:[%s1246 + $0x140] sm:$0xff]
    %v1288 = vld [vmem:[%s1246 + $0x148] sm:$0xff]
    %v1289 = vld [vmem:[%s1246 + $0x150] sm:$0xff]
    %v1290 = vld [vmem:[%s1246 + $0x158] sm:$0xff]
    %v1291 = vld [vmem:[%s1246 + $0x160] sm:$0xff]
    %v1292 = vld [vmem:[%s1246 + $0x168] sm:$0xff]
    %v1293 = vld [vmem:[%s1246 + $0x170] sm:$0xff]
    %v1294 = vld [vmem:[%s1246 + $0x178] sm:$0xff]
    %v1295 = vld [vmem:[%s1246 + $0x180] sm:$0xff]
    %v1296 = vld [vmem:[%s1246 + $0x188] sm:$0xff]
    %v1297 = vld [vmem:[%s1246 + $0x190] sm:$0xff]
    %v1298 = vld [vmem:[%s1246 + $0x198] sm:$0xff]
    %v1299 = vld [vmem:[%s1246 + $0x1a0] sm:$0xff]
    %v1300 = vld [vmem:[%s1246 + $0x1a8] sm:$0xff]
    %v1301 = vld [vmem:[%s1246 + $0x1b0] sm:$0xff]
    %v1302 = vld [vmem:[%s1246 + $0x1b8] sm:$0xff]
    %v1303 = vld [vmem:[%s1246 + $0x1c0] sm:$0xff]
    %v1304 = vld [vmem:[%s1246 + $0x1c8] sm:$0xff]
    %v1305 = vld [vmem:[%s1246 + $0x1d0] sm:$0xff]
    %v1306 = vld [vmem:[%s1246 + $0x1d8] sm:$0xff]
    %v1307 = vld [vmem:[%s1246 + $0x1e0] sm:$0xff]
    %v1308 = vld [vmem:[%s1246 + $0x1e8] sm:$0xff]
    %v1309 = vld [vmem:[%s1246 + $0x1f0] sm:$0xff]
    %v1310 = vld [vmem:[%s1246 + $0x1f8] sm:$0xff]
    %v1311 = vld [vmem:[%s1246 + $0x200] sm:$0xff]
    %v1312 = vld [vmem:[%s1246 + $0x208] sm:$0xff]
    %v1313 = vld [vmem:[%s1246 + $0x210] sm:$0xff]
    %v1314 = vld [vmem:[%s1246 + $0x218] sm:$0xff]
    %v1315 = vld [vmem:[%s1246 + $0x220] sm:$0xff]
    %v1316 = vld [vmem:[%s1246 + $0x228] sm:$0xff]
    %v1317 = vld [vmem:[%s1246 + $0x230] sm:$0xff]
    %v1318 = vld [vmem:[%s1246 + $0x238] sm:$0xff]
    %v1319 = vld [vmem:[%s1246 + $0x240] sm:$0xff]
    %v1320 = vld [vmem:[%s1246 + $0x248] sm:$0xff]
    %v1321 = vld [vmem:[%s1246 + $0x250] sm:$0xff]
    %v1322 = vld [vmem:[%s1246 + $0x258] sm:$0xff]
    %v1323 = vld [vmem:[%s1246 + $0x260] sm:$0xff]
    %v1324 = vld [vmem:[%s1246 + $0x268] sm:$0xff]
    %v1325 = vld [vmem:[%s1246 + $0x270] sm:$0xff]
    %v1326 = vld [vmem:[%s1246 + $0x278] sm:$0xff]
    %v1327 = vld [vmem:[%s1246 + $0x280] sm:$0xff]
    %v1328 = vld [vmem:[%s1246 + $0x288] sm:$0xff]
    %v1329 = vld [vmem:[%s1246 + $0x290] sm:$0xff]
    %v1330 = vld [vmem:[%s1246 + $0x298] sm:$0xff]
    %v1331 = vld [vmem:[%s1246 + $0x2a0] sm:$0xff]
    %v1332 = vld [vmem:[%s1246 + $0x2a8] sm:$0xff]
    %v1333 = vld [vmem:[%s1246 + $0x2b0] sm:$0xff]
    %v1334 = vld [vmem:[%s1246 + $0x2b8] sm:$0xff]
    %v1335 = vld [vmem:[%s1246 + $0x2c0] sm:$0xff]
    %v1336 = vld [vmem:[%s1246 + $0x2c8] sm:$0xff]
    %v1337 = vld [vmem:[%s1246 + $0x2d0] sm:$0xff]
    %v1338 = vld [vmem:[%s1246 + $0x2d8] sm:$0xff]
    %v1339 = vld [vmem:[%s1246 + $0x2e0] sm:$0xff]
    %v1340 = vld [vmem:[%s1246 + $0x2e8] sm:$0xff]
    %v1341 = vld [vmem:[%s1246 + $0x2f0] sm:$0xff]
    %v1342 = vld [vmem:[%s1246 + $0x2f8] sm:$0xff]
    %v1343 = vld [vmem:[%s1246 + $0x300] sm:$0xff]
    %v1344 = vld [vmem:[%s1246 + $0x308] sm:$0xff]
    %v1345 = vld [vmem:[%s1246 + $0x310] sm:$0xff]
    %v1346 = vld [vmem:[%s1246 + $0x318] sm:$0xff]
    %v1347 = vld [vmem:[%s1246 + $0x320] sm:$0xff]
    %v1348 = vld [vmem:[%s1246 + $0x328] sm:$0xff]
    %v1349 = vld [vmem:[%s1246 + $0x330] sm:$0xff]
    %v1350 = vld [vmem:[%s1246 + $0x338] sm:$0xff]
    %v1351 = vld [vmem:[%s1246 + $0x340] sm:$0xff]
    %v1352 = vld [vmem:[%s1246 + $0x348] sm:$0xff]
    %v1353 = vld [vmem:[%s1246 + $0x350] sm:$0xff]
    %v1354 = vld [vmem:[%s1246 + $0x358] sm:$0xff]
    %v1355 = vld [vmem:[%s1246 + $0x360] sm:$0xff]
    %v1356 = vld [vmem:[%s1246 + $0x368] sm:$0xff]
    %v1357 = vld [vmem:[%s1246 + $0x370] sm:$0xff]
    %v1358 = vld [vmem:[%s1246 + $0x378] sm:$0xff]
    %v1359 = vld [vmem:[%s1246 + $0x380] sm:$0xff]
    %v1360 = vld [vmem:[%s1246 + $0x388] sm:$0xff]
    %v1361 = vld [vmem:[%s1246 + $0x390] sm:$0xff]
    %v1362 = vld [vmem:[%s1246 + $0x398] sm:$0xff]
    %v1363 = vld [vmem:[%s1246 + $0x3a0] sm:$0xff]
    %v1364 = vld [vmem:[%s1246 + $0x3a8] sm:$0xff]
    %v1365 = vld [vmem:[%s1246 + $0x3b0] sm:$0xff]
    %v1366 = vld [vmem:[%s1246 + $0x3b8] sm:$0xff]
    %v1367 = vld [vmem:[%s1246 + $0x3c0] sm:$0xff]
    %v1368 = vld [vmem:[%s1246 + $0x3c8] sm:$0xff]
    %v1369 = vld [vmem:[%s1246 + $0x3d0] sm:$0xff]
    %v1370 = vld [vmem:[%s1246 + $0x3d8] sm:$0xff]
    %v1371 = vld [vmem:[%s1246 + $0x3e0] sm:$0xff]
    %v1372 = vld [vmem:[%s1246 + $0x3e8] sm:$0xff]
    %v1373 = vld [vmem:[%s1246 + $0x3f0] sm:$0xff]
    %v1374 = vld [vmem:[%s1246 + $0x3f8] sm:$0xff]
    %v1503 = vunpack.c.l.b16 %v1247
    %v1504 = vunpack.c.h.b16 %v1247
    %v1505 = vunpack.c.l.b16 %v1248
    %v1506 = vunpack.c.h.b16 %v1248
    %v1507 = vunpack.c.l.b16 %v1249
    %v1508 = vunpack.c.h.b16 %v1249
    %v1509 = vunpack.c.l.b16 %v1250
    %v1510 = vunpack.c.h.b16 %v1250
    %v1511 = vunpack.c.l.b16 %v1251
    %v1512 = vunpack.c.h.b16 %v1251
    %v1513 = vunpack.c.l.b16 %v1252
    %v1514 = vunpack.c.h.b16 %v1252
    %v1515 = vunpack.c.l.b16 %v1253
    %v1516 = vunpack.c.h.b16 %v1253
    %v1517 = vunpack.c.l.b16 %v1254
    %v1518 = vunpack.c.h.b16 %v1254
    %v1519 = vunpack.c.l.b16 %v1255
    %v1520 = vunpack.c.h.b16 %v1255
    %v1521 = vunpack.c.l.b16 %v1256
    %v1522 = vunpack.c.h.b16 %v1256
    %v1523 = vunpack.c.l.b16 %v1257
    %v1524 = vunpack.c.h.b16 %v1257
    %v1525 = vunpack.c.l.b16 %v1258
    %v1526 = vunpack.c.h.b16 %v1258
    %v1527 = vunpack.c.l.b16 %v1259
    %v1528 = vunpack.c.h.b16 %v1259
    %v1529 = vunpack.c.l.b16 %v1260
    %v1530 = vunpack.c.h.b16 %v1260
    %v1531 = vunpack.c.l.b16 %v1261
    %v1532 = vunpack.c.h.b16 %v1261
    %v1533 = vunpack.c.l.b16 %v1262
    %v1534 = vunpack.c.h.b16 %v1262
    %v1535 = vunpack.c.l.b16 %v1263
    %v1536 = vunpack.c.h.b16 %v1263
    %v1537 = vunpack.c.l.b16 %v1264
    %v1538 = vunpack.c.h.b16 %v1264
    %v1539 = vunpack.c.l.b16 %v1265
    %v1540 = vunpack.c.h.b16 %v1265
    %v1541 = vunpack.c.l.b16 %v1266
    %v1542 = vunpack.c.h.b16 %v1266
    %v1543 = vunpack.c.l.b16 %v1267
    %v1544 = vunpack.c.h.b16 %v1267
    %v1545 = vunpack.c.l.b16 %v1268
    %v1546 = vunpack.c.h.b16 %v1268
    %v1547 = vunpack.c.l.b16 %v1269
    %v1548 = vunpack.c.h.b16 %v1269
    %v1549 = vunpack.c.l.b16 %v1270
    %v1550 = vunpack.c.h.b16 %v1270
    %v1551 = vunpack.c.l.b16 %v1271
    %v1552 = vunpack.c.h.b16 %v1271
    %v1553 = vunpack.c.l.b16 %v1272
    %v1554 = vunpack.c.h.b16 %v1272
    %v1555 = vunpack.c.l.b16 %v1273
    %v1556 = vunpack.c.h.b16 %v1273
    %v1557 = vunpack.c.l.b16 %v1274
    %v1558 = vunpack.c.h.b16 %v1274
    %v1559 = vunpack.c.l.b16 %v1275
    %v1560 = vunpack.c.h.b16 %v1275
    %v1561 = vunpack.c.l.b16 %v1276
    %v1562 = vunpack.c.h.b16 %v1276
    %v1563 = vunpack.c.l.b16 %v1277
    %v1564 = vunpack.c.h.b16 %v1277
    %v1565 = vunpack.c.l.b16 %v1278
    %v1566 = vunpack.c.h.b16 %v1278
    %v1567 = vunpack.c.l.b16 %v1279
    %v1568 = vunpack.c.h.b16 %v1279
    %v1569 = vunpack.c.l.b16 %v1280
    %v1570 = vunpack.c.h.b16 %v1280
    %v1571 = vunpack.c.l.b16 %v1281
    %v1572 = vunpack.c.h.b16 %v1281
    %v1573 = vunpack.c.l.b16 %v1282
    %v1574 = vunpack.c.h.b16 %v1282
    %v1575 = vunpack.c.l.b16 %v1283
    %v1576 = vunpack.c.h.b16 %v1283
    %v1577 = vunpack.c.l.b16 %v1284
    %v1578 = vunpack.c.h.b16 %v1284
    %v1579 = vunpack.c.l.b16 %v1285
    %v1580 = vunpack.c.h.b16 %v1285
    %v1581 = vunpack.c.l.b16 %v1286
    %v1582 = vunpack.c.h.b16 %v1286
    %v1583 = vunpack.c.l.b16 %v1287
    %v1584 = vunpack.c.h.b16 %v1287
    %v1585 = vunpack.c.l.b16 %v1288
    %v1586 = vunpack.c.h.b16 %v1288
    %v1587 = vunpack.c.l.b16 %v1289
    %v1588 = vunpack.c.h.b16 %v1289
    %v1589 = vunpack.c.l.b16 %v1290
    %v1590 = vunpack.c.h.b16 %v1290
    %v1591 = vunpack.c.l.b16 %v1291
    %v1592 = vunpack.c.h.b16 %v1291
    %v1593 = vunpack.c.l.b16 %v1292
    %v1594 = vunpack.c.h.b16 %v1292
    %v1595 = vunpack.c.l.b16 %v1293
    %v1596 = vunpack.c.h.b16 %v1293
    %v1597 = vunpack.c.l.b16 %v1294
    %v1598 = vunpack.c.h.b16 %v1294
    %v1599 = vunpack.c.l.b16 %v1295
    %v1600 = vunpack.c.h.b16 %v1295
    %v1601 = vunpack.c.l.b16 %v1296
    %v1602 = vunpack.c.h.b16 %v1296
    %v1603 = vunpack.c.l.b16 %v1297
    %v1604 = vunpack.c.h.b16 %v1297
    %v1605 = vunpack.c.l.b16 %v1298
    %v1606 = vunpack.c.h.b16 %v1298
    %v1607 = vunpack.c.l.b16 %v1299
    %v1608 = vunpack.c.h.b16 %v1299
    %v1609 = vunpack.c.l.b16 %v1300
    %v1610 = vunpack.c.h.b16 %v1300
    %v1611 = vunpack.c.l.b16 %v1301
    %v1612 = vunpack.c.h.b16 %v1301
    %v1613 = vunpack.c.l.b16 %v1302
    %v1614 = vunpack.c.h.b16 %v1302
    %v1615 = vunpack.c.l.b16 %v1303
    %v1616 = vunpack.c.h.b16 %v1303
    %v1617 = vunpack.c.l.b16 %v1304
    %v1618 = vunpack.c.h.b16 %v1304
    %v1619 = vunpack.c.l.b16 %v1305
    %v1620 = vunpack.c.h.b16 %v1305
    %v1621 = vunpack.c.l.b16 %v1306
    %v1622 = vunpack.c.h.b16 %v1306
    %v1623 = vunpack.c.l.b16 %v1307
    %v1624 = vunpack.c.h.b16 %v1307
    %v1625 = vunpack.c.l.b16 %v1308
    %v1626 = vunpack.c.h.b16 %v1308
    %v1627 = vunpack.c.l.b16 %v1309
    %v1628 = vunpack.c.h.b16 %v1309
    %v1629 = vunpack.c.l.b16 %v1310
    %v1630 = vunpack.c.h.b16 %v1310
    %v1631 = vunpack.c.l.b16 %v1311
    %v1632 = vunpack.c.h.b16 %v1311
    %v1633 = vunpack.c.l.b16 %v1312
    %v1634 = vunpack.c.h.b16 %v1312
    %v1635 = vunpack.c.l.b16 %v1313
    %v1636 = vunpack.c.h.b16 %v1313
    %v1637 = vunpack.c.l.b16 %v1314
    %v1638 = vunpack.c.h.b16 %v1314
    %v1639 = vunpack.c.l.b16 %v1315
    %v1640 = vunpack.c.h.b16 %v1315
    %v1641 = vunpack.c.l.b16 %v1316
    %v1642 = vunpack.c.h.b16 %v1316
    %v1643 = vunpack.c.l.b16 %v1317
    %v1644 = vunpack.c.h.b16 %v1317
    %v1645 = vunpack.c.l.b16 %v1318
    %v1646 = vunpack.c.h.b16 %v1318
    %v1647 = vunpack.c.l.b16 %v1319
    %v1648 = vunpack.c.h.b16 %v1319
    %v1649 = vunpack.c.l.b16 %v1320
    %v1650 = vunpack.c.h.b16 %v1320
    %v1651 = vunpack.c.l.b16 %v1321
    %v1652 = vunpack.c.h.b16 %v1321
    %v1653 = vunpack.c.l.b16 %v1322
    %v1654 = vunpack.c.h.b16 %v1322
    %v1655 = vunpack.c.l.b16 %v1323
    %v1656 = vunpack.c.h.b16 %v1323
    %v1657 = vunpack.c.l.b16 %v1324
    %v1658 = vunpack.c.h.b16 %v1324
    %v1659 = vunpack.c.l.b16 %v1325
    %v1660 = vunpack.c.h.b16 %v1325
    %v1661 = vunpack.c.l.b16 %v1326
    %v1662 = vunpack.c.h.b16 %v1326
    %v1663 = vunpack.c.l.b16 %v1327
    %v1664 = vunpack.c.h.b16 %v1327
    %v1665 = vunpack.c.l.b16 %v1328
    %v1666 = vunpack.c.h.b16 %v1328
    %v1667 = vunpack.c.l.b16 %v1329
    %v1668 = vunpack.c.h.b16 %v1329
    %v1669 = vunpack.c.l.b16 %v1330
    %v1670 = vunpack.c.h.b16 %v1330
    %v1671 = vunpack.c.l.b16 %v1331
    %v1672 = vunpack.c.h.b16 %v1331
    %v1673 = vunpack.c.l.b16 %v1332
    %v1674 = vunpack.c.h.b16 %v1332
    %v1675 = vunpack.c.l.b16 %v1333
    %v1676 = vunpack.c.h.b16 %v1333
    %v1677 = vunpack.c.l.b16 %v1334
    %v1678 = vunpack.c.h.b16 %v1334
    %v1679 = vunpack.c.l.b16 %v1335
    %v1680 = vunpack.c.h.b16 %v1335
    %v1681 = vunpack.c.l.b16 %v1336
    %v1682 = vunpack.c.h.b16 %v1336
    %v1683 = vunpack.c.l.b16 %v1337
    %v1684 = vunpack.c.h.b16 %v1337
    %v1685 = vunpack.c.l.b16 %v1338
    %v1686 = vunpack.c.h.b16 %v1338
    %v1687 = vunpack.c.l.b16 %v1339
    %v1688 = vunpack.c.h.b16 %v1339
    %v1689 = vunpack.c.l.b16 %v1340
    %v1690 = vunpack.c.h.b16 %v1340
    %v1691 = vunpack.c.l.b16 %v1341
    %v1692 = vunpack.c.h.b16 %v1341
    %v1693 = vunpack.c.l.b16 %v1342
    %v1694 = vunpack.c.h.b16 %v1342
    %v1695 = vunpack.c.l.b16 %v1343
    %v1696 = vunpack.c.h.b16 %v1343
    %v1697 = vunpack.c.l.b16 %v1344
    %v1698 = vunpack.c.h.b16 %v1344
    %v1699 = vunpack.c.l.b16 %v1345
    %v1700 = vunpack.c.h.b16 %v1345
    %v1701 = vunpack.c.l.b16 %v1346
    %v1702 = vunpack.c.h.b16 %v1346
    %v1703 = vunpack.c.l.b16 %v1347
    %v1704 = vunpack.c.h.b16 %v1347
    %v1705 = vunpack.c.l.b16 %v1348
    %v1706 = vunpack.c.h.b16 %v1348
    %v1707 = vunpack.c.l.b16 %v1349
    %v1708 = vunpack.c.h.b16 %v1349
    %v1709 = vunpack.c.l.b16 %v1350
    %v1710 = vunpack.c.h.b16 %v1350
    %v1711 = vunpack.c.l.b16 %v1351
    %v1712 = vunpack.c.h.b16 %v1351
    %v1713 = vunpack.c.l.b16 %v1352
    %v1714 = vunpack.c.h.b16 %v1352
    %v1715 = vunpack.c.l.b16 %v1353
    %v1716 = vunpack.c.h.b16 %v1353
    %v1717 = vunpack.c.l.b16 %v1354
    %v1718 = vunpack.c.h.b16 %v1354
    %v1719 = vunpack.c.l.b16 %v1355
    %v1720 = vunpack.c.h.b16 %v1355
    %v1721 = vunpack.c.l.b16 %v1356
    %v1722 = vunpack.c.h.b16 %v1356
    %v1723 = vunpack.c.l.b16 %v1357
    %v1724 = vunpack.c.h.b16 %v1357
    %v1725 = vunpack.c.l.b16 %v1358
    %v1726 = vunpack.c.h.b16 %v1358
    %v1727 = vunpack.c.l.b16 %v1359
    %v1728 = vunpack.c.h.b16 %v1359
    %v1729 = vunpack.c.l.b16 %v1360
    %v1730 = vunpack.c.h.b16 %v1360
    %v1731 = vunpack.c.l.b16 %v1361
    %v1732 = vunpack.c.h.b16 %v1361
    %v1733 = vunpack.c.l.b16 %v1362
    %v1734 = vunpack.c.h.b16 %v1362
    %v1735 = vunpack.c.l.b16 %v1363
    %v1736 = vunpack.c.h.b16 %v1363
    %v1737 = vunpack.c.l.b16 %v1364
    %v1738 = vunpack.c.h.b16 %v1364
    %v1739 = vunpack.c.l.b16 %v1365
    %v1740 = vunpack.c.h.b16 %v1365
    %v1741 = vunpack.c.l.b16 %v1366
    %v1742 = vunpack.c.h.b16 %v1366
    %v1743 = vunpack.c.l.b16 %v1367
    %v1744 = vunpack.c.h.b16 %v1367
    %v1745 = vunpack.c.l.b16 %v1368
    %v1746 = vunpack.c.h.b16 %v1368
    %v1747 = vunpack.c.l.b16 %v1369
    %v1748 = vunpack.c.h.b16 %v1369
    %v1749 = vunpack.c.l.b16 %v1370
    %v1750 = vunpack.c.h.b16 %v1370
    %v1751 = vunpack.c.l.b16 %v1371
    %v1752 = vunpack.c.h.b16 %v1371
    %v1753 = vunpack.c.l.b16 %v1372
    %v1754 = vunpack.c.h.b16 %v1372
    %v1755 = vunpack.c.l.b16 %v1373
    %v1756 = vunpack.c.h.b16 %v1373
    %v1757 = vunpack.c.l.b16 %v1374
    %v1758 = vunpack.c.h.b16 %v1374
    %v1759 = vpack.c.b16 %v1507, %v1503
    %v1760 = vpack.c.b16 %v1508, %v1504
    %v1761 = vpack.c.b16 %v1509, %v1505
    %v1762 = vpack.c.b16 %v1510, %v1506
    %v1763 = vpack.c.b16 %v1515, %v1511
    %v1764 = vpack.c.b16 %v1516, %v1512
    %v1765 = vpack.c.b16 %v1517, %v1513
    %v1766 = vpack.c.b16 %v1518, %v1514
    %v1767 = vpack.c.b16 %v1523, %v1519
    %v1768 = vpack.c.b16 %v1524, %v1520
    %v1769 = vpack.c.b16 %v1525, %v1521
    %v1770 = vpack.c.b16 %v1526, %v1522
    %v1771 = vpack.c.b16 %v1531, %v1527
    %v1772 = vpack.c.b16 %v1532, %v1528
    %v1773 = vpack.c.b16 %v1533, %v1529
    %v1774 = vpack.c.b16 %v1534, %v1530
    %v1775 = vpack.c.b16 %v1539, %v1535
    %v1776 = vpack.c.b16 %v1540, %v1536
    %v1777 = vpack.c.b16 %v1541, %v1537
    %v1778 = vpack.c.b16 %v1542, %v1538
    %v1779 = vpack.c.b16 %v1547, %v1543
    %v1780 = vpack.c.b16 %v1548, %v1544
    %v1781 = vpack.c.b16 %v1549, %v1545
    %v1782 = vpack.c.b16 %v1550, %v1546
    %v1783 = vpack.c.b16 %v1555, %v1551
    %v1784 = vpack.c.b16 %v1556, %v1552
    %v1785 = vpack.c.b16 %v1557, %v1553
    %v1786 = vpack.c.b16 %v1558, %v1554
    %v1787 = vpack.c.b16 %v1563, %v1559
    %v1788 = vpack.c.b16 %v1564, %v1560
    %v1789 = vpack.c.b16 %v1565, %v1561
    %v1790 = vpack.c.b16 %v1566, %v1562
    %v1791 = vpack.c.b16 %v1571, %v1567
    %v1792 = vpack.c.b16 %v1572, %v1568
    %v1793 = vpack.c.b16 %v1573, %v1569
    %v1794 = vpack.c.b16 %v1574, %v1570
    %v1795 = vpack.c.b16 %v1579, %v1575
    %v1796 = vpack.c.b16 %v1580, %v1576
    %v1797 = vpack.c.b16 %v1581, %v1577
    %v1798 = vpack.c.b16 %v1582, %v1578
    %v1799 = vpack.c.b16 %v1587, %v1583
    %v1800 = vpack.c.b16 %v1588, %v1584
    %v1801 = vpack.c.b16 %v1589, %v1585
    %v1802 = vpack.c.b16 %v1590, %v1586
    %v1803 = vpack.c.b16 %v1595, %v1591
    %v1804 = vpack.c.b16 %v1596, %v1592
    %v1805 = vpack.c.b16 %v1597, %v1593
    %v1806 = vpack.c.b16 %v1598, %v1594
    %v1807 = vpack.c.b16 %v1603, %v1599
    %v1808 = vpack.c.b16 %v1604, %v1600
    %v1809 = vpack.c.b16 %v1605, %v1601
    %v1810 = vpack.c.b16 %v1606, %v1602
    %v1811 = vpack.c.b16 %v1611, %v1607
    %v1812 = vpack.c.b16 %v1612, %v1608
    %v1813 = vpack.c.b16 %v1613, %v1609
    %v1814 = vpack.c.b16 %v1614, %v1610
    %v1815 = vpack.c.b16 %v1619, %v1615
    %v1816 = vpack.c.b16 %v1620, %v1616
    %v1817 = vpack.c.b16 %v1621, %v1617
    %v1818 = vpack.c.b16 %v1622, %v1618
    %v1819 = vpack.c.b16 %v1627, %v1623
    %v1820 = vpack.c.b16 %v1628, %v1624
    %v1821 = vpack.c.b16 %v1629, %v1625
    %v1822 = vpack.c.b16 %v1630, %v1626
    %v1823 = vpack.c.b16 %v1635, %v1631
    %v1824 = vpack.c.b16 %v1636, %v1632
    %v1825 = vpack.c.b16 %v1637, %v1633
    %v1826 = vpack.c.b16 %v1638, %v1634
    %v1827 = vpack.c.b16 %v1643, %v1639
    %v1828 = vpack.c.b16 %v1644, %v1640
    %v1829 = vpack.c.b16 %v1645, %v1641
    %v1830 = vpack.c.b16 %v1646, %v1642
    %v1831 = vpack.c.b16 %v1651, %v1647
    %v1832 = vpack.c.b16 %v1652, %v1648
    %v1833 = vpack.c.b16 %v1653, %v1649
    %v1834 = vpack.c.b16 %v1654, %v1650
    %v1835 = vpack.c.b16 %v1659, %v1655
    %v1836 = vpack.c.b16 %v1660, %v1656
    %v1837 = vpack.c.b16 %v1661, %v1657
    %v1838 = vpack.c.b16 %v1662, %v1658
    %v1839 = vpack.c.b16 %v1667, %v1663
    %v1840 = vpack.c.b16 %v1668, %v1664
    %v1841 = vpack.c.b16 %v1669, %v1665
    %v1842 = vpack.c.b16 %v1670, %v1666
    %v1843 = vpack.c.b16 %v1675, %v1671
    %v1844 = vpack.c.b16 %v1676, %v1672
    %v1845 = vpack.c.b16 %v1677, %v1673
    %v1846 = vpack.c.b16 %v1678, %v1674
    %v1847 = vpack.c.b16 %v1683, %v1679
    %v1848 = vpack.c.b16 %v1684, %v1680
    %v1849 = vpack.c.b16 %v1685, %v1681
    %v1850 = vpack.c.b16 %v1686, %v1682
    %v1851 = vpack.c.b16 %v1691, %v1687
    %v1852 = vpack.c.b16 %v1692, %v1688
    %v1853 = vpack.c.b16 %v1693, %v1689
    %v1854 = vpack.c.b16 %v1694, %v1690
    %v1855 = vpack.c.b16 %v1699, %v1695
    %v1856 = vpack.c.b16 %v1700, %v1696
    %v1857 = vpack.c.b16 %v1701, %v1697
    %v1858 = vpack.c.b16 %v1702, %v1698
    %v1859 = vpack.c.b16 %v1707, %v1703
    %v1860 = vpack.c.b16 %v1708, %v1704
    %v1861 = vpack.c.b16 %v1709, %v1705
    %v1862 = vpack.c.b16 %v1710, %v1706
    %v1863 = vpack.c.b16 %v1715, %v1711
    %v1864 = vpack.c.b16 %v1716, %v1712
    %v1865 = vpack.c.b16 %v1717, %v1713
    %v1866 = vpack.c.b16 %v1718, %v1714
    %v1867 = vpack.c.b16 %v1723, %v1719
    %v1868 = vpack.c.b16 %v1724, %v1720
    %v1869 = vpack.c.b16 %v1725, %v1721
    %v1870 = vpack.c.b16 %v1726, %v1722
    %v1871 = vpack.c.b16 %v1731, %v1727
    %v1872 = vpack.c.b16 %v1732, %v1728
    %v1873 = vpack.c.b16 %v1733, %v1729
    %v1874 = vpack.c.b16 %v1734, %v1730
    %v1875 = vpack.c.b16 %v1739, %v1735
    %v1876 = vpack.c.b16 %v1740, %v1736
    %v1877 = vpack.c.b16 %v1741, %v1737
    %v1878 = vpack.c.b16 %v1742, %v1738
    %v1879 = vpack.c.b16 %v1747, %v1743
    %v1880 = vpack.c.b16 %v1748, %v1744
    %v1881 = vpack.c.b16 %v1749, %v1745
    %v1882 = vpack.c.b16 %v1750, %v1746
    %v1883 = vpack.c.b16 %v1755, %v1751
    %v1884 = vpack.c.b16 %v1756, %v1752
    %v1885 = vpack.c.b16 %v1757, %v1753
    %v1886 = vpack.c.b16 %v1758, %v1754
    %2015 = vmatprep.subr.bf16.mxu0 %v1760
    %2016 = vmatpush1.bf16.msra.mxu0 %v1759
    %2017 = vmatprep.subr.bf16.mxu0 %v1764
    %2018 = vmatpush1.bf16.msra.mxu0 %v1763
    %2019 = vmatprep.subr.bf16.mxu0 %v1768
    %2020 = vmatpush1.bf16.msra.mxu0 %v1767
    %2021 = vmatprep.subr.bf16.mxu0 %v1772
    %2022 = vmatpush1.bf16.msra.mxu0 %v1771
    %2023 = vmatprep.subr.bf16.mxu0 %v1776
    %2024 = vmatpush1.bf16.msra.mxu0 %v1775
    %2025 = vmatprep.subr.bf16.mxu0 %v1780
    %2026 = vmatpush1.bf16.msra.mxu0 %v1779
    %2027 = vmatprep.subr.bf16.mxu0 %v1784
    %2028 = vmatpush1.bf16.msra.mxu0 %v1783
    %2029 = vmatprep.subr.bf16.mxu0 %v1788
    %2030 = vmatpush1.bf16.msra.mxu0 %v1787
    %2031 = vmatprep.subr.bf16.mxu0 %v1792
    %2032 = vmatpush1.bf16.msra.mxu0 %v1791
    %2033 = vmatprep.subr.bf16.mxu0 %v1796
    %2034 = vmatpush1.bf16.msra.mxu0 %v1795
    %2035 = vmatprep.subr.bf16.mxu0 %v1800
    %2036 = vmatpush1.bf16.msra.mxu0 %v1799
    %2037 = vmatprep.subr.bf16.mxu0 %v1804
    %2038 = vmatpush1.bf16.msra.mxu0 %v1803
    %2039 = vmatprep.subr.bf16.mxu0 %v1808
    %2040 = vmatpush1.bf16.msra.mxu0 %v1807
    %2041 = vmatprep.subr.bf16.mxu0 %v1812
    %2042 = vmatpush1.bf16.msra.mxu0 %v1811
    %2043 = vmatprep.subr.bf16.mxu0 %v1816
    %2044 = vmatpush1.bf16.msra.mxu0 %v1815
    %2045 = vmatprep.subr.bf16.mxu0 %v1820
    %2046 = vmatpush1.bf16.msra.mxu0 %v1819
    %2047 = vmatprep.mubr.bf16.mxu0 %v1243
    %2048 = vmatmul.mubr.bf16.gmra.mrb[0].mxu0 %v1242
    %v2049 = vpop.f32.mrb[0].mxu0
    %v2050 = vadd.f32 0.0, %v2049
    %v2051 = vpop.f32.mrb[0].mxu0
    %v2052 = vadd.f32 0.0, %v2051
    %v2053 = vpop.f32.mrb[0].mxu0
    %v2054 = vpop.f32.mrb[0].mxu0
    %2055 = vdwg.mxu0
    %2056 = vmatprep.subr.bf16.mxu0 %v1824
    %2057 = vmatpush1.bf16.msra.mxu0 %v1823
    %2058 = vmatprep.subr.bf16.mxu0 %v1828
    %2059 = vmatpush1.bf16.msra.mxu0 %v1827
    %2060 = vmatprep.subr.bf16.mxu0 %v1832
    %2061 = vmatpush1.bf16.msra.mxu0 %v1831
    %2062 = vmatprep.subr.bf16.mxu0 %v1836
    %2063 = vmatpush1.bf16.msra.mxu0 %v1835
    %2064 = vmatprep.subr.bf16.mxu0 %v1840
    %2065 = vmatpush1.bf16.msra.mxu0 %v1839
    %2066 = vmatprep.subr.bf16.mxu0 %v1844
    %2067 = vmatpush1.bf16.msra.mxu0 %v1843
    %2068 = vmatprep.subr.bf16.mxu0 %v1848
    %2069 = vmatpush1.bf16.msra.mxu0 %v1847
    %2070 = vmatprep.subr.bf16.mxu0 %v1852
    %2071 = vmatpush1.bf16.msra.mxu0 %v1851
    %2072 = vmatprep.subr.bf16.mxu0 %v1856
    %2073 = vmatpush1.bf16.msra.mxu0 %v1855
    %2074 = vmatprep.subr.bf16.mxu0 %v1860
    %2075 = vmatpush1.bf16.msra.mxu0 %v1859
    %2076 = vmatprep.subr.bf16.mxu0 %v1864
    %2077 = vmatpush1.bf16.msra.mxu0 %v1863
    %2078 = vmatprep.subr.bf16.mxu0 %v1868
    %2079 = vmatpush1.bf16.msra.mxu0 %v1867
    %2080 = vmatprep.subr.bf16.mxu0 %v1872
    %2081 = vmatpush1.bf16.msra.mxu0 %v1871
    %2082 = vmatprep.subr.bf16.mxu0 %v1876
    %2083 = vmatpush1.bf16.msra.mxu0 %v1875
    %2084 = vmatprep.subr.bf16.mxu0 %v1880
    %2085 = vmatpush1.bf16.msra.mxu0 %v1879
    %2086 = vmatprep.subr.bf16.mxu0 %v1884
    %2087 = vmatpush1.bf16.msra.mxu0 %v1883
    %2088 = vmatprep.mubr.bf16.mxu0 %v1245
    %2089 = vmatmul.mubr.bf16.gmra.mrb[0].mxu0 %v1244
    %v2090 = vpop.f32.mrb[0].mxu0
    %v2091 = vadd.f32 %v2050, %v2090
    %v2092 = vpop.f32.mrb[0].mxu0
    %v2093 = vadd.f32 %v2052, %v2092
    %v2094 = vpop.f32.mrb[0].mxu0
    %v2095 = vpop.f32.mrb[0].mxu0
    %2096 = vdwg.mxu0
    %2097 = vmatprep.subr.bf16.mxu0 %v1762
    %2098 = vmatpush1.bf16.msra.mxu0 %v1761
    %2099 = vmatprep.subr.bf16.mxu0 %v1766
    %2100 = vmatpush1.bf16.msra.mxu0 %v1765
    %2101 = vmatprep.subr.bf16.mxu0 %v1770
    %2102 = vmatpush1.bf16.msra.mxu0 %v1769
    %2103 = vmatprep.subr.bf16.mxu0 %v1774
    %2104 = vmatpush1.bf16.msra.mxu0 %v1773
    %2105 = vmatprep.subr.bf16.mxu0 %v1778
    %2106 = vmatpush1.bf16.msra.mxu0 %v1777
    %2107 = vmatprep.subr.bf16.mxu0 %v1782
    %2108 = vmatpush1.bf16.msra.mxu0 %v1781
    %2109 = vmatprep.subr.bf16.mxu0 %v1786
    %2110 = vmatpush1.bf16.msra.mxu0 %v1785
    %2111 = vmatprep.subr.bf16.mxu0 %v1790
    %2112 = vmatpush1.bf16.msra.mxu0 %v1789
    %2113 = vmatprep.subr.bf16.mxu0 %v1794
    %2114 = vmatpush1.bf16.msra.mxu0 %v1793
    %2115 = vmatprep.subr.bf16.mxu0 %v1798
    %2116 = vmatpush1.bf16.msra.mxu0 %v1797
    %2117 = vmatprep.subr.bf16.mxu0 %v1802
    %2118 = vmatpush1.bf16.msra.mxu0 %v1801
    %2119 = vmatprep.subr.bf16.mxu0 %v1806
    %2120 = vmatpush1.bf16.msra.mxu0 %v1805
    %2121 = vmatprep.subr.bf16.mxu0 %v1810
    %2122 = vmatpush1.bf16.msra.mxu0 %v1809
    %2123 = vmatprep.subr.bf16.mxu0 %v1814
    %2124 = vmatpush1.bf16.msra.mxu0 %v1813
    %2125 = vmatprep.subr.bf16.mxu0 %v1818
    %2126 = vmatpush1.bf16.msra.mxu0 %v1817
    %2127 = vmatprep.subr.bf16.mxu0 %v1822
    %2128 = vmatpush1.bf16.msra.mxu0 %v1821
    %2129 = vmatprep.mubr.bf16.mxu0 %v1243
    %2130 = vmatmul.mubr.bf16.gmra.mrb[0].mxu0 %v1242
    %v2131 = vpop.f32.mrb[0].mxu0
    %v2132 = vadd.f32 0.0, %v2131
    %v2133 = vpop.f32.mrb[0].mxu0
    %v2134 = vadd.f32 0.0, %v2133
    %v2135 = vpop.f32.mrb[0].mxu0
    %v2136 = vpop.f32.mrb[0].mxu0
    %2137 = vdwg.mxu0
    %2138 = vmatprep.subr.bf16.mxu0 %v1826
    %2139 = vmatpush1.bf16.msra.mxu0 %v1825
    %2140 = vmatprep.subr.bf16.mxu0 %v1830
    %2141 = vmatpush1.bf16.msra.mxu0 %v1829
    %2142 = vmatprep.subr.bf16.mxu0 %v1834
    %2143 = vmatpush1.bf16.msra.mxu0 %v1833
    %2144 = vmatprep.subr.bf16.mxu0 %v1838
    %2145 = vmatpush1.bf16.msra.mxu0 %v1837
    %2146 = vmatprep.subr.bf16.mxu0 %v1842
    %2147 = vmatpush1.bf16.msra.mxu0 %v1841
    %2148 = vmatprep.subr.bf16.mxu0 %v1846
    %2149 = vmatpush1.bf16.msra.mxu0 %v1845
    %2150 = vmatprep.subr.bf16.mxu0 %v1850
    %2151 = vmatpush1.bf16.msra.mxu0 %v1849
    %2152 = vmatprep.subr.bf16.mxu0 %v1854
    %2153 = vmatpush1.bf16.msra.mxu0 %v1853
    %2154 = vmatprep.subr.bf16.mxu0 %v1858
    %2155 = vmatpush1.bf16.msra.mxu0 %v1857
    %2156 = vmatprep.subr.bf16.mxu0 %v1862
    %2157 = vmatpush1.bf16.msra.mxu0 %v1861
    %2158 = vmatprep.subr.bf16.mxu0 %v1866
    %2159 = vmatpush1.bf16.msra.mxu0 %v1865
    %2160 = vmatprep.subr.bf16.mxu0 %v1870
    %2161 = vmatpush1.bf16.msra.mxu0 %v1869
    %2162 = vmatprep.subr.bf16.mxu0 %v1874
    %2163 = vmatpush1.bf16.msra.mxu0 %v1873
    %2164 = vmatprep.subr.bf16.mxu0 %v1878
    %2165 = vmatpush1.bf16.msra.mxu0 %v1877
    %2166 = vmatprep.subr.bf16.mxu0 %v1882
    %2167 = vmatpush1.bf16.msra.mxu0 %v1881
    %2168 = vmatprep.subr.bf16.mxu0 %v1886
    %2169 = vmatpush1.bf16.msra.mxu0 %v1885
    %2170 = vmatprep.mubr.bf16.mxu0 %v1245
    %2171 = vmatmul.mubr.bf16.gmra.mrb[0].mxu0 %v1244
    %v2172 = vpop.f32.mrb[0].mxu0
    %v2173 = vadd.f32 %v2132, %v2172
    %v2174 = vpop.f32.mrb[0].mxu0
    %v2175 = vadd.f32 %v2134, %v2174
    %v2176 = vpop.f32.mrb[0].mxu0
    %v2177 = vpop.f32.mrb[0].mxu0
    %2178 = vdwg.mxu0
    %v2179 = vrot.slane %v2091, 4
    %v2180 = vadd.f32 %v2091, %v2179
    %v2181 = vrot.slane %v2180, 2
    %v2182 = vadd.f32 %v2180, %v2181
    %v2183 = vrot.slane %v2182, 1
    %v2184 = vadd.f32 %v2182, %v2183
    %v2185 = vrot.slane %v2093, 4
    %v2186 = vadd.f32 %v2093, %v2185
    %v2187 = vrot.slane %v2186, 2
    %v2188 = vadd.f32 %v2186, %v2187
    %v2189 = vrot.slane %v2188, 1
    %v2190 = vadd.f32 %v2188, %v2189
    %v2191 = vrot.slane %v2173, 4
    %v2192 = vadd.f32 %v2173, %v2191
    %v2193 = vrot.slane %v2192, 2
    %v2194 = vadd.f32 %v2192, %v2193
    %v2195 = vrot.slane %v2194, 1
    %v2196 = vadd.f32 %v2194, %v2195
    %v2197 = vrot.slane %v2175, 4
    %v2198 = vadd.f32 %v2175, %v2197
    %v2199 = vrot.slane %v2198, 2
    %v2200 = vadd.f32 %v2198, %v2199
    %v2201 = vrot.slane %v2200, 1
    %v2202 = vadd.f32 %v2200, %v2201
    %v2203 = vmul.f32 %v2184, 0.125
    %v2204 = vmul.f32 %v2190, 0.125
    %v2205 = vmul.f32 %v2196, 0.125
    %v2206 = vmul.f32 %v2202, 0.125
    %v2207 = vmul.f32 %v2091, %v2091
    %v2208 = vmul.f32 %v2093, %v2093
    %v2209 = vmul.f32 %v2173, %v2173
    %v2210 = vmul.f32 %v2175, %v2175
    %v2211 = vrot.slane %v2207, 4
    %v2212 = vadd.f32 %v2207, %v2211
    %v2213 = vrot.slane %v2212, 2
    %v2214 = vadd.f32 %v2212, %v2213
    %v2215 = vrot.slane %v2214, 1
    %v2216 = vadd.f32 %v2214, %v2215
    %v2217 = vrot.slane %v2208, 4
    %v2218 = vadd.f32 %v2208, %v2217
    %v2219 = vrot.slane %v2218, 2
    %v2220 = vadd.f32 %v2218, %v2219
    %v2221 = vrot.slane %v2220, 1
    %v2222 = vadd.f32 %v2220, %v2221
    %v2223 = vrot.slane %v2209, 4
    %v2224 = vadd.f32 %v2209, %v2223
    %v2225 = vrot.slane %v2224, 2
    %v2226 = vadd.f32 %v2224, %v2225
    %v2227 = vrot.slane %v2226, 1
    %v2228 = vadd.f32 %v2226, %v2227
    %v2229 = vrot.slane %v2210, 4
    %v2230 = vadd.f32 %v2210, %v2229
    %v2231 = vrot.slane %v2230, 2
    %v2232 = vadd.f32 %v2230, %v2231
    %v2233 = vrot.slane %v2232, 1
    %v2234 = vadd.f32 %v2232, %v2233
    %v2235 = vmul.f32 %v2216, 0.125
    %v2236 = vmul.f32 %v2222, 0.125
    %v2237 = vmul.f32 %v2228, 0.125
    %v2238 = vmul.f32 %v2234, 0.125
    %v2239 = vmul.f32 %v2203, %v2203
    %v2240 = vmul.f32 %v2204, %v2204
    %v2241 = vmul.f32 %v2205, %v2205
    %v2242 = vmul.f32 %v2206, %v2206
    %v2243 = vsub.f32 %v2235, %v2239
    %v2244 = vsub.f32 %v2236, %v2240
    %v2245 = vsub.f32 %v2237, %v2241
    %v2246 = vsub.f32 %v2238, %v2242
    %v2247 = vmax.f32 %v2243, 0.0
    %v2248 = vmax.f32 %v2244, 0.0
    %v2249 = vmax.f32 %v2245, 0.0
    %v2250 = vmax.f32 %v2246, 0.0
    %s2251 = scalar_lea.vmem [#allocation6], 4
    %v2252 = vld [vmem:[%s2251] sm:$0xf]
    %v2253 = vadd.f32 %v2247, 1e-05
    %v2254 = vadd.f32 %v2248, 1e-05
    %v2255 = vadd.f32 %v2249, 1e-05
    %v2256 = vadd.f32 %v2250, 1e-05
    %v2257 = vrsqrt.pop %v2253
    %v2258 = vrsqrt.pop %v2254
    %v2259 = vrsqrt.pop %v2255
    %v2260 = vrsqrt.pop %v2256
    %v2265 = vcombine.low %v2257, %v2258
    %v2266 = vcombine.low %v2259, %v2260
    %v2268 = vunpack.c.l.s4 1966171168
    %v2269 = vunpack.c.0.s8 %v2268
    %v2270 = vlaneseq
    %v2271 = vshrl.u32 %v2270, 7
    %v2272 = vsub.s32 %v2269, %v2271
    %v2273 = vrot.slane %v2265, %v2272
    %v2275 = vunpack.c.l.s4 1966171168
    %v2276 = vunpack.c.0.s8 %v2275
    %v2277 = vlaneseq
    %v2278 = vshrl.u32 %v2277, 7
    %v2279 = vsub.s32 %v2276, %v2278
    %v2280 = vrot.slane %v2266, %v2279
    %v2281 = vcombine.low %v2273, %v2280
    %v2283 = vunpack.c.l.s4 1966171168
    %v2284 = vunpack.c.0.s8 %v2283
    %v2285 = vlaneseq
    %v2286 = vshrl.u32 %v2285, 7
    %v2287 = vsub.s32 %v2284, %v2286
    %v2288 = vrot.slane %v2281, %v2287
    %v2290 = vmul.f32 %v2252, %v2288
    %s2291 = scalar_lea.vmem [#allocation7], 4
    %v2292 = vld [vmem:[%s2291] sm:$0xf]
    %v2294 = vlaneseq
    %v2295 = vshrl.u32 %v2294, 7
    %v2296 = vsub.s32 0, %v2295
    %v2297 = vrot.slane %v2290, %v2296
    %v2298 = vlaneseq
    %v2299 = vshrl.u32 %v2298, 7
    %v2300 = vsub.s32 1, %v2299
    %v2301 = vrot.slane %v2290, %v2300
    %v2302 = vlaneseq
    %v2303 = vshrl.u32 %v2302, 7
    %v2304 = vsub.s32 2, %v2303
    %v2305 = vrot.slane %v2290, %v2304
    %v2306 = vlaneseq
    %v2307 = vshrl.u32 %v2306, 7
    %v2308 = vsub.s32 3, %v2307
    %v2309 = vrot.slane %v2290, %v2308
    %v2314 = vmul.f32 %v2203, %v2297
    %v2315 = vmul.f32 %v2204, %v2301
    %v2316 = vmul.f32 %v2205, %v2305
    %v2317 = vmul.f32 %v2206, %v2309
    %v2322 = vcombine.low %v2314, %v2315
    %v2323 = vcombine.low %v2316, %v2317
    %v2325 = vunpack.c.l.s4 1966171168
    %v2326 = vunpack.c.0.s8 %v2325
    %v2327 = vlaneseq
    %v2328 = vshrl.u32 %v2327, 7
    %v2329 = vsub.s32 %v2326, %v2328
    %v2330 = vrot.slane %v2322, %v2329
    %v2332 = vunpack.c.l.s4 1966171168
    %v2333 = vunpack.c.0.s8 %v2332
    %v2334 = vlaneseq
    %v2335 = vshrl.u32 %v2334, 7
    %v2336 = vsub.s32 %v2333, %v2335
    %v2337 = vrot.slane %v2323, %v2336
    %v2338 = vcombine.low %v2330, %v2337
    %v2340 = vunpack.c.l.s4 1966171168
    %v2341 = vunpack.c.0.s8 %v2340
    %v2342 = vlaneseq
    %v2343 = vshrl.u32 %v2342, 7
    %v2344 = vsub.s32 %v2341, %v2343
    %v2345 = vrot.slane %v2338, %v2344
    %v2347 = vsub.f32 %v2292, %v2345
    %v2348 = vmul.f32 %v2091, %v2297
    %v2349 = vmul.f32 %v2093, %v2301
    %v2350 = vmul.f32 %v2173, %v2305
    %v2351 = vmul.f32 %v2175, %v2309
    %v2353 = vlaneseq
    %v2354 = vshrl.u32 %v2353, 7
    %v2355 = vsub.s32 0, %v2354
    %v2356 = vrot.slane %v2347, %v2355
    %v2357 = vlaneseq
    %v2358 = vshrl.u32 %v2357, 7
    %v2359 = vsub.s32 1, %v2358
    %v2360 = vrot.slane %v2347, %v2359
    %v2361 = vlaneseq
    %v2362 = vshrl.u32 %v2361, 7
    %v2363 = vsub.s32 2, %v2362
    %v2364 = vrot.slane %v2347, %v2363
    %v2365 = vlaneseq
    %v2366 = vshrl.u32 %v2365, 7
    %v2367 = vsub.s32 3, %v2366
    %v2368 = vrot.slane %v2347, %v2367
    %v2373 = vadd.f32 %v2348, %v2356
    %v2374 = vadd.f32 %v2349, %v2360
    %v2375 = vadd.f32 %v2350, %v2364
    %v2376 = vadd.f32 %v2351, %v2368
    %v2377 = vmax.f32 %v2373, 0.0
    %v2378 = vmax.f32 %v2374, 0.0
    %v2379 = vmax.f32 %v2375, 0.0
    %v2380 = vmax.f32 %v2376, 0.0
    %v2381 = vpack.c.bf16 %v2377, %v2377
    %v2382 = vpack.c.bf16 %v2378, %v2378
    %v2383 = vpack.c.bf16 %v2379, %v2379
    %v2384 = vpack.c.bf16 %v2380, %v2380
    %s2385 = scalar_lea.vmem [#allocation4], 2048
    %v2386 = vld [vmem:[%s2385] sm:$0xff]
    %v2387 = vld [vmem:[%s2385 + $0x8] sm:$0xff]
    %v2388 = vld [vmem:[%s2385 + $0x10] sm:$0xff]
    %v2389 = vld [vmem:[%s2385 + $0x18] sm:$0xff]
    %v2390 = vld [vmem:[%s2385 + $0x20] sm:$0xff]
    %v2391 = vld [vmem:[%s2385 + $0x28] sm:$0xff]
    %v2392 = vld [vmem:[%s2385 + $0x30] sm:$0xff]
    %v2393 = vld [vmem:[%s2385 + $0x38] sm:$0xff]
    %v2394 = vld [vmem:[%s2385 + $0x40] sm:$0xff]
    %v2395 = vld [vmem:[%s2385 + $0x48] sm:$0xff]
    %v2396 = vld [vmem:[%s2385 + $0x50] sm:$0xff]
    %v2397 = vld [vmem:[%s2385 + $0x58] sm:$0xff]
    %v2398 = vld [vmem:[%s2385 + $0x60] sm:$0xff]
    %v2399 = vld [vmem:[%s2385 + $0x68] sm:$0xff]
    %v2400 = vld [vmem:[%s2385 + $0x70] sm:$0xff]
    %v2401 = vld [vmem:[%s2385 + $0x78] sm:$0xff]
    %v2402 = vld [vmem:[%s2385 + $0x80] sm:$0xff]
    %v2403 = vld [vmem:[%s2385 + $0x88] sm:$0xff]
    %v2404 = vld [vmem:[%s2385 + $0x90] sm:$0xff]
    %v2405 = vld [vmem:[%s2385 + $0x98] sm:$0xff]
    %v2406 = vld [vmem:[%s2385 + $0xa0] sm:$0xff]
    %v2407 = vld [vmem:[%s2385 + $0xa8] sm:$0xff]
    %v2408 = vld [vmem:[%s2385 + $0xb0] sm:$0xff]
    %v2409 = vld [vmem:[%s2385 + $0xb8] sm:$0xff]
    %v2410 = vld [vmem:[%s2385 + $0xc0] sm:$0xff]
    %v2411 = vld [vmem:[%s2385 + $0xc8] sm:$0xff]
    %v2412 = vld [vmem:[%s2385 + $0xd0] sm:$0xff]
    %v2413 = vld [vmem:[%s2385 + $0xd8] sm:$0xff]
    %v2414 = vld [vmem:[%s2385 + $0xe0] sm:$0xff]
    %v2415 = vld [vmem:[%s2385 + $0xe8] sm:$0xff]
    %v2416 = vld [vmem:[%s2385 + $0xf0] sm:$0xff]
    %v2417 = vld [vmem:[%s2385 + $0xf8] sm:$0xff]
    %v2418 = vld [vmem:[%s2385 + $0x100] sm:$0xff]
    %v2419 = vld [vmem:[%s2385 + $0x108] sm:$0xff]
    %v2420 = vld [vmem:[%s2385 + $0x110] sm:$0xff]
    %v2421 = vld [vmem:[%s2385 + $0x118] sm:$0xff]
    %v2422 = vld [vmem:[%s2385 + $0x120] sm:$0xff]
    %v2423 = vld [vmem:[%s2385 + $0x128] sm:$0xff]
    %v2424 = vld [vmem:[%s2385 + $0x130] sm:$0xff]
    %v2425 = vld [vmem:[%s2385 + $0x138] sm:$0xff]
    %v2426 = vld [vmem:[%s2385 + $0x140] sm:$0xff]
    %v2427 = vld [vmem:[%s2385 + $0x148] sm:$0xff]
    %v2428 = vld [vmem:[%s2385 + $0x150] sm:$0xff]
    %v2429 = vld [vmem:[%s2385 + $0x158] sm:$0xff]
    %v2430 = vld [vmem:[%s2385 + $0x160] sm:$0xff]
    %v2431 = vld [vmem:[%s2385 + $0x168] sm:$0xff]
    %v2432 = vld [vmem:[%s2385 + $0x170] sm:$0xff]
    %v2433 = vld [vmem:[%s2385 + $0x178] sm:$0xff]
    %v2434 = vld [vmem:[%s2385 + $0x180] sm:$0xff]
    %v2435 = vld [vmem:[%s2385 + $0x188] sm:$0xff]
    %v2436 = vld [vmem:[%s2385 + $0x190] sm:$0xff]
    %v2437 = vld [vmem:[%s2385 + $0x198] sm:$0xff]
    %v2438 = vld [vmem:[%s2385 + $0x1a0] sm:$0xff]
    %v2439 = vld [vmem:[%s2385 + $0x1a8] sm:$0xff]
    %v2440 = vld [vmem:[%s2385 + $0x1b0] sm:$0xff]
    %v2441 = vld [vmem:[%s2385 + $0x1b8] sm:$0xff]
    %v2442 = vld [vmem:[%s2385 + $0x1c0] sm:$0xff]
    %v2443 = vld [vmem:[%s2385 + $0x1c8] sm:$0xff]
    %v2444 = vld [vmem:[%s2385 + $0x1d0] sm:$0xff]
    %v2445 = vld [vmem:[%s2385 + $0x1d8] sm:$0xff]
    %v2446 = vld [vmem:[%s2385 + $0x1e0] sm:$0xff]
    %v2447 = vld [vmem:[%s2385 + $0x1e8] sm:$0xff]
    %v2448 = vld [vmem:[%s2385 + $0x1f0] sm:$0xff]
    %v2449 = vld [vmem:[%s2385 + $0x1f8] sm:$0xff]
    %v2450 = vld [vmem:[%s2385 + $0x200] sm:$0xff]
    %v2451 = vld [vmem:[%s2385 + $0x208] sm:$0xff]
    %v2452 = vld [vmem:[%s2385 + $0x210] sm:$0xff]
    %v2453 = vld [vmem:[%s2385 + $0x218] sm:$0xff]
    %v2454 = vld [vmem:[%s2385 + $0x220] sm:$0xff]
    %v2455 = vld [vmem:[%s2385 + $0x228] sm:$0xff]
    %v2456 = vld [vmem:[%s2385 + $0x230] sm:$0xff]
    %v2457 = vld [vmem:[%s2385 + $0x238] sm:$0xff]
    %v2458 = vld [vmem:[%s2385 + $0x240] sm:$0xff]
    %v2459 = vld [vmem:[%s2385 + $0x248] sm:$0xff]
    %v2460 = vld [vmem:[%s2385 + $0x250] sm:$0xff]
    %v2461 = vld [vmem:[%s2385 + $0x258] sm:$0xff]
    %v2462 = vld [vmem:[%s2385 + $0x260] sm:$0xff]
    %v2463 = vld [vmem:[%s2385 + $0x268] sm:$0xff]
    %v2464 = vld [vmem:[%s2385 + $0x270] sm:$0xff]
    %v2465 = vld [vmem:[%s2385 + $0x278] sm:$0xff]
    %v2466 = vld [vmem:[%s2385 + $0x280] sm:$0xff]
    %v2467 = vld [vmem:[%s2385 + $0x288] sm:$0xff]
    %v2468 = vld [vmem:[%s2385 + $0x290] sm:$0xff]
    %v2469 = vld [vmem:[%s2385 + $0x298] sm:$0xff]
    %v2470 = vld [vmem:[%s2385 + $0x2a0] sm:$0xff]
    %v2471 = vld [vmem:[%s2385 + $0x2a8] sm:$0xff]
    %v2472 = vld [vmem:[%s2385 + $0x2b0] sm:$0xff]
    %v2473 = vld [vmem:[%s2385 + $0x2b8] sm:$0xff]
    %v2474 = vld [vmem:[%s2385 + $0x2c0] sm:$0xff]
    %v2475 = vld [vmem:[%s2385 + $0x2c8] sm:$0xff]
    %v2476 = vld [vmem:[%s2385 + $0x2d0] sm:$0xff]
    %v2477 = vld [vmem:[%s2385 + $0x2d8] sm:$0xff]
    %v2478 = vld [vmem:[%s2385 + $0x2e0] sm:$0xff]
    %v2479 = vld [vmem:[%s2385 + $0x2e8] sm:$0xff]
    %v2480 = vld [vmem:[%s2385 + $0x2f0] sm:$0xff]
    %v2481 = vld [vmem:[%s2385 + $0x2f8] sm:$0xff]
    %v2482 = vld [vmem:[%s2385 + $0x300] sm:$0xff]
    %v2483 = vld [vmem:[%s2385 + $0x308] sm:$0xff]
    %v2484 = vld [vmem:[%s2385 + $0x310] sm:$0xff]
    %v2485 = vld [vmem:[%s2385 + $0x318] sm:$0xff]
    %v2486 = vld [vmem:[%s2385 + $0x320] sm:$0xff]
    %v2487 = vld [vmem:[%s2385 + $0x328] sm:$0xff]
    %v2488 = vld [vmem:[%s2385 + $0x330] sm:$0xff]
    %v2489 = vld [vmem:[%s2385 + $0x338] sm:$0xff]
    %v2490 = vld [vmem:[%s2385 + $0x340] sm:$0xff]
    %v2491 = vld [vmem:[%s2385 + $0x348] sm:$0xff]
    %v2492 = vld [vmem:[%s2385 + $0x350] sm:$0xff]
    %v2493 = vld [vmem:[%s2385 + $0x358] sm:$0xff]
    %v2494 = vld [vmem:[%s2385 + $0x360] sm:$0xff]
    %v2495 = vld [vmem:[%s2385 + $0x368] sm:$0xff]
    %v2496 = vld [vmem:[%s2385 + $0x370] sm:$0xff]
    %v2497 = vld [vmem:[%s2385 + $0x378] sm:$0xff]
    %v2498 = vld [vmem:[%s2385 + $0x380] sm:$0xff]
    %v2499 = vld [vmem:[%s2385 + $0x388] sm:$0xff]
    %v2500 = vld [vmem:[%s2385 + $0x390] sm:$0xff]
    %v2501 = vld [vmem:[%s2385 + $0x398] sm:$0xff]
    %v2502 = vld [vmem:[%s2385 + $0x3a0] sm:$0xff]
    %v2503 = vld [vmem:[%s2385 + $0x3a8] sm:$0xff]
    %v2504 = vld [vmem:[%s2385 + $0x3b0] sm:$0xff]
    %v2505 = vld [vmem:[%s2385 + $0x3b8] sm:$0xff]
    %v2506 = vld [vmem:[%s2385 + $0x3c0] sm:$0xff]
    %v2507 = vld [vmem:[%s2385 + $0x3c8] sm:$0xff]
    %v2508 = vld [vmem:[%s2385 + $0x3d0] sm:$0xff]
    %v2509 = vld [vmem:[%s2385 + $0x3d8] sm:$0xff]
    %v2510 = vld [vmem:[%s2385 + $0x3e0] sm:$0xff]
    %v2511 = vld [vmem:[%s2385 + $0x3e8] sm:$0xff]
    %v2512 = vld [vmem:[%s2385 + $0x3f0] sm:$0xff]
    %v2513 = vld [vmem:[%s2385 + $0x3f8] sm:$0xff]
    %v2642 = vunpack.c.l.b16 %v2386
    %v2643 = vunpack.c.h.b16 %v2386
    %v2644 = vunpack.c.l.b16 %v2387
    %v2645 = vunpack.c.h.b16 %v2387
    %v2646 = vunpack.c.l.b16 %v2388
    %v2647 = vunpack.c.h.b16 %v2388
    %v2648 = vunpack.c.l.b16 %v2389
    %v2649 = vunpack.c.h.b16 %v2389
    %v2650 = vunpack.c.l.b16 %v2390
    %v2651 = vunpack.c.h.b16 %v2390
    %v2652 = vunpack.c.l.b16 %v2391
    %v2653 = vunpack.c.h.b16 %v2391
    %v2654 = vunpack.c.l.b16 %v2392
    %v2655 = vunpack.c.h.b16 %v2392
    %v2656 = vunpack.c.l.b16 %v2393
    %v2657 = vunpack.c.h.b16 %v2393
    %v2658 = vunpack.c.l.b16 %v2394
    %v2659 = vunpack.c.h.b16 %v2394
    %v2660 = vunpack.c.l.b16 %v2395
    %v2661 = vunpack.c.h.b16 %v2395
    %v2662 = vunpack.c.l.b16 %v2396
    %v2663 = vunpack.c.h.b16 %v2396
    %v2664 = vunpack.c.l.b16 %v2397
    %v2665 = vunpack.c.h.b16 %v2397
    %v2666 = vunpack.c.l.b16 %v2398
    %v2667 = vunpack.c.h.b16 %v2398
    %v2668 = vunpack.c.l.b16 %v2399
    %v2669 = vunpack.c.h.b16 %v2399
    %v2670 = vunpack.c.l.b16 %v2400
    %v2671 = vunpack.c.h.b16 %v2400
    %v2672 = vunpack.c.l.b16 %v2401
    %v2673 = vunpack.c.h.b16 %v2401
    %v2674 = vunpack.c.l.b16 %v2402
    %v2675 = vunpack.c.h.b16 %v2402
    %v2676 = vunpack.c.l.b16 %v2403
    %v2677 = vunpack.c.h.b16 %v2403
    %v2678 = vunpack.c.l.b16 %v2404
    %v2679 = vunpack.c.h.b16 %v2404
    %v2680 = vunpack.c.l.b16 %v2405
    %v2681 = vunpack.c.h.b16 %v2405
    %v2682 = vunpack.c.l.b16 %v2406
    %v2683 = vunpack.c.h.b16 %v2406
    %v2684 = vunpack.c.l.b16 %v2407
    %v2685 = vunpack.c.h.b16 %v2407
    %v2686 = vunpack.c.l.b16 %v2408
    %v2687 = vunpack.c.h.b16 %v2408
    %v2688 = vunpack.c.l.b16 %v2409
    %v2689 = vunpack.c.h.b16 %v2409
    %v2690 = vunpack.c.l.b16 %v2410
    %v2691 = vunpack.c.h.b16 %v2410
    %v2692 = vunpack.c.l.b16 %v2411
    %v2693 = vunpack.c.h.b16 %v2411
    %v2694 = vunpack.c.l.b16 %v2412
    %v2695 = vunpack.c.h.b16 %v2412
    %v2696 = vunpack.c.l.b16 %v2413
    %v2697 = vunpack.c.h.b16 %v2413
    %v2698 = vunpack.c.l.b16 %v2414
    %v2699 = vunpack.c.h.b16 %v2414
    %v2700 = vunpack.c.l.b16 %v2415
    %v2701 = vunpack.c.h.b16 %v2415
    %v2702 = vunpack.c.l.b16 %v2416
    %v2703 = vunpack.c.h.b16 %v2416
    %v2704 = vunpack.c.l.b16 %v2417
    %v2705 = vunpack.c.h.b16 %v2417
    %v2706 = vunpack.c.l.b16 %v2418
    %v2707 = vunpack.c.h.b16 %v2418
    %v2708 = vunpack.c.l.b16 %v2419
    %v2709 = vunpack.c.h.b16 %v2419
    %v2710 = vunpack.c.l.b16 %v2420
    %v2711 = vunpack.c.h.b16 %v2420
    %v2712 = vunpack.c.l.b16 %v2421
    %v2713 = vunpack.c.h.b16 %v2421
    %v2714 = vunpack.c.l.b16 %v2422
    %v2715 = vunpack.c.h.b16 %v2422
    %v2716 = vunpack.c.l.b16 %v2423
    %v2717 = vunpack.c.h.b16 %v2423
    %v2718 = vunpack.c.l.b16 %v2424
    %v2719 = vunpack.c.h.b16 %v2424
    %v2720 = vunpack.c.l.b16 %v2425
    %v2721 = vunpack.c.h.b16 %v2425
    %v2722 = vunpack.c.l.b16 %v2426
    %v2723 = vunpack.c.h.b16 %v2426
    %v2724 = vunpack.c.l.b16 %v2427
    %v2725 = vunpack.c.h.b16 %v2427
    %v2726 = vunpack.c.l.b16 %v2428
    %v2727 = vunpack.c.h.b16 %v2428
    %v2728 = vunpack.c.l.b16 %v2429
    %v2729 = vunpack.c.h.b16 %v2429
    %v2730 = vunpack.c.l.b16 %v2430
    %v2731 = vunpack.c.h.b16 %v2430
    %v2732 = vunpack.c.l.b16 %v2431
    %v2733 = vunpack.c.h.b16 %v2431
    %v2734 = vunpack.c.l.b16 %v2432
    %v2735 = vunpack.c.h.b16 %v2432
    %v2736 = vunpack.c.l.b16 %v2433
    %v2737 = vunpack.c.h.b16 %v2433
    %v2738 = vunpack.c.l.b16 %v2434
    %v2739 = vunpack.c.h.b16 %v2434
    %v2740 = vunpack.c.l.b16 %v2435
    %v2741 = vunpack.c.h.b16 %v2435
    %v2742 = vunpack.c.l.b16 %v2436
    %v2743 = vunpack.c.h.b16 %v2436
    %v2744 = vunpack.c.l.b16 %v2437
    %v2745 = vunpack.c.h.b16 %v2437
    %v2746 = vunpack.c.l.b16 %v2438
    %v2747 = vunpack.c.h.b16 %v2438
    %v2748 = vunpack.c.l.b16 %v2439
    %v2749 = vunpack.c.h.b16 %v2439
    %v2750 = vunpack.c.l.b16 %v2440
    %v2751 = vunpack.c.h.b16 %v2440
    %v2752 = vunpack.c.l.b16 %v2441
    %v2753 = vunpack.c.h.b16 %v2441
    %v2754 = vunpack.c.l.b16 %v2442
    %v2755 = vunpack.c.h.b16 %v2442
    %v2756 = vunpack.c.l.b16 %v2443
    %v2757 = vunpack.c.h.b16 %v2443
    %v2758 = vunpack.c.l.b16 %v2444
    %v2759 = vunpack.c.h.b16 %v2444
    %v2760 = vunpack.c.l.b16 %v2445
    %v2761 = vunpack.c.h.b16 %v2445
    %v2762 = vunpack.c.l.b16 %v2446
    %v2763 = vunpack.c.h.b16 %v2446
    %v2764 = vunpack.c.l.b16 %v2447
    %v2765 = vunpack.c.h.b16 %v2447
    %v2766 = vunpack.c.l.b16 %v2448
    %v2767 = vunpack.c.h.b16 %v2448
    %v2768 = vunpack.c.l.b16 %v2449
    %v2769 = vunpack.c.h.b16 %v2449
    %v2770 = vunpack.c.l.b16 %v2450
    %v2771 = vunpack.c.h.b16 %v2450
    %v2772 = vunpack.c.l.b16 %v2451
    %v2773 = vunpack.c.h.b16 %v2451
    %v2774 = vunpack.c.l.b16 %v2452
    %v2775 = vunpack.c.h.b16 %v2452
    %v2776 = vunpack.c.l.b16 %v2453
    %v2777 = vunpack.c.h.b16 %v2453
    %v2778 = vunpack.c.l.b16 %v2454
    %v2779 = vunpack.c.h.b16 %v2454
    %v2780 = vunpack.c.l.b16 %v2455
    %v2781 = vunpack.c.h.b16 %v2455
    %v2782 = vunpack.c.l.b16 %v2456
    %v2783 = vunpack.c.h.b16 %v2456
    %v2784 = vunpack.c.l.b16 %v2457
    %v2785 = vunpack.c.h.b16 %v2457
    %v2786 = vunpack.c.l.b16 %v2458
    %v2787 = vunpack.c.h.b16 %v2458
    %v2788 = vunpack.c.l.b16 %v2459
    %v2789 = vunpack.c.h.b16 %v2459
    %v2790 = vunpack.c.l.b16 %v2460
    %v2791 = vunpack.c.h.b16 %v2460
    %v2792 = vunpack.c.l.b16 %v2461
    %v2793 = vunpack.c.h.b16 %v2461
    %v2794 = vunpack.c.l.b16 %v2462
    %v2795 = vunpack.c.h.b16 %v2462
    %v2796 = vunpack.c.l.b16 %v2463
    %v2797 = vunpack.c.h.b16 %v2463
    %v2798 = vunpack.c.l.b16 %v2464
    %v2799 = vunpack.c.h.b16 %v2464
    %v2800 = vunpack.c.l.b16 %v2465
    %v2801 = vunpack.c.h.b16 %v2465
    %v2802 = vunpack.c.l.b16 %v2466
    %v2803 = vunpack.c.h.b16 %v2466
    %v2804 = vunpack.c.l.b16 %v2467
    %v2805 = vunpack.c.h.b16 %v2467
    %v2806 = vunpack.c.l.b16 %v2468
    %v2807 = vunpack.c.h.b16 %v2468
    %v2808 = vunpack.c.l.b16 %v2469
    %v2809 = vunpack.c.h.b16 %v2469
    %v2810 = vunpack.c.l.b16 %v2470
    %v2811 = vunpack.c.h.b16 %v2470
    %v2812 = vunpack.c.l.b16 %v2471
    %v2813 = vunpack.c.h.b16 %v2471
    %v2814 = vunpack.c.l.b16 %v2472
    %v2815 = vunpack.c.h.b16 %v2472
    %v2816 = vunpack.c.l.b16 %v2473
    %v2817 = vunpack.c.h.b16 %v2473
    %v2818 = vunpack.c.l.b16 %v2474
    %v2819 = vunpack.c.h.b16 %v2474
    %v2820 = vunpack.c.l.b16 %v2475
    %v2821 = vunpack.c.h.b16 %v2475
    %v2822 = vunpack.c.l.b16 %v2476
    %v2823 = vunpack.c.h.b16 %v2476
    %v2824 = vunpack.c.l.b16 %v2477
    %v2825 = vunpack.c.h.b16 %v2477
    %v2826 = vunpack.c.l.b16 %v2478
    %v2827 = vunpack.c.h.b16 %v2478
    %v2828 = vunpack.c.l.b16 %v2479
    %v2829 = vunpack.c.h.b16 %v2479
    %v2830 = vunpack.c.l.b16 %v2480
    %v2831 = vunpack.c.h.b16 %v2480
    %v2832 = vunpack.c.l.b16 %v2481
    %v2833 = vunpack.c.h.b16 %v2481
    %v2834 = vunpack.c.l.b16 %v2482
    %v2835 = vunpack.c.h.b16 %v2482
    %v2836 = vunpack.c.l.b16 %v2483
    %v2837 = vunpack.c.h.b16 %v2483
    %v2838 = vunpack.c.l.b16 %v2484
    %v2839 = vunpack.c.h.b16 %v2484
    %v2840 = vunpack.c.l.b16 %v2485
    %v2841 = vunpack.c.h.b16 %v2485
    %v2842 = vunpack.c.l.b16 %v2486
    %v2843 = vunpack.c.h.b16 %v2486
    %v2844 = vunpack.c.l.b16 %v2487
    %v2845 = vunpack.c.h.b16 %v2487
    %v2846 = vunpack.c.l.b16 %v2488
    %v2847 = vunpack.c.h.b16 %v2488
    %v2848 = vunpack.c.l.b16 %v2489
    %v2849 = vunpack.c.h.b16 %v2489
    %v2850 = vunpack.c.l.b16 %v2490
    %v2851 = vunpack.c.h.b16 %v2490
    %v2852 = vunpack.c.l.b16 %v2491
    %v2853 = vunpack.c.h.b16 %v2491
    %v2854 = vunpack.c.l.b16 %v2492
    %v2855 = vunpack.c.h.b16 %v2492
    %v2856 = vunpack.c.l.b16 %v2493
    %v2857 = vunpack.c.h.b16 %v2493
    %v2858 = vunpack.c.l.b16 %v2494
    %v2859 = vunpack.c.h.b16 %v2494
    %v2860 = vunpack.c.l.b16 %v2495
    %v2861 = vunpack.c.h.b16 %v2495
    %v2862 = vunpack.c.l.b16 %v2496
    %v2863 = vunpack.c.h.b16 %v2496
    %v2864 = vunpack.c.l.b16 %v2497
    %v2865 = vunpack.c.h.b16 %v2497
    %v2866 = vunpack.c.l.b16 %v2498
    %v2867 = vunpack.c.h.b16 %v2498
    %v2868 = vunpack.c.l.b16 %v2499
    %v2869 = vunpack.c.h.b16 %v2499
    %v2870 = vunpack.c.l.b16 %v2500
    %v2871 = vunpack.c.h.b16 %v2500
    %v2872 = vunpack.c.l.b16 %v2501
    %v2873 = vunpack.c.h.b16 %v2501
    %v2874 = vunpack.c.l.b16 %v2502
    %v2875 = vunpack.c.h.b16 %v2502
    %v2876 = vunpack.c.l.b16 %v2503
    %v2877 = vunpack.c.h.b16 %v2503
    %v2878 = vunpack.c.l.b16 %v2504
    %v2879 = vunpack.c.h.b16 %v2504
    %v2880 = vunpack.c.l.b16 %v2505
    %v2881 = vunpack.c.h.b16 %v2505
    %v2882 = vunpack.c.l.b16 %v2506
    %v2883 = vunpack.c.h.b16 %v2506
    %v2884 = vunpack.c.l.b16 %v2507
    %v2885 = vunpack.c.h.b16 %v2507
    %v2886 = vunpack.c.l.b16 %v2508
    %v2887 = vunpack.c.h.b16 %v2508
    %v2888 = vunpack.c.l.b16 %v2509
    %v2889 = vunpack.c.h.b16 %v2509
    %v2890 = vunpack.c.l.b16 %v2510
    %v2891 = vunpack.c.h.b16 %v2510
    %v2892 = vunpack.c.l.b16 %v2511
    %v2893 = vunpack.c.h.b16 %v2511
    %v2894 = vunpack.c.l.b16 %v2512
    %v2895 = vunpack.c.h.b16 %v2512
    %v2896 = vunpack.c.l.b16 %v2513
    %v2897 = vunpack.c.h.b16 %v2513
    %v2898 = vpack.c.b16 %v2646, %v2642
    %v2899 = vpack.c.b16 %v2647, %v2643
    %v2900 = vpack.c.b16 %v2648, %v2644
    %v2901 = vpack.c.b16 %v2649, %v2645
    %v2902 = vpack.c.b16 %v2654, %v2650
    %v2903 = vpack.c.b16 %v2655, %v2651
    %v2904 = vpack.c.b16 %v2656, %v2652
    %v2905 = vpack.c.b16 %v2657, %v2653
    %v2906 = vpack.c.b16 %v2662, %v2658
    %v2907 = vpack.c.b16 %v2663, %v2659
    %v2908 = vpack.c.b16 %v2664, %v2660
    %v2909 = vpack.c.b16 %v2665, %v2661
    %v2910 = vpack.c.b16 %v2670, %v2666
    %v2911 = vpack.c.b16 %v2671, %v2667
    %v2912 = vpack.c.b16 %v2672, %v2668
    %v2913 = vpack.c.b16 %v2673, %v2669
    %v2914 = vpack.c.b16 %v2678, %v2674
    %v2915 = vpack.c.b16 %v2679, %v2675
    %v2916 = vpack.c.b16 %v2680, %v2676
    %v2917 = vpack.c.b16 %v2681, %v2677
    %v2918 = vpack.c.b16 %v2686, %v2682
    %v2919 = vpack.c.b16 %v2687, %v2683
    %v2920 = vpack.c.b16 %v2688, %v2684
    %v2921 = vpack.c.b16 %v2689, %v2685
    %v2922 = vpack.c.b16 %v2694, %v2690
    %v2923 = vpack.c.b16 %v2695, %v2691
    %v2924 = vpack.c.b16 %v2696, %v2692
    %v2925 = vpack.c.b16 %v2697, %v2693
    %v2926 = vpack.c.b16 %v2702, %v2698
    %v2927 = vpack.c.b16 %v2703, %v2699
    %v2928 = vpack.c.b16 %v2704, %v2700
    %v2929 = vpack.c.b16 %v2705, %v2701
    %v2930 = vpack.c.b16 %v2710, %v2706
    %v2931 = vpack.c.b16 %v2711, %v2707
    %v2932 = vpack.c.b16 %v2712, %v2708
    %v2933 = vpack.c.b16 %v2713, %v2709
    %v2934 = vpack.c.b16 %v2718, %v2714
    %v2935 = vpack.c.b16 %v2719, %v2715
    %v2936 = vpack.c.b16 %v2720, %v2716
    %v2937 = vpack.c.b16 %v2721, %v2717
    %v2938 = vpack.c.b16 %v2726, %v2722
    %v2939 = vpack.c.b16 %v2727, %v2723
    %v2940 = vpack.c.b16 %v2728, %v2724
    %v2941 = vpack.c.b16 %v2729, %v2725
    %v2942 = vpack.c.b16 %v2734, %v2730
    %v2943 = vpack.c.b16 %v2735, %v2731
    %v2944 = vpack.c.b16 %v2736, %v2732
    %v2945 = vpack.c.b16 %v2737, %v2733
    %v2946 = vpack.c.b16 %v2742, %v2738
    %v2947 = vpack.c.b16 %v2743, %v2739
    %v2948 = vpack.c.b16 %v2744, %v2740
    %v2949 = vpack.c.b16 %v2745, %v2741
    %v2950 = vpack.c.b16 %v2750, %v2746
    %v2951 = vpack.c.b16 %v2751, %v2747
    %v2952 = vpack.c.b16 %v2752, %v2748
    %v2953 = vpack.c.b16 %v2753, %v2749
    %v2954 = vpack.c.b16 %v2758, %v2754
    %v2955 = vpack.c.b16 %v2759, %v2755
    %v2956 = vpack.c.b16 %v2760, %v2756
    %v2957 = vpack.c.b16 %v2761, %v2757
    %v2958 = vpack.c.b16 %v2766, %v2762
    %v2959 = vpack.c.b16 %v2767, %v2763
    %v2960 = vpack.c.b16 %v2768, %v2764
    %v2961 = vpack.c.b16 %v2769, %v2765
    %v2962 = vpack.c.b16 %v2774, %v2770
    %v2963 = vpack.c.b16 %v2775, %v2771
    %v2964 = vpack.c.b16 %v2776, %v2772
    %v2965 = vpack.c.b16 %v2777, %v2773
    %v2966 = vpack.c.b16 %v2782, %v2778
    %v2967 = vpack.c.b16 %v2783, %v2779
    %v2968 = vpack.c.b16 %v2784, %v2780
    %v2969 = vpack.c.b16 %v2785, %v2781
    %v2970 = vpack.c.b16 %v2790, %v2786
    %v2971 = vpack.c.b16 %v2791, %v2787
    %v2972 = vpack.c.b16 %v2792, %v2788
    %v2973 = vpack.c.b16 %v2793, %v2789
    %v2974 = vpack.c.b16 %v2798, %v2794
    %v2975 = vpack.c.b16 %v2799, %v2795
    %v2976 = vpack.c.b16 %v2800, %v2796
    %v2977 = vpack.c.b16 %v2801, %v2797
    %v2978 = vpack.c.b16 %v2806, %v2802
    %v2979 = vpack.c.b16 %v2807, %v2803
    %v2980 = vpack.c.b16 %v2808, %v2804
    %v2981 = vpack.c.b16 %v2809, %v2805
    %v2982 = vpack.c.b16 %v2814, %v2810
    %v2983 = vpack.c.b16 %v2815, %v2811
    %v2984 = vpack.c.b16 %v2816, %v2812
    %v2985 = vpack.c.b16 %v2817, %v2813
    %v2986 = vpack.c.b16 %v2822, %v2818
    %v2987 = vpack.c.b16 %v2823, %v2819
    %v2988 = vpack.c.b16 %v2824, %v2820
    %v2989 = vpack.c.b16 %v2825, %v2821
    %v2990 = vpack.c.b16 %v2830, %v2826
    %v2991 = vpack.c.b16 %v2831, %v2827
    %v2992 = vpack.c.b16 %v2832, %v2828
    %v2993 = vpack.c.b16 %v2833, %v2829
    %v2994 = vpack.c.b16 %v2838, %v2834
    %v2995 = vpack.c.b16 %v2839, %v2835
    %v2996 = vpack.c.b16 %v2840, %v2836
    %v2997 = vpack.c.b16 %v2841, %v2837
    %v2998 = vpack.c.b16 %v2846, %v2842
    %v2999 = vpack.c.b16 %v2847, %v2843
    %v3000 = vpack.c.b16 %v2848, %v2844
    %v3001 = vpack.c.b16 %v2849, %v2845
    %v3002 = vpack.c.b16 %v2854, %v2850
    %v3003 = vpack.c.b16 %v2855, %v2851
    %v3004 = vpack.c.b16 %v2856, %v2852
    %v3005 = vpack.c.b16 %v2857, %v2853
    %v3006 = vpack.c.b16 %v2862, %v2858
    %v3007 = vpack.c.b16 %v2863, %v2859
    %v3008 = vpack.c.b16 %v2864, %v2860
    %v3009 = vpack.c.b16 %v2865, %v2861
    %v3010 = vpack.c.b16 %v2870, %v2866
    %v3011 = vpack.c.b16 %v2871, %v2867
    %v3012 = vpack.c.b16 %v2872, %v2868
    %v3013 = vpack.c.b16 %v2873, %v2869
    %v3014 = vpack.c.b16 %v2878, %v2874
    %v3015 = vpack.c.b16 %v2879, %v2875
    %v3016 = vpack.c.b16 %v2880, %v2876
    %v3017 = vpack.c.b16 %v2881, %v2877
    %v3018 = vpack.c.b16 %v2886, %v2882
    %v3019 = vpack.c.b16 %v2887, %v2883
    %v3020 = vpack.c.b16 %v2888, %v2884
    %v3021 = vpack.c.b16 %v2889, %v2885
    %v3022 = vpack.c.b16 %v2894, %v2890
    %v3023 = vpack.c.b16 %v2895, %v2891
    %v3024 = vpack.c.b16 %v2896, %v2892
    %v3025 = vpack.c.b16 %v2897, %v2893
    %3154 = vmatprep.subr.bf16.mxu0 %v2899
    %3155 = vmatpush1.bf16.msra.mxu0 %v2898
    %3156 = vmatprep.subr.bf16.mxu0 %v2903
    %3157 = vmatpush1.bf16.msra.mxu0 %v2902
    %3158 = vmatprep.subr.bf16.mxu0 %v2907
    %3159 = vmatpush1.bf16.msra.mxu0 %v2906
    %3160 = vmatprep.subr.bf16.mxu0 %v2911
    %3161 = vmatpush1.bf16.msra.mxu0 %v2910
    %3162 = vmatprep.subr.bf16.mxu0 %v2915
    %3163 = vmatpush1.bf16.msra.mxu0 %v2914
    %3164 = vmatprep.subr.bf16.mxu0 %v2919
    %3165 = vmatpush1.bf16.msra.mxu0 %v2918
    %3166 = vmatprep.subr.bf16.mxu0 %v2923
    %3167 = vmatpush1.bf16.msra.mxu0 %v2922
    %3168 = vmatprep.subr.bf16.mxu0 %v2927
    %3169 = vmatpush1.bf16.msra.mxu0 %v2926
    %3170 = vmatprep.subr.bf16.mxu0 %v2931
    %3171 = vmatpush1.bf16.msra.mxu0 %v2930
    %3172 = vmatprep.subr.bf16.mxu0 %v2935
    %3173 = vmatpush1.bf16.msra.mxu0 %v2934
    %3174 = vmatprep.subr.bf16.mxu0 %v2939
    %3175 = vmatpush1.bf16.msra.mxu0 %v2938
    %3176 = vmatprep.subr.bf16.mxu0 %v2943
    %3177 = vmatpush1.bf16.msra.mxu0 %v2942
    %3178 = vmatprep.subr.bf16.mxu0 %v2947
    %3179 = vmatpush1.bf16.msra.mxu0 %v2946
    %3180 = vmatprep.subr.bf16.mxu0 %v2951
    %3181 = vmatpush1.bf16.msra.mxu0 %v2950
    %3182 = vmatprep.subr.bf16.mxu0 %v2955
    %3183 = vmatpush1.bf16.msra.mxu0 %v2954
    %3184 = vmatprep.subr.bf16.mxu0 %v2959
    %3185 = vmatpush1.bf16.msra.mxu0 %v2958
    %3186 = vmatprep.mubr.bf16.mxu0 %v2382
    %3187 = vmatmul.mubr.bf16.gmra.mrb[0].mxu0 %v2381
    %v3188 = vpop.f32.mrb[0].mxu0
    %v3189 = vadd.f32 0.0, %v3188
    %v3190 = vpop.f32.mrb[0].mxu0
    %v3191 = vadd.f32 0.0, %v3190
    %v3192 = vpop.f32.mrb[0].mxu0
    %v3193 = vpop.f32.mrb[0].mxu0
    %3194 = vdwg.mxu0
    %3195 = vmatprep.subr.bf16.mxu0 %v2963
    %3196 = vmatpush1.bf16.msra.mxu0 %v2962
    %3197 = vmatprep.subr.bf16.mxu0 %v2967
    %3198 = vmatpush1.bf16.msra.mxu0 %v2966
    %3199 = vmatprep.subr.bf16.mxu0 %v2971
    %3200 = vmatpush1.bf16.msra.mxu0 %v2970
    %3201 = vmatprep.subr.bf16.mxu0 %v2975
    %3202 = vmatpush1.bf16.msra.mxu0 %v2974
    %3203 = vmatprep.subr.bf16.mxu0 %v2979
    %3204 = vmatpush1.bf16.msra.mxu0 %v2978
    %3205 = vmatprep.subr.bf16.mxu0 %v2983
    %3206 = vmatpush1.bf16.msra.mxu0 %v2982
    %3207 = vmatprep.subr.bf16.mxu0 %v2987
    %3208 = vmatpush1.bf16.msra.mxu0 %v2986
    %3209 = vmatprep.subr.bf16.mxu0 %v2991
    %3210 = vmatpush1.bf16.msra.mxu0 %v2990
    %3211 = vmatprep.subr.bf16.mxu0 %v2995
    %3212 = vmatpush1.bf16.msra.mxu0 %v2994
    %3213 = vmatprep.subr.bf16.mxu0 %v2999
    %3214 = vmatpush1.bf16.msra.mxu0 %v2998
    %3215 = vmatprep.subr.bf16.mxu0 %v3003
    %3216 = vmatpush1.bf16.msra.mxu0 %v3002
    %3217 = vmatprep.subr.bf16.mxu0 %v3007
    %3218 = vmatpush1.bf16.msra.mxu0 %v3006
    %3219 = vmatprep.subr.bf16.mxu0 %v3011
    %3220 = vmatpush1.bf16.msra.mxu0 %v3010
    %3221 = vmatprep.subr.bf16.mxu0 %v3015
    %3222 = vmatpush1.bf16.msra.mxu0 %v3014
    %3223 = vmatprep.subr.bf16.mxu0 %v3019
    %3224 = vmatpush1.bf16.msra.mxu0 %v3018
    %3225 = vmatprep.subr.bf16.mxu0 %v3023
    %3226 = vmatpush1.bf16.msra.mxu0 %v3022
    %3227 = vmatprep.mubr.bf16.mxu0 %v2384
    %3228 = vmatmul.mubr.bf16.gmra.mrb[0].mxu0 %v2383
    %v3229 = vpop.f32.mrb[0].mxu0
    %v3230 = vadd.f32 %v3189, %v3229
    %v3231 = vpop.f32.mrb[0].mxu0
    %v3232 = vadd.f32 %v3191, %v3231
    %v3233 = vpop.f32.mrb[0].mxu0
    %v3234 = vpop.f32.mrb[0].mxu0
    %3235 = vdwg.mxu0
    %3236 = vmatprep.subr.bf16.mxu0 %v2901
    %3237 = vmatpush1.bf16.msra.mxu0 %v2900
    %3238 = vmatprep.subr.bf16.mxu0 %v2905
    %3239 = vmatpush1.bf16.msra.mxu0 %v2904
    %3240 = vmatprep.subr.bf16.mxu0 %v2909
    %3241 = vmatpush1.bf16.msra.mxu0 %v2908
    %3242 = vmatprep.subr.bf16.mxu0 %v2913
    %3243 = vmatpush1.bf16.msra.mxu0 %v2912
    %3244 = vmatprep.subr.bf16.mxu0 %v2917
    %3245 = vmatpush1.bf16.msra.mxu0 %v2916
    %3246 = vmatprep.subr.bf16.mxu0 %v2921
    %3247 = vmatpush1.bf16.msra.mxu0 %v2920
    %3248 = vmatprep.subr.bf16.mxu0 %v2925
    %3249 = vmatpush1.bf16.msra.mxu0 %v2924
    %3250 = vmatprep.subr.bf16.mxu0 %v2929
    %3251 = vmatpush1.bf16.msra.mxu0 %v2928
    %3252 = vmatprep.subr.bf16.mxu0 %v2933
    %3253 = vmatpush1.bf16.msra.mxu0 %v2932
    %3254 = vmatprep.subr.bf16.mxu0 %v2937
    %3255 = vmatpush1.bf16.msra.mxu0 %v2936
    %3256 = vmatprep.subr.bf16.mxu0 %v2941
    %3257 = vmatpush1.bf16.msra.mxu0 %v2940
    %3258 = vmatprep.subr.bf16.mxu0 %v2945
    %3259 = vmatpush1.bf16.msra.mxu0 %v2944
    %3260 = vmatprep.subr.bf16.mxu0 %v2949
    %3261 = vmatpush1.bf16.msra.mxu0 %v2948
    %3262 = vmatprep.subr.bf16.mxu0 %v2953
    %3263 = vmatpush1.bf16.msra.mxu0 %v2952
    %3264 = vmatprep.subr.bf16.mxu0 %v2957
    %3265 = vmatpush1.bf16.msra.mxu0 %v2956
    %3266 = vmatprep.subr.bf16.mxu0 %v2961
    %3267 = vmatpush1.bf16.msra.mxu0 %v2960
    %3268 = vmatprep.mubr.bf16.mxu0 %v2382
    %3269 = vmatmul.mubr.bf16.gmra.mrb[0].mxu0 %v2381
    %v3270 = vpop.f32.mrb[0].mxu0
    %v3271 = vadd.f32 0.0, %v3270
    %v3272 = vpop.f32.mrb[0].mxu0
    %v3273 = vadd.f32 0.0, %v3272
    %v3274 = vpop.f32.mrb[0].mxu0
    %v3275 = vpop.f32.mrb[0].mxu0
    %3276 = vdwg.mxu0
    %3277 = vmatprep.subr.bf16.mxu0 %v2965
    %3278 = vmatpush1.bf16.msra.mxu0 %v2964
    %3279 = vmatprep.subr.bf16.mxu0 %v2969
    %3280 = vmatpush1.bf16.msra.mxu0 %v2968
    %3281 = vmatprep.subr.bf16.mxu0 %v2973
    %3282 = vmatpush1.bf16.msra.mxu0 %v2972
    %3283 = vmatprep.subr.bf16.mxu0 %v2977
    %3284 = vmatpush1.bf16.msra.mxu0 %v2976
    %3285 = vmatprep.subr.bf16.mxu0 %v2981
    %3286 = vmatpush1.bf16.msra.mxu0 %v2980
    %3287 = vmatprep.subr.bf16.mxu0 %v2985
    %3288 = vmatpush1.bf16.msra.mxu0 %v2984
    %3289 = vmatprep.subr.bf16.mxu0 %v2989
    %3290 = vmatpush1.bf16.msra.mxu0 %v2988
    %3291 = vmatprep.subr.bf16.mxu0 %v2993
    %3292 = vmatpush1.bf16.msra.mxu0 %v2992
    %3293 = vmatprep.subr.bf16.mxu0 %v2997
    %3294 = vmatpush1.bf16.msra.mxu0 %v2996
    %3295 = vmatprep.subr.bf16.mxu0 %v3001
    %3296 = vmatpush1.bf16.msra.mxu0 %v3000
    %3297 = vmatprep.subr.bf16.mxu0 %v3005
    %3298 = vmatpush1.bf16.msra.mxu0 %v3004
    %3299 = vmatprep.subr.bf16.mxu0 %v3009
    %3300 = vmatpush1.bf16.msra.mxu0 %v3008
    %3301 = vmatprep.subr.bf16.mxu0 %v3013
    %3302 = vmatpush1.bf16.msra.mxu0 %v3012
    %3303 = vmatprep.subr.bf16.mxu0 %v3017
    %3304 = vmatpush1.bf16.msra.mxu0 %v3016
    %3305 = vmatprep.subr.bf16.mxu0 %v3021
    %3306 = vmatpush1.bf16.msra.mxu0 %v3020
    %3307 = vmatprep.subr.bf16.mxu0 %v3025
    %3308 = vmatpush1.bf16.msra.mxu0 %v3024
    %3309 = vmatprep.mubr.bf16.mxu0 %v2384
    %3310 = vmatmul.mubr.bf16.gmra.mrb[0].mxu0 %v2383
    %v3311 = vpop.f32.mrb[0].mxu0
    %v3312 = vadd.f32 %v3271, %v3311
    %v3313 = vpop.f32.mrb[0].mxu0
    %v3314 = vadd.f32 %v3273, %v3313
    %v3315 = vpop.f32.mrb[0].mxu0
    %v3316 = vpop.f32.mrb[0].mxu0
    %3317 = vdwg.mxu0
    %v3318 = vrot.slane %v3230, 4
    %v3319 = vadd.f32 %v3230, %v3318
    %v3320 = vrot.slane %v3319, 2
    %v3321 = vadd.f32 %v3319, %v3320
    %v3322 = vrot.slane %v3321, 1
    %v3323 = vadd.f32 %v3321, %v3322
    %v3324 = vrot.slane %v3232, 4
    %v3325 = vadd.f32 %v3232, %v3324
    %v3326 = vrot.slane %v3325, 2
    %v3327 = vadd.f32 %v3325, %v3326
    %v3328 = vrot.slane %v3327, 1
    %v3329 = vadd.f32 %v3327, %v3328
    %v3330 = vrot.slane %v3312, 4
    %v3331 = vadd.f32 %v3312, %v3330
    %v3332 = vrot.slane %v3331, 2
    %v3333 = vadd.f32 %v3331, %v3332
    %v3334 = vrot.slane %v3333, 1
    %v3335 = vadd.f32 %v3333, %v3334
    %v3336 = vrot.slane %v3314, 4
    %v3337 = vadd.f32 %v3314, %v3336
    %v3338 = vrot.slane %v3337, 2
    %v3339 = vadd.f32 %v3337, %v3338
    %v3340 = vrot.slane %v3339, 1
    %v3341 = vadd.f32 %v3339, %v3340
    %v3342 = vmul.f32 %v3323, 0.125
    %v3343 = vmul.f32 %v3329, 0.125
    %v3344 = vmul.f32 %v3335, 0.125
    %v3345 = vmul.f32 %v3341, 0.125
    %v3346 = vmul.f32 %v3230, %v3230
    %v3347 = vmul.f32 %v3232, %v3232
    %v3348 = vmul.f32 %v3312, %v3312
    %v3349 = vmul.f32 %v3314, %v3314
    %v3350 = vrot.slane %v3346, 4
    %v3351 = vadd.f32 %v3346, %v3350
    %v3352 = vrot.slane %v3351, 2
    %v3353 = vadd.f32 %v3351, %v3352
    %v3354 = vrot.slane %v3353, 1
    %v3355 = vadd.f32 %v3353, %v3354
    %v3356 = vrot.slane %v3347, 4
    %v3357 = vadd.f32 %v3347, %v3356
    %v3358 = vrot.slane %v3357, 2
    %v3359 = vadd.f32 %v3357, %v3358
    %v3360 = vrot.slane %v3359, 1
    %v3361 = vadd.f32 %v3359, %v3360
    %v3362 = vrot.slane %v3348, 4
    %v3363 = vadd.f32 %v3348, %v3362
    %v3364 = vrot.slane %v3363, 2
    %v3365 = vadd.f32 %v3363, %v3364
    %v3366 = vrot.slane %v3365, 1
    %v3367 = vadd.f32 %v3365, %v3366
    %v3368 = vrot.slane %v3349, 4
    %v3369 = vadd.f32 %v3349, %v3368
    %v3370 = vrot.slane %v3369, 2
    %v3371 = vadd.f32 %v3369, %v3370
    %v3372 = vrot.slane %v3371, 1
    %v3373 = vadd.f32 %v3371, %v3372
    %v3374 = vmul.f32 %v3355, 0.125
    %v3375 = vmul.f32 %v3361, 0.125
    %v3376 = vmul.f32 %v3367, 0.125
    %v3377 = vmul.f32 %v3373, 0.125
    %v3378 = vmul.f32 %v3342, %v3342
    %v3379 = vmul.f32 %v3343, %v3343
    %v3380 = vmul.f32 %v3344, %v3344
    %v3381 = vmul.f32 %v3345, %v3345
    %v3382 = vsub.f32 %v3374, %v3378
    %v3383 = vsub.f32 %v3375, %v3379
    %v3384 = vsub.f32 %v3376, %v3380
    %v3385 = vsub.f32 %v3377, %v3381
    %v3386 = vmax.f32 %v3382, 0.0
    %v3387 = vmax.f32 %v3383, 0.0
    %v3388 = vmax.f32 %v3384, 0.0
    %v3389 = vmax.f32 %v3385, 0.0
    %s3390 = scalar_lea.vmem [#allocation6], 8
    %v3391 = vld [vmem:[%s3390] sm:$0xf]
    %v3392 = vadd.f32 %v3386, 1e-05
    %v3393 = vadd.f32 %v3387, 1e-05
    %v3394 = vadd.f32 %v3388, 1e-05
    %v3395 = vadd.f32 %v3389, 1e-05
    %v3396 = vrsqrt.pop %v3392
    %v3397 = vrsqrt.pop %v3393
    %v3398 = vrsqrt.pop %v3394
    %v3399 = vrsqrt.pop %v3395
    %v3404 = vcombine.low %v3396, %v3397
    %v3405 = vcombine.low %v3398, %v3399
    %v3407 = vunpack.c.l.s4 1966171168
    %v3408 = vunpack.c.0.s8 %v3407
    %v3409 = vlaneseq
    %v3410 = vshrl.u32 %v3409, 7
    %v3411 = vsub.s32 %v3408, %v3410
    %v3412 = vrot.slane %v3404, %v3411
    %v3414 = vunpack.c.l.s4 1966171168
    %v3415 = vunpack.c.0.s8 %v3414
    %v3416 = vlaneseq
    %v3417 = vshrl.u32 %v3416, 7
    %v3418 = vsub.s32 %v3415, %v3417
    %v3419 = vrot.slane %v3405, %v3418
    %v3420 = vcombine.low %v3412, %v3419
    %v3422 = vunpack.c.l.s4 1966171168
    %v3423 = vunpack.c.0.s8 %v3422
    %v3424 = vlaneseq
    %v3425 = vshrl.u32 %v3424, 7
    %v3426 = vsub.s32 %v3423, %v3425
    %v3427 = vrot.slane %v3420, %v3426
    %v3429 = vmul.f32 %v3391, %v3427
    %s3430 = scalar_lea.vmem [#allocation7], 8
    %v3431 = vld [vmem:[%s3430] sm:$0xf]
    %v3433 = vlaneseq
    %v3434 = vshrl.u32 %v3433, 7
    %v3435 = vsub.s32 0, %v3434
    %v3436 = vrot.slane %v3429, %v3435
    %v3437 = vlaneseq
    %v3438 = vshrl.u32 %v3437, 7
    %v3439 = vsub.s32 1, %v3438
    %v3440 = vrot.slane %v3429, %v3439
    %v3441 = vlaneseq
    %v3442 = vshrl.u32 %v3441, 7
    %v3443 = vsub.s32 2, %v3442
    %v3444 = vrot.slane %v3429, %v3443
    %v3445 = vlaneseq
    %v3446 = vshrl.u32 %v3445, 7
    %v3447 = vsub.s32 3, %v3446
    %v3448 = vrot.slane %v3429, %v3447
    %v3453 = vmul.f32 %v3342, %v3436
    %v3454 = vmul.f32 %v3343, %v3440
    %v3455 = vmul.f32 %v3344, %v3444
    %v3456 = vmul.f32 %v3345, %v3448
    %v3461 = vcombine.low %v3453, %v3454
    %v3462 = vcombine.low %v3455, %v3456
    %v3464 = vunpack.c.l.s4 1966171168
    %v3465 = vunpack.c.0.s8 %v3464
    %v3466 = vlaneseq
    %v3467 = vshrl.u32 %v3466, 7
    %v3468 = vsub.s32 %v3465, %v3467
    %v3469 = vrot.slane %v3461, %v3468
    %v3471 = vunpack.c.l.s4 1966171168
    %v3472 = vunpack.c.0.s8 %v3471
    %v3473 = vlaneseq
    %v3474 = vshrl.u32 %v3473, 7
    %v3475 = vsub.s32 %v3472, %v3474
    %v3476 = vrot.slane %v3462, %v3475
    %v3477 = vcombine.low %v3469, %v3476
    %v3479 = vunpack.c.l.s4 1966171168
    %v3480 = vunpack.c.0.s8 %v3479
    %v3481 = vlaneseq
    %v3482 = vshrl.u32 %v3481, 7
    %v3483 = vsub.s32 %v3480, %v3482
    %v3484 = vrot.slane %v3477, %v3483
    %v3486 = vsub.f32 %v3431, %v3484
    %v3487 = vmul.f32 %v3230, %v3436
    %v3488 = vmul.f32 %v3232, %v3440
    %v3489 = vmul.f32 %v3312, %v3444
    %v3490 = vmul.f32 %v3314, %v3448
    %v3492 = vlaneseq
    %v3493 = vshrl.u32 %v3492, 7
    %v3494 = vsub.s32 0, %v3493
    %v3495 = vrot.slane %v3486, %v3494
    %v3496 = vlaneseq
    %v3497 = vshrl.u32 %v3496, 7
    %v3498 = vsub.s32 1, %v3497
    %v3499 = vrot.slane %v3486, %v3498
    %v3500 = vlaneseq
    %v3501 = vshrl.u32 %v3500, 7
    %v3502 = vsub.s32 2, %v3501
    %v3503 = vrot.slane %v3486, %v3502
    %v3504 = vlaneseq
    %v3505 = vshrl.u32 %v3504, 7
    %v3506 = vsub.s32 3, %v3505
    %v3507 = vrot.slane %v3486, %v3506
    %v3512 = vadd.f32 %v3487, %v3495
    %v3513 = vadd.f32 %v3488, %v3499
    %v3514 = vadd.f32 %v3489, %v3503
    %v3515 = vadd.f32 %v3490, %v3507
    %v3516 = vmax.f32 %v3512, 0.0
    %v3517 = vmax.f32 %v3513, 0.0
    %v3518 = vmax.f32 %v3514, 0.0
    %v3519 = vmax.f32 %v3515, 0.0
    %v3520 = vpack.c.bf16 %v3516, %v3516
    %v3521 = vpack.c.bf16 %v3517, %v3517
    %v3522 = vpack.c.bf16 %v3518, %v3518
    %v3523 = vpack.c.bf16 %v3519, %v3519
    %s3524 = scalar_lea.vmem [#allocation4], 3072
    %v3525 = vld [vmem:[%s3524] sm:$0xff]
    %v3526 = vld [vmem:[%s3524 + $0x8] sm:$0xff]
    %v3527 = vld [vmem:[%s3524 + $0x10] sm:$0xff]
    %v3528 = vld [vmem:[%s3524 + $0x18] sm:$0xff]
    %v3529 = vld [vmem:[%s3524 + $0x20] sm:$0xff]
    %v3530 = vld [vmem:[%s3524 + $0x28] sm:$0xff]
    %v3531 = vld [vmem:[%s3524 + $0x30] sm:$0xff]
    %v3532 = vld [vmem:[%s3524 + $0x38] sm:$0xff]
    %v3533 = vld [vmem:[%s3524 + $0x40] sm:$0xff]
    %v3534 = vld [vmem:[%s3524 + $0x48] sm:$0xff]
    %v3535 = vld [vmem:[%s3524 + $0x50] sm:$0xff]
    %v3536 = vld [vmem:[%s3524 + $0x58] sm:$0xff]
    %v3537 = vld [vmem:[%s3524 + $0x60] sm:$0xff]
    %v3538 = vld [vmem:[%s3524 + $0x68] sm:$0xff]
    %v3539 = vld [vmem:[%s3524 + $0x70] sm:$0xff]
    %v3540 = vld [vmem:[%s3524 + $0x78] sm:$0xff]
    %v3541 = vld [vmem:[%s3524 + $0x80] sm:$0xff]
    %v3542 = vld [vmem:[%s3524 + $0x88] sm:$0xff]
    %v3543 = vld [vmem:[%s3524 + $0x90] sm:$0xff]
    %v3544 = vld [vmem:[%s3524 + $0x98] sm:$0xff]
    %v3545 = vld [vmem:[%s3524 + $0xa0] sm:$0xff]
    %v3546 = vld [vmem:[%s3524 + $0xa8] sm:$0xff]
    %v3547 = vld [vmem:[%s3524 + $0xb0] sm:$0xff]
    %v3548 = vld [vmem:[%s3524 + $0xb8] sm:$0xff]
    %v3549 = vld [vmem:[%s3524 + $0xc0] sm:$0xff]
    %v3550 = vld [vmem:[%s3524 + $0xc8] sm:$0xff]
    %v3551 = vld [vmem:[%s3524 + $0xd0] sm:$0xff]
    %v3552 = vld [vmem:[%s3524 + $0xd8] sm:$0xff]
    %v3553 = vld [vmem:[%s3524 + $0xe0] sm:$0xff]
    %v3554 = vld [vmem:[%s3524 + $0xe8] sm:$0xff]
    %v3555 = vld [vmem:[%s3524 + $0xf0] sm:$0xff]
    %v3556 = vld [vmem:[%s3524 + $0xf8] sm:$0xff]
    %v3557 = vld [vmem:[%s3524 + $0x100] sm:$0xff]
    %v3558 = vld [vmem:[%s3524 + $0x108] sm:$0xff]
    %v3559 = vld [vmem:[%s3524 + $0x110] sm:$0xff]
    %v3560 = vld [vmem:[%s3524 + $0x118] sm:$0xff]
    %v3561 = vld [vmem:[%s3524 + $0x120] sm:$0xff]
    %v3562 = vld [vmem:[%s3524 + $0x128] sm:$0xff]
    %v3563 = vld [vmem:[%s3524 + $0x130] sm:$0xff]
    %v3564 = vld [vmem:[%s3524 + $0x138] sm:$0xff]
    %v3565 = vld [vmem:[%s3524 + $0x140] sm:$0xff]
    %v3566 = vld [vmem:[%s3524 + $0x148] sm:$0xff]
    %v3567 = vld [vmem:[%s3524 + $0x150] sm:$0xff]
    %v3568 = vld [vmem:[%s3524 + $0x158] sm:$0xff]
    %v3569 = vld [vmem:[%s3524 + $0x160] sm:$0xff]
    %v3570 = vld [vmem:[%s3524 + $0x168] sm:$0xff]
    %v3571 = vld [vmem:[%s3524 + $0x170] sm:$0xff]
    %v3572 = vld [vmem:[%s3524 + $0x178] sm:$0xff]
    %v3573 = vld [vmem:[%s3524 + $0x180] sm:$0xff]
    %v3574 = vld [vmem:[%s3524 + $0x188] sm:$0xff]
    %v3575 = vld [vmem:[%s3524 + $0x190] sm:$0xff]
    %v3576 = vld [vmem:[%s3524 + $0x198] sm:$0xff]
    %v3577 = vld [vmem:[%s3524 + $0x1a0] sm:$0xff]
    %v3578 = vld [vmem:[%s3524 + $0x1a8] sm:$0xff]
    %v3579 = vld [vmem:[%s3524 + $0x1b0] sm:$0xff]
    %v3580 = vld [vmem:[%s3524 + $0x1b8] sm:$0xff]
    %v3581 = vld [vmem:[%s3524 + $0x1c0] sm:$0xff]
    %v3582 = vld [vmem:[%s3524 + $0x1c8] sm:$0xff]
    %v3583 = vld [vmem:[%s3524 + $0x1d0] sm:$0xff]
    %v3584 = vld [vmem:[%s3524 + $0x1d8] sm:$0xff]
    %v3585 = vld [vmem:[%s3524 + $0x1e0] sm:$0xff]
    %v3586 = vld [vmem:[%s3524 + $0x1e8] sm:$0xff]
    %v3587 = vld [vmem:[%s3524 + $0x1f0] sm:$0xff]
    %v3588 = vld [vmem:[%s3524 + $0x1f8] sm:$0xff]
    %v3589 = vld [vmem:[%s3524 + $0x200] sm:$0xff]
    %v3590 = vld [vmem:[%s3524 + $0x208] sm:$0xff]
    %v3591 = vld [vmem:[%s3524 + $0x210] sm:$0xff]
    %v3592 = vld [vmem:[%s3524 + $0x218] sm:$0xff]
    %v3593 = vld [vmem:[%s3524 + $0x220] sm:$0xff]
    %v3594 = vld [vmem:[%s3524 + $0x228] sm:$0xff]
    %v3595 = vld [vmem:[%s3524 + $0x230] sm:$0xff]
    %v3596 = vld [vmem:[%s3524 + $0x238] sm:$0xff]
    %v3597 = vld [vmem:[%s3524 + $0x240] sm:$0xff]
    %v3598 = vld [vmem:[%s3524 + $0x248] sm:$0xff]
    %v3599 = vld [vmem:[%s3524 + $0x250] sm:$0xff]
    %v3600 = vld [vmem:[%s3524 + $0x258] sm:$0xff]
    %v3601 = vld [vmem:[%s3524 + $0x260] sm:$0xff]
    %v3602 = vld [vmem:[%s3524 + $0x268] sm:$0xff]
    %v3603 = vld [vmem:[%s3524 + $0x270] sm:$0xff]
    %v3604 = vld [vmem:[%s3524 + $0x278] sm:$0xff]
    %v3605 = vld [vmem:[%s3524 + $0x280] sm:$0xff]
    %v3606 = vld [vmem:[%s3524 + $0x288] sm:$0xff]
    %v3607 = vld [vmem:[%s3524 + $0x290] sm:$0xff]
    %v3608 = vld [vmem:[%s3524 + $0x298] sm:$0xff]
    %v3609 = vld [vmem:[%s3524 + $0x2a0] sm:$0xff]
    %v3610 = vld [vmem:[%s3524 + $0x2a8] sm:$0xff]
    %v3611 = vld [vmem:[%s3524 + $0x2b0] sm:$0xff]
    %v3612 = vld [vmem:[%s3524 + $0x2b8] sm:$0xff]
    %v3613 = vld [vmem:[%s3524 + $0x2c0] sm:$0xff]
    %v3614 = vld [vmem:[%s3524 + $0x2c8] sm:$0xff]
    %v3615 = vld [vmem:[%s3524 + $0x2d0] sm:$0xff]
    %v3616 = vld [vmem:[%s3524 + $0x2d8] sm:$0xff]
    %v3617 = vld [vmem:[%s3524 + $0x2e0] sm:$0xff]
    %v3618 = vld [vmem:[%s3524 + $0x2e8] sm:$0xff]
    %v3619 = vld [vmem:[%s3524 + $0x2f0] sm:$0xff]
    %v3620 = vld [vmem:[%s3524 + $0x2f8] sm:$0xff]
    %v3621 = vld [vmem:[%s3524 + $0x300] sm:$0xff]
    %v3622 = vld [vmem:[%s3524 + $0x308] sm:$0xff]
    %v3623 = vld [vmem:[%s3524 + $0x310] sm:$0xff]
    %v3624 = vld [vmem:[%s3524 + $0x318] sm:$0xff]
    %v3625 = vld [vmem:[%s3524 + $0x320] sm:$0xff]
    %v3626 = vld [vmem:[%s3524 + $0x328] sm:$0xff]
    %v3627 = vld [vmem:[%s3524 + $0x330] sm:$0xff]
    %v3628 = vld [vmem:[%s3524 + $0x338] sm:$0xff]
    %v3629 = vld [vmem:[%s3524 + $0x340] sm:$0xff]
    %v3630 = vld [vmem:[%s3524 + $0x348] sm:$0xff]
    %v3631 = vld [vmem:[%s3524 + $0x350] sm:$0xff]
    %v3632 = vld [vmem:[%s3524 + $0x358] sm:$0xff]
    %v3633 = vld [vmem:[%s3524 + $0x360] sm:$0xff]
    %v3634 = vld [vmem:[%s3524 + $0x368] sm:$0xff]
    %v3635 = vld [vmem:[%s3524 + $0x370] sm:$0xff]
    %v3636 = vld [vmem:[%s3524 + $0x378] sm:$0xff]
    %v3637 = vld [vmem:[%s3524 + $0x380] sm:$0xff]
    %v3638 = vld [vmem:[%s3524 + $0x388] sm:$0xff]
    %v3639 = vld [vmem:[%s3524 + $0x390] sm:$0xff]
    %v3640 = vld [vmem:[%s3524 + $0x398] sm:$0xff]
    %v3641 = vld [vmem:[%s3524 + $0x3a0] sm:$0xff]
    %v3642 = vld [vmem:[%s3524 + $0x3a8] sm:$0xff]
    %v3643 = vld [vmem:[%s3524 + $0x3b0] sm:$0xff]
    %v3644 = vld [vmem:[%s3524 + $0x3b8] sm:$0xff]
    %v3645 = vld [vmem:[%s3524 + $0x3c0] sm:$0xff]
    %v3646 = vld [vmem:[%s3524 + $0x3c8] sm:$0xff]
    %v3647 = vld [vmem:[%s3524 + $0x3d0] sm:$0xff]
    %v3648 = vld [vmem:[%s3524 + $0x3d8] sm:$0xff]
    %v3649 = vld [vmem:[%s3524 + $0x3e0] sm:$0xff]
    %v3650 = vld [vmem:[%s3524 + $0x3e8] sm:$0xff]
    %v3651 = vld [vmem:[%s3524 + $0x3f0] sm:$0xff]
    %v3652 = vld [vmem:[%s3524 + $0x3f8] sm:$0xff]
    %v3781 = vunpack.c.l.b16 %v3525
    %v3782 = vunpack.c.h.b16 %v3525
    %v3783 = vunpack.c.l.b16 %v3526
    %v3784 = vunpack.c.h.b16 %v3526
    %v3785 = vunpack.c.l.b16 %v3527
    %v3786 = vunpack.c.h.b16 %v3527
    %v3787 = vunpack.c.l.b16 %v3528
    %v3788 = vunpack.c.h.b16 %v3528
    %v3789 = vunpack.c.l.b16 %v3529
    %v3790 = vunpack.c.h.b16 %v3529
    %v3791 = vunpack.c.l.b16 %v3530
    %v3792 = vunpack.c.h.b16 %v3530
    %v3793 = vunpack.c.l.b16 %v3531
    %v3794 = vunpack.c.h.b16 %v3531
    %v3795 = vunpack.c.l.b16 %v3532
    %v3796 = vunpack.c.h.b16 %v3532
    %v3797 = vunpack.c.l.b16 %v3533
    %v3798 = vunpack.c.h.b16 %v3533
    %v3799 = vunpack.c.l.b16 %v3534
    %v3800 = vunpack.c.h.b16 %v3534
    %v3801 = vunpack.c.l.b16 %v3535
    %v3802 = vunpack.c.h.b16 %v3535
    %v3803 = vunpack.c.l.b16 %v3536
    %v3804 = vunpack.c.h.b16 %v3536
    %v3805 = vunpack.c.l.b16 %v3537
    %v3806 = vunpack.c.h.b16 %v3537
    %v3807 = vunpack.c.l.b16 %v3538
    %v3808 = vunpack.c.h.b16 %v3538
    %v3809 = vunpack.c.l.b16 %v3539
    %v3810 = vunpack.c.h.b16 %v3539
    %v3811 = vunpack.c.l.b16 %v3540
    %v3812 = vunpack.c.h.b16 %v3540
    %v3813 = vunpack.c.l.b16 %v3541
    %v3814 = vunpack.c.h.b16 %v3541
    %v3815 = vunpack.c.l.b16 %v3542
    %v3816 = vunpack.c.h.b16 %v3542
    %v3817 = vunpack.c.l.b16 %v3543
    %v3818 = vunpack.c.h.b16 %v3543
    %v3819 = vunpack.c.l.b16 %v3544
    %v3820 = vunpack.c.h.b16 %v3544
    %v3821 = vunpack.c.l.b16 %v3545
    %v3822 = vunpack.c.h.b16 %v3545
    %v3823 = vunpack.c.l.b16 %v3546
    %v3824 = vunpack.c.h.b16 %v3546
    %v3825 = vunpack.c.l.b16 %v3547
    %v3826 = vunpack.c.h.b16 %v3547
    %v3827 = vunpack.c.l.b16 %v3548
    %v3828 = vunpack.c.h.b16 %v3548
    %v3829 = vunpack.c.l.b16 %v3549
    %v3830 = vunpack.c.h.b16 %v3549
    %v3831 = vunpack.c.l.b16 %v3550
    %v3832 = vunpack.c.h.b16 %v3550
    %v3833 = vunpack.c.l.b16 %v3551
    %v3834 = vunpack.c.h.b16 %v3551
    %v3835 = vunpack.c.l.b16 %v3552
    %v3836 = vunpack.c.h.b16 %v3552
    %v3837 = vunpack.c.l.b16 %v3553
    %v3838 = vunpack.c.h.b16 %v3553
    %v3839 = vunpack.c.l.b16 %v3554
    %v3840 = vunpack.c.h.b16 %v3554
    %v3841 = vunpack.c.l.b16 %v3555
    %v3842 = vunpack.c.h.b16 %v3555
    %v3843 = vunpack.c.l.b16 %v3556
    %v3844 = vunpack.c.h.b16 %v3556
    %v3845 = vunpack.c.l.b16 %v3557
    %v3846 = vunpack.c.h.b16 %v3557
    %v3847 = vunpack.c.l.b16 %v3558
    %v3848 = vunpack.c.h.b16 %v3558
    %v3849 = vunpack.c.l.b16 %v3559
    %v3850 = vunpack.c.h.b16 %v3559
    %v3851 = vunpack.c.l.b16 %v3560
    %v3852 = vunpack.c.h.b16 %v3560
    %v3853 = vunpack.c.l.b16 %v3561
    %v3854 = vunpack.c.h.b16 %v3561
    %v3855 = vunpack.c.l.b16 %v3562
    %v3856 = vunpack.c.h.b16 %v3562
    %v3857 = vunpack.c.l.b16 %v3563
    %v3858 = vunpack.c.h.b16 %v3563
    %v3859 = vunpack.c.l.b16 %v3564
    %v3860 = vunpack.c.h.b16 %v3564
    %v3861 = vunpack.c.l.b16 %v3565
    %v3862 = vunpack.c.h.b16 %v3565
    %v3863 = vunpack.c.l.b16 %v3566
    %v3864 = vunpack.c.h.b16 %v3566
    %v3865 = vunpack.c.l.b16 %v3567
    %v3866 = vunpack.c.h.b16 %v3567
    %v3867 = vunpack.c.l.b16 %v3568
    %v3868 = vunpack.c.h.b16 %v3568
    %v3869 = vunpack.c.l.b16 %v3569
    %v3870 = vunpack.c.h.b16 %v3569
    %v3871 = vunpack.c.l.b16 %v3570
    %v3872 = vunpack.c.h.b16 %v3570
    %v3873 = vunpack.c.l.b16 %v3571
    %v3874 = vunpack.c.h.b16 %v3571
    %v3875 = vunpack.c.l.b16 %v3572
    %v3876 = vunpack.c.h.b16 %v3572
    %v3877 = vunpack.c.l.b16 %v3573
    %v3878 = vunpack.c.h.b16 %v3573
    %v3879 = vunpack.c.l.b16 %v3574
    %v3880 = vunpack.c.h.b16 %v3574
    %v3881 = vunpack.c.l.b16 %v3575
    %v3882 = vunpack.c.h.b16 %v3575
    %v3883 = vunpack.c.l.b16 %v3576
    %v3884 = vunpack.c.h.b16 %v3576
    %v3885 = vunpack.c.l.b16 %v3577
    %v3886 = vunpack.c.h.b16 %v3577
    %v3887 = vunpack.c.l.b16 %v3578
    %v3888 = vunpack.c.h.b16 %v3578
    %v3889 = vunpack.c.l.b16 %v3579
    %v3890 = vunpack.c.h.b16 %v3579
    %v3891 = vunpack.c.l.b16 %v3580
    %v3892 = vunpack.c.h.b16 %v3580
    %v3893 = vunpack.c.l.b16 %v3581
    %v3894 = vunpack.c.h.b16 %v3581
    %v3895 = vunpack.c.l.b16 %v3582
    %v3896 = vunpack.c.h.b16 %v3582
    %v3897 = vunpack.c.l.b16 %v3583
    %v3898 = vunpack.c.h.b16 %v3583
    %v3899 = vunpack.c.l.b16 %v3584
    %v3900 = vunpack.c.h.b16 %v3584
    %v3901 = vunpack.c.l.b16 %v3585
    %v3902 = vunpack.c.h.b16 %v3585
    %v3903 = vunpack.c.l.b16 %v3586
    %v3904 = vunpack.c.h.b16 %v3586
    %v3905 = vunpack.c.l.b16 %v3587
    %v3906 = vunpack.c.h.b16 %v3587
    %v3907 = vunpack.c.l.b16 %v3588
    %v3908 = vunpack.c.h.b16 %v3588
    %v3909 = vunpack.c.l.b16 %v3589
    %v3910 = vunpack.c.h.b16 %v3589
    %v3911 = vunpack.c.l.b16 %v3590
    %v3912 = vunpack.c.h.b16 %v3590
    %v3913 = vunpack.c.l.b16 %v3591
    %v3914 = vunpack.c.h.b16 %v3591
    %v3915 = vunpack.c.l.b16 %v3592
    %v3916 = vunpack.c.h.b16 %v3592
    %v3917 = vunpack.c.l.b16 %v3593
    %v3918 = vunpack.c.h.b16 %v3593
    %v3919 = vunpack.c.l.b16 %v3594
    %v3920 = vunpack.c.h.b16 %v3594
    %v3921 = vunpack.c.l.b16 %v3595
    %v3922 = vunpack.c.h.b16 %v3595
    %v3923 = vunpack.c.l.b16 %v3596
    %v3924 = vunpack.c.h.b16 %v3596
    %v3925 = vunpack.c.l.b16 %v3597
    %v3926 = vunpack.c.h.b16 %v3597
    %v3927 = vunpack.c.l.b16 %v3598
    %v3928 = vunpack.c.h.b16 %v3598
    %v3929 = vunpack.c.l.b16 %v3599
    %v3930 = vunpack.c.h.b16 %v3599
    %v3931 = vunpack.c.l.b16 %v3600
    %v3932 = vunpack.c.h.b16 %v3600
    %v3933 = vunpack.c.l.b16 %v3601
    %v3934 = vunpack.c.h.b16 %v3601
    %v3935 = vunpack.c.l.b16 %v3602
    %v3936 = vunpack.c.h.b16 %v3602
    %v3937 = vunpack.c.l.b16 %v3603
    %v3938 = vunpack.c.h.b16 %v3603
    %v3939 = vunpack.c.l.b16 %v3604
    %v3940 = vunpack.c.h.b16 %v3604
    %v3941 = vunpack.c.l.b16 %v3605
    %v3942 = vunpack.c.h.b16 %v3605
    %v3943 = vunpack.c.l.b16 %v3606
    %v3944 = vunpack.c.h.b16 %v3606
    %v3945 = vunpack.c.l.b16 %v3607
    %v3946 = vunpack.c.h.b16 %v3607
    %v3947 = vunpack.c.l.b16 %v3608
    %v3948 = vunpack.c.h.b16 %v3608
    %v3949 = vunpack.c.l.b16 %v3609
    %v3950 = vunpack.c.h.b16 %v3609
    %v3951 = vunpack.c.l.b16 %v3610
    %v3952 = vunpack.c.h.b16 %v3610
    %v3953 = vunpack.c.l.b16 %v3611
    %v3954 = vunpack.c.h.b16 %v3611
    %v3955 = vunpack.c.l.b16 %v3612
    %v3956 = vunpack.c.h.b16 %v3612
    %v3957 = vunpack.c.l.b16 %v3613
    %v3958 = vunpack.c.h.b16 %v3613
    %v3959 = vunpack.c.l.b16 %v3614
    %v3960 = vunpack.c.h.b16 %v3614
    %v3961 = vunpack.c.l.b16 %v3615
    %v3962 = vunpack.c.h.b16 %v3615
    %v3963 = vunpack.c.l.b16 %v3616
    %v3964 = vunpack.c.h.b16 %v3616
    %v3965 = vunpack.c.l.b16 %v3617
    %v3966 = vunpack.c.h.b16 %v3617
    %v3967 = vunpack.c.l.b16 %v3618
    %v3968 = vunpack.c.h.b16 %v3618
    %v3969 = vunpack.c.l.b16 %v3619
    %v3970 = vunpack.c.h.b16 %v3619
    %v3971 = vunpack.c.l.b16 %v3620
    %v3972 = vunpack.c.h.b16 %v3620
    %v3973 = vunpack.c.l.b16 %v3621
    %v3974 = vunpack.c.h.b16 %v3621
    %v3975 = vunpack.c.l.b16 %v3622
    %v3976 = vunpack.c.h.b16 %v3622
    %v3977 = vunpack.c.l.b16 %v3623
    %v3978 = vunpack.c.h.b16 %v3623
    %v3979 = vunpack.c.l.b16 %v3624
    %v3980 = vunpack.c.h.b16 %v3624
    %v3981 = vunpack.c.l.b16 %v3625
    %v3982 = vunpack.c.h.b16 %v3625
    %v3983 = vunpack.c.l.b16 %v3626
    %v3984 = vunpack.c.h.b16 %v3626
    %v3985 = vunpack.c.l.b16 %v3627
    %v3986 = vunpack.c.h.b16 %v3627
    %v3987 = vunpack.c.l.b16 %v3628
    %v3988 = vunpack.c.h.b16 %v3628
    %v3989 = vunpack.c.l.b16 %v3629
    %v3990 = vunpack.c.h.b16 %v3629
    %v3991 = vunpack.c.l.b16 %v3630
    %v3992 = vunpack.c.h.b16 %v3630
    %v3993 = vunpack.c.l.b16 %v3631
    %v3994 = vunpack.c.h.b16 %v3631
    %v3995 = vunpack.c.l.b16 %v3632
    %v3996 = vunpack.c.h.b16 %v3632
    %v3997 = vunpack.c.l.b16 %v3633
    %v3998 = vunpack.c.h.b16 %v3633
    %v3999 = vunpack.c.l.b16 %v3634
    %v4000 = vunpack.c.h.b16 %v3634
    %v4001 = vunpack.c.l.b16 %v3635
    %v4002 = vunpack.c.h.b16 %v3635
    %v4003 = vunpack.c.l.b16 %v3636
    %v4004 = vunpack.c.h.b16 %v3636
    %v4005 = vunpack.c.l.b16 %v3637
    %v4006 = vunpack.c.h.b16 %v3637
    %v4007 = vunpack.c.l.b16 %v3638
    %v4008 = vunpack.c.h.b16 %v3638
    %v4009 = vunpack.c.l.b16 %v3639
    %v4010 = vunpack.c.h.b16 %v3639
    %v4011 = vunpack.c.l.b16 %v3640
    %v4012 = vunpack.c.h.b16 %v3640
    %v4013 = vunpack.c.l.b16 %v3641
    %v4014 = vunpack.c.h.b16 %v3641
    %v4015 = vunpack.c.l.b16 %v3642
    %v4016 = vunpack.c.h.b16 %v3642
    %v4017 = vunpack.c.l.b16 %v3643
    %v4018 = vunpack.c.h.b16 %v3643
    %v4019 = vunpack.c.l.b16 %v3644
    %v4020 = vunpack.c.h.b16 %v3644
    %v4021 = vunpack.c.l.b16 %v3645
    %v4022 = vunpack.c.h.b16 %v3645
    %v4023 = vunpack.c.l.b16 %v3646
    %v4024 = vunpack.c.h.b16 %v3646
    %v4025 = vunpack.c.l.b16 %v3647
    %v4026 = vunpack.c.h.b16 %v3647
    %v4027 = vunpack.c.l.b16 %v3648
    %v4028 = vunpack.c.h.b16 %v3648
    %v4029 = vunpack.c.l.b16 %v3649
    %v4030 = vunpack.c.h.b16 %v3649
    %v4031 = vunpack.c.l.b16 %v3650
    %v4032 = vunpack.c.h.b16 %v3650
    %v4033 = vunpack.c.l.b16 %v3651
    %v4034 = vunpack.c.h.b16 %v3651
    %v4035 = vunpack.c.l.b16 %v3652
    %v4036 = vunpack.c.h.b16 %v3652
    %v4037 = vpack.c.b16 %v3785, %v3781
    %v4038 = vpack.c.b16 %v3786, %v3782
    %v4039 = vpack.c.b16 %v3787, %v3783
    %v4040 = vpack.c.b16 %v3788, %v3784
    %v4041 = vpack.c.b16 %v3793, %v3789
    %v4042 = vpack.c.b16 %v3794, %v3790
    %v4043 = vpack.c.b16 %v3795, %v3791
    %v4044 = vpack.c.b16 %v3796, %v3792
    %v4045 = vpack.c.b16 %v3801, %v3797
    %v4046 = vpack.c.b16 %v3802, %v3798
    %v4047 = vpack.c.b16 %v3803, %v3799
    %v4048 = vpack.c.b16 %v3804, %v3800
    %v4049 = vpack.c.b16 %v3809, %v3805
    %v4050 = vpack.c.b16 %v3810, %v3806
    %v4051 = vpack.c.b16 %v3811, %v3807
    %v4052 = vpack.c.b16 %v3812, %v3808
    %v4053 = vpack.c.b16 %v3817, %v3813
    %v4054 = vpack.c.b16 %v3818, %v3814
    %v4055 = vpack.c.b16 %v3819, %v3815
    %v4056 = vpack.c.b16 %v3820, %v3816
    %v4057 = vpack.c.b16 %v3825, %v3821
    %v4058 = vpack.c.b16 %v3826, %v3822
    %v4059 = vpack.c.b16 %v3827, %v3823
    %v4060 = vpack.c.b16 %v3828, %v3824
    %v4061 = vpack.c.b16 %v3833, %v3829
    %v4062 = vpack.c.b16 %v3834, %v3830
    %v4063 = vpack.c.b16 %v3835, %v3831
    %v4064 = vpack.c.b16 %v3836, %v3832
    %v4065 = vpack.c.b16 %v3841, %v3837
    %v4066 = vpack.c.b16 %v3842, %v3838
    %v4067 = vpack.c.b16 %v3843, %v3839
    %v4068 = vpack.c.b16 %v3844, %v3840
    %v4069 = vpack.c.b16 %v3849, %v3845
    %v4070 = vpack.c.b16 %v3850, %v3846
    %v4071 = vpack.c.b16 %v3851, %v3847
    %v4072 = vpack.c.b16 %v3852, %v3848
    %v4073 = vpack.c.b16 %v3857, %v3853
    %v4074 = vpack.c.b16 %v3858, %v3854
    %v4075 = vpack.c.b16 %v3859, %v3855
    %v4076 = vpack.c.b16 %v3860, %v3856
    %v4077 = vpack.c.b16 %v3865, %v3861
    %v4078 = vpack.c.b16 %v3866, %v3862
    %v4079 = vpack.c.b16 %v3867, %v3863
    %v4080 = vpack.c.b16 %v3868, %v3864
    %v4081 = vpack.c.b16 %v3873, %v3869
    %v4082 = vpack.c.b16 %v3874, %v3870
    %v4083 = vpack.c.b16 %v3875, %v3871
    %v4084 = vpack.c.b16 %v3876, %v3872
    %v4085 = vpack.c.b16 %v3881, %v3877
    %v4086 = vpack.c.b16 %v3882, %v3878
    %v4087 = vpack.c.b16 %v3883, %v3879
    %v4088 = vpack.c.b16 %v3884, %v3880
    %v4089 = vpack.c.b16 %v3889, %v3885
    %v4090 = vpack.c.b16 %v3890, %v3886
    %v4091 = vpack.c.b16 %v3891, %v3887
    %v4092 = vpack.c.b16 %v3892, %v3888
    %v4093 = vpack.c.b16 %v3897, %v3893
    %v4094 = vpack.c.b16 %v3898, %v3894
    %v4095 = vpack.c.b16 %v3899, %v3895
    %v4096 = vpack.c.b16 %v3900, %v3896
    %v4097 = vpack.c.b16 %v3905, %v3901
    %v4098 = vpack.c.b16 %v3906, %v3902
    %v4099 = vpack.c.b16 %v3907, %v3903
    %v4100 = vpack.c.b16 %v3908, %v3904
    %v4101 = vpack.c.b16 %v3913, %v3909
    %v4102 = vpack.c.b16 %v3914, %v3910
    %v4103 = vpack.c.b16 %v3915, %v3911
    %v4104 = vpack.c.b16 %v3916, %v3912
    %v4105 = vpack.c.b16 %v3921, %v3917
    %v4106 = vpack.c.b16 %v3922, %v3918
    %v4107 = vpack.c.b16 %v3923, %v3919
    %v4108 = vpack.c.b16 %v3924, %v3920
    %v4109 = vpack.c.b16 %v3929, %v3925
    %v4110 = vpack.c.b16 %v3930, %v3926
    %v4111 = vpack.c.b16 %v3931, %v3927
    %v4112 = vpack.c.b16 %v3932, %v3928
    %v4113 = vpack.c.b16 %v3937, %v3933
    %v4114 = vpack.c.b16 %v3938, %v3934
    %v4115 = vpack.c.b16 %v3939, %v3935
    %v4116 = vpack.c.b16 %v3940, %v3936
    %v4117 = vpack.c.b16 %v3945, %v3941
    %v4118 = vpack.c.b16 %v3946, %v3942
    %v4119 = vpack.c.b16 %v3947, %v3943
    %v4120 = vpack.c.b16 %v3948, %v3944
    %v4121 = vpack.c.b16 %v3953, %v3949
    %v4122 = vpack.c.b16 %v3954, %v3950
    %v4123 = vpack.c.b16 %v3955, %v3951
    %v4124 = vpack.c.b16 %v3956, %v3952
    %v4125 = vpack.c.b16 %v3961, %v3957
    %v4126 = vpack.c.b16 %v3962, %v3958
    %v4127 = vpack.c.b16 %v3963, %v3959
    %v4128 = vpack.c.b16 %v3964, %v3960
    %v4129 = vpack.c.b16 %v3969, %v3965
    %v4130 = vpack.c.b16 %v3970, %v3966
    %v4131 = vpack.c.b16 %v3971, %v3967
    %v4132 = vpack.c.b16 %v3972, %v3968
    %v4133 = vpack.c.b16 %v3977, %v3973
    %v4134 = vpack.c.b16 %v3978, %v3974
    %v4135 = vpack.c.b16 %v3979, %v3975
    %v4136 = vpack.c.b16 %v3980, %v3976
    %v4137 = vpack.c.b16 %v3985, %v3981
    %v4138 = vpack.c.b16 %v3986, %v3982
    %v4139 = vpack.c.b16 %v3987, %v3983
    %v4140 = vpack.c.b16 %v3988, %v3984
    %v4141 = vpack.c.b16 %v3993, %v3989
    %v4142 = vpack.c.b16 %v3994, %v3990
    %v4143 = vpack.c.b16 %v3995, %v3991
    %v4144 = vpack.c.b16 %v3996, %v3992
    %v4145 = vpack.c.b16 %v4001, %v3997
    %v4146 = vpack.c.b16 %v4002, %v3998
    %v4147 = vpack.c.b16 %v4003, %v3999
    %v4148 = vpack.c.b16 %v4004, %v4000
    %v4149 = vpack.c.b16 %v4009, %v4005
    %v4150 = vpack.c.b16 %v4010, %v4006
    %v4151 = vpack.c.b16 %v4011, %v4007
    %v4152 = vpack.c.b16 %v4012, %v4008
    %v4153 = vpack.c.b16 %v4017, %v4013
    %v4154 = vpack.c.b16 %v4018, %v4014
    %v4155 = vpack.c.b16 %v4019, %v4015
    %v4156 = vpack.c.b16 %v4020, %v4016
    %v4157 = vpack.c.b16 %v4025, %v4021
    %v4158 = vpack.c.b16 %v4026, %v4022
    %v4159 = vpack.c.b16 %v4027, %v4023
    %v4160 = vpack.c.b16 %v4028, %v4024
    %v4161 = vpack.c.b16 %v4033, %v4029
    %v4162 = vpack.c.b16 %v4034, %v4030
    %v4163 = vpack.c.b16 %v4035, %v4031
    %v4164 = vpack.c.b16 %v4036, %v4032
    %4293 = vmatprep.subr.bf16.mxu0 %v4038
    %4294 = vmatpush1.bf16.msra.mxu0 %v4037
    %4295 = vmatprep.subr.bf16.mxu0 %v4042
    %4296 = vmatpush1.bf16.msra.mxu0 %v4041
    %4297 = vmatprep.subr.bf16.mxu0 %v4046
    %4298 = vmatpush1.bf16.msra.mxu0 %v4045
    %4299 = vmatprep.subr.bf16.mxu0 %v4050
    %4300 = vmatpush1.bf16.msra.mxu0 %v4049
    %4301 = vmatprep.subr.bf16.mxu0 %v4054
    %4302 = vmatpush1.bf16.msra.mxu0 %v4053
    %4303 = vmatprep.subr.bf16.mxu0 %v4058
    %4304 = vmatpush1.bf16.msra.mxu0 %v4057
    %4305 = vmatprep.subr.bf16.mxu0 %v4062
    %4306 = vmatpush1.bf16.msra.mxu0 %v4061
    %4307 = vmatprep.subr.bf16.mxu0 %v4066
    %4308 = vmatpush1.bf16.msra.mxu0 %v4065
    %4309 = vmatprep.subr.bf16.mxu0 %v4070
    %4310 = vmatpush1.bf16.msra.mxu0 %v4069
    %4311 = vmatprep.subr.bf16.mxu0 %v4074
    %4312 = vmatpush1.bf16.msra.mxu0 %v4073
    %4313 = vmatprep.subr.bf16.mxu0 %v4078
    %4314 = vmatpush1.bf16.msra.mxu0 %v4077
    %4315 = vmatprep.subr.bf16.mxu0 %v4082
    %4316 = vmatpush1.bf16.msra.mxu0 %v4081
    %4317 = vmatprep.subr.bf16.mxu0 %v4086
    %4318 = vmatpush1.bf16.msra.mxu0 %v4085
    %4319 = vmatprep.subr.bf16.mxu0 %v4090
    %4320 = vmatpush1.bf16.msra.mxu0 %v4089
    %4321 = vmatprep.subr.bf16.mxu0 %v4094
    %4322 = vmatpush1.bf16.msra.mxu0 %v4093
    %4323 = vmatprep.subr.bf16.mxu0 %v4098
    %4324 = vmatpush1.bf16.msra.mxu0 %v4097
    %4325 = vmatprep.mubr.bf16.mxu0 %v3521
    %4326 = vmatmul.mubr.bf16.gmra.mrb[0].mxu0 %v3520
    %v4327 = vpop.f32.mrb[0].mxu0
    %v4328 = vadd.f32 0.0, %v4327
    %v4329 = vpop.f32.mrb[0].mxu0
    %v4330 = vadd.f32 0.0, %v4329
    %v4331 = vpop.f32.mrb[0].mxu0
    %v4332 = vpop.f32.mrb[0].mxu0
    %4333 = vdwg.mxu0
    %4334 = vmatprep.subr.bf16.mxu0 %v4102
    %4335 = vmatpush1.bf16.msra.mxu0 %v4101
    %4336 = vmatprep.subr.bf16.mxu0 %v4106
    %4337 = vmatpush1.bf16.msra.mxu0 %v4105
    %4338 = vmatprep.subr.bf16.mxu0 %v4110
    %4339 = vmatpush1.bf16.msra.mxu0 %v4109
    %4340 = vmatprep.subr.bf16.mxu0 %v4114
    %4341 = vmatpush1.bf16.msra.mxu0 %v4113
    %4342 = vmatprep.subr.bf16.mxu0 %v4118
    %4343 = vmatpush1.bf16.msra.mxu0 %v4117
    %4344 = vmatprep.subr.bf16.mxu0 %v4122
    %4345 = vmatpush1.bf16.msra.mxu0 %v4121
    %4346 = vmatprep.subr.bf16.mxu0 %v4126
    %4347 = vmatpush1.bf16.msra.mxu0 %v4125
    %4348 = vmatprep.subr.bf16.mxu0 %v4130
    %4349 = vmatpush1.bf16.msra.mxu0 %v4129
    %4350 = vmatprep.subr.bf16.mxu0 %v4134
    %4351 = vmatpush1.bf16.msra.mxu0 %v4133
    %4352 = vmatprep.subr.bf16.mxu0 %v4138
    %4353 = vmatpush1.bf16.msra.mxu0 %v4137
    %4354 = vmatprep.subr.bf16.mxu0 %v4142
    %4355 = vmatpush1.bf16.msra.mxu0 %v4141
    %4356 = vmatprep.subr.bf16.mxu0 %v4146
    %4357 = vmatpush1.bf16.msra.mxu0 %v4145
    %4358 = vmatprep.subr.bf16.mxu0 %v4150
    %4359 = vmatpush1.bf16.msra.mxu0 %v4149
    %4360 = vmatprep.subr.bf16.mxu0 %v4154
    %4361 = vmatpush1.bf16.msra.mxu0 %v4153
    %4362 = vmatprep.subr.bf16.mxu0 %v4158
    %4363 = vmatpush1.bf16.msra.mxu0 %v4157
    %4364 = vmatprep.subr.bf16.mxu0 %v4162
    %4365 = vmatpush1.bf16.msra.mxu0 %v4161
    %4366 = vmatprep.mubr.bf16.mxu0 %v3523
    %4367 = vmatmul.mubr.bf16.gmra.mrb[0].mxu0 %v3522
    %v4368 = vpop.f32.mrb[0].mxu0
    %v4369 = vadd.f32 %v4328, %v4368
    %v4370 = vpop.f32.mrb[0].mxu0
    %v4371 = vadd.f32 %v4330, %v4370
    %v4372 = vpop.f32.mrb[0].mxu0
    %v4373 = vpop.f32.mrb[0].mxu0
    %4374 = vdwg.mxu0
    %4375 = vmatprep.subr.bf16.mxu0 %v4040
    %4376 = vmatpush1.bf16.msra.mxu0 %v4039
    %4377 = vmatprep.subr.bf16.mxu0 %v4044
    %4378 = vmatpush1.bf16.msra.mxu0 %v4043
    %4379 = vmatprep.subr.bf16.mxu0 %v4048
    %4380 = vmatpush1.bf16.msra.mxu0 %v4047
    %4381 = vmatprep.subr.bf16.mxu0 %v4052
    %4382 = vmatpush1.bf16.msra.mxu0 %v4051
    %4383 = vmatprep.subr.bf16.mxu0 %v4056
    %4384 = vmatpush1.bf16.msra.mxu0 %v4055
    %4385 = vmatprep.subr.bf16.mxu0 %v4060
    %4386 = vmatpush1.bf16.msra.mxu0 %v4059
    %4387 = vmatprep.subr.bf16.mxu0 %v4064
    %4388 = vmatpush1.bf16.msra.mxu0 %v4063
    %4389 = vmatprep.subr.bf16.mxu0 %v4068
    %4390 = vmatpush1.bf16.msra.mxu0 %v4067
    %4391 = vmatprep.subr.bf16.mxu0 %v4072
    %4392 = vmatpush1.bf16.msra.mxu0 %v4071
    %4393 = vmatprep.subr.bf16.mxu0 %v4076
    %4394 = vmatpush1.bf16.msra.mxu0 %v4075
    %4395 = vmatprep.subr.bf16.mxu0 %v4080
    %4396 = vmatpush1.bf16.msra.mxu0 %v4079
    %4397 = vmatprep.subr.bf16.mxu0 %v4084
    %4398 = vmatpush1.bf16.msra.mxu0 %v4083
    %4399 = vmatprep.subr.bf16.mxu0 %v4088
    %4400 = vmatpush1.bf16.msra.mxu0 %v4087
    %4401 = vmatprep.subr.bf16.mxu0 %v4092
    %4402 = vmatpush1.bf16.msra.mxu0 %v4091
    %4403 = vmatprep.subr.bf16.mxu0 %v4096
    %4404 = vmatpush1.bf16.msra.mxu0 %v4095
    %4405 = vmatprep.subr.bf16.mxu0 %v4100
    %4406 = vmatpush1.bf16.msra.mxu0 %v4099
    %4407 = vmatprep.mubr.bf16.mxu0 %v3521
    %4408 = vmatmul.mubr.bf16.gmra.mrb[0].mxu0 %v3520
    %v4409 = vpop.f32.mrb[0].mxu0
    %v4410 = vadd.f32 0.0, %v4409
    %v4411 = vpop.f32.mrb[0].mxu0
    %v4412 = vadd.f32 0.0, %v4411
    %v4413 = vpop.f32.mrb[0].mxu0
    %v4414 = vpop.f32.mrb[0].mxu0
    %4415 = vdwg.mxu0
    %4416 = vmatprep.subr.bf16.mxu0 %v4104
    %4417 = vmatpush1.bf16.msra.mxu0 %v4103
    %4418 = vmatprep.subr.bf16.mxu0 %v4108
    %4419 = vmatpush1.bf16.msra.mxu0 %v4107
    %4420 = vmatprep.subr.bf16.mxu0 %v4112
    %4421 = vmatpush1.bf16.msra.mxu0 %v4111
    %4422 = vmatprep.subr.bf16.mxu0 %v4116
    %4423 = vmatpush1.bf16.msra.mxu0 %v4115
    %4424 = vmatprep.subr.bf16.mxu0 %v4120
    %4425 = vmatpush1.bf16.msra.mxu0 %v4119
    %4426 = vmatprep.subr.bf16.mxu0 %v4124
    %4427 = vmatpush1.bf16.msra.mxu0 %v4123
    %4428 = vmatprep.subr.bf16.mxu0 %v4128
    %4429 = vmatpush1.bf16.msra.mxu0 %v4127
    %4430 = vmatprep.subr.bf16.mxu0 %v4132
    %4431 = vmatpush1.bf16.msra.mxu0 %v4131
    %4432 = vmatprep.subr.bf16.mxu0 %v4136
    %4433 = vmatpush1.bf16.msra.mxu0 %v4135
    %4434 = vmatprep.subr.bf16.mxu0 %v4140
    %4435 = vmatpush1.bf16.msra.mxu0 %v4139
    %4436 = vmatprep.subr.bf16.mxu0 %v4144
    %4437 = vmatpush1.bf16.msra.mxu0 %v4143
    %4438 = vmatprep.subr.bf16.mxu0 %v4148
    %4439 = vmatpush1.bf16.msra.mxu0 %v4147
    %4440 = vmatprep.subr.bf16.mxu0 %v4152
    %4441 = vmatpush1.bf16.msra.mxu0 %v4151
    %4442 = vmatprep.subr.bf16.mxu0 %v4156
    %4443 = vmatpush1.bf16.msra.mxu0 %v4155
    %4444 = vmatprep.subr.bf16.mxu0 %v4160
    %4445 = vmatpush1.bf16.msra.mxu0 %v4159
    %4446 = vmatprep.subr.bf16.mxu0 %v4164
    %4447 = vmatpush1.bf16.msra.mxu0 %v4163
    %4448 = vmatprep.mubr.bf16.mxu0 %v3523
    %4449 = vmatmul.mubr.bf16.gmra.mrb[0].mxu0 %v3522
    %v4450 = vpop.f32.mrb[0].mxu0
    %v4451 = vadd.f32 %v4410, %v4450
    %v4452 = vpop.f32.mrb[0].mxu0
    %v4453 = vadd.f32 %v4412, %v4452
    %v4454 = vpop.f32.mrb[0].mxu0
    %v4455 = vpop.f32.mrb[0].mxu0
    %4456 = vdwg.mxu0
    %v4457 = vrot.slane %v4369, 4
    %v4458 = vadd.f32 %v4369, %v4457
    %v4459 = vrot.slane %v4458, 2
    %v4460 = vadd.f32 %v4458, %v4459
    %v4461 = vrot.slane %v4460, 1
    %v4462 = vadd.f32 %v4460, %v4461
    %v4463 = vrot.slane %v4371, 4
    %v4464 = vadd.f32 %v4371, %v4463
    %v4465 = vrot.slane %v4464, 2
    %v4466 = vadd.f32 %v4464, %v4465
    %v4467 = vrot.slane %v4466, 1
    %v4468 = vadd.f32 %v4466, %v4467
    %v4469 = vrot.slane %v4451, 4
    %v4470 = vadd.f32 %v4451, %v4469
    %v4471 = vrot.slane %v4470, 2
    %v4472 = vadd.f32 %v4470, %v4471
    %v4473 = vrot.slane %v4472, 1
    %v4474 = vadd.f32 %v4472, %v4473
    %v4475 = vrot.slane %v4453, 4
    %v4476 = vadd.f32 %v4453, %v4475
    %v4477 = vrot.slane %v4476, 2
    %v4478 = vadd.f32 %v4476, %v4477
    %v4479 = vrot.slane %v4478, 1
    %v4480 = vadd.f32 %v4478, %v4479
    %v4481 = vmul.f32 %v4462, 0.125
    %v4482 = vmul.f32 %v4468, 0.125
    %v4483 = vmul.f32 %v4474, 0.125
    %v4484 = vmul.f32 %v4480, 0.125
    %v4485 = vmul.f32 %v4369, %v4369
    %v4486 = vmul.f32 %v4371, %v4371
    %v4487 = vmul.f32 %v4451, %v4451
    %v4488 = vmul.f32 %v4453, %v4453
    %v4489 = vrot.slane %v4485, 4
    %v4490 = vadd.f32 %v4485, %v4489
    %v4491 = vrot.slane %v4490, 2
    %v4492 = vadd.f32 %v4490, %v4491
    %v4493 = vrot.slane %v4492, 1
    %v4494 = vadd.f32 %v4492, %v4493
    %v4495 = vrot.slane %v4486, 4
    %v4496 = vadd.f32 %v4486, %v4495
    %v4497 = vrot.slane %v4496, 2
    %v4498 = vadd.f32 %v4496, %v4497
    %v4499 = vrot.slane %v4498, 1
    %v4500 = vadd.f32 %v4498, %v4499
    %v4501 = vrot.slane %v4487, 4
    %v4502 = vadd.f32 %v4487, %v4501
    %v4503 = vrot.slane %v4502, 2
    %v4504 = vadd.f32 %v4502, %v4503
    %v4505 = vrot.slane %v4504, 1
    %v4506 = vadd.f32 %v4504, %v4505
    %v4507 = vrot.slane %v4488, 4
    %v4508 = vadd.f32 %v4488, %v4507
    %v4509 = vrot.slane %v4508, 2
    %v4510 = vadd.f32 %v4508, %v4509
    %v4511 = vrot.slane %v4510, 1
    %v4512 = vadd.f32 %v4510, %v4511
    %v4513 = vmul.f32 %v4494, 0.125
    %v4514 = vmul.f32 %v4500, 0.125
    %v4515 = vmul.f32 %v4506, 0.125
    %v4516 = vmul.f32 %v4512, 0.125
    %v4517 = vmul.f32 %v4481, %v4481
    %v4518 = vmul.f32 %v4482, %v4482
    %v4519 = vmul.f32 %v4483, %v4483
    %v4520 = vmul.f32 %v4484, %v4484
    %v4521 = vsub.f32 %v4513, %v4517
    %v4522 = vsub.f32 %v4514, %v4518
    %v4523 = vsub.f32 %v4515, %v4519
    %v4524 = vsub.f32 %v4516, %v4520
    %v4525 = vmax.f32 %v4521, 0.0
    %v4526 = vmax.f32 %v4522, 0.0
    %v4527 = vmax.f32 %v4523, 0.0
    %v4528 = vmax.f32 %v4524, 0.0
    %s4529 = scalar_lea.vmem [#allocation6], 12
    %v4530 = vld [vmem:[%s4529] sm:$0xf]
    %v4531 = vadd.f32 %v4525, 1e-05
    %v4532 = vadd.f32 %v4526, 1e-05
    %v4533 = vadd.f32 %v4527, 1e-05
    %v4534 = vadd.f32 %v4528, 1e-05
    %v4535 = vrsqrt.pop %v4531
    %v4536 = vrsqrt.pop %v4532
    %v4537 = vrsqrt.pop %v4533
    %v4538 = vrsqrt.pop %v4534
    %v4543 = vcombine.low %v4535, %v4536
    %v4544 = vcombine.low %v4537, %v4538
    %v4546 = vunpack.c.l.s4 1966171168
    %v4547 = vunpack.c.0.s8 %v4546
    %v4548 = vlaneseq
    %v4549 = vshrl.u32 %v4548, 7
    %v4550 = vsub.s32 %v4547, %v4549
    %v4551 = vrot.slane %v4543, %v4550
    %v4553 = vunpack.c.l.s4 1966171168
    %v4554 = vunpack.c.0.s8 %v4553
    %v4555 = vlaneseq
    %v4556 = vshrl.u32 %v4555, 7
    %v4557 = vsub.s32 %v4554, %v4556
    %v4558 = vrot.slane %v4544, %v4557
    %v4559 = vcombine.low %v4551, %v4558
    %v4561 = vunpack.c.l.s4 1966171168
    %v4562 = vunpack.c.0.s8 %v4561
    %v4563 = vlaneseq
    %v4564 = vshrl.u32 %v4563, 7
    %v4565 = vsub.s32 %v4562, %v4564
    %v4566 = vrot.slane %v4559, %v4565
    %v4568 = vmul.f32 %v4530, %v4566
    %s4569 = scalar_lea.vmem [#allocation7], 12
    %v4570 = vld [vmem:[%s4569] sm:$0xf]
    %v4572 = vlaneseq
    %v4573 = vshrl.u32 %v4572, 7
    %v4574 = vsub.s32 0, %v4573
    %v4575 = vrot.slane %v4568, %v4574
    %v4576 = vlaneseq
    %v4577 = vshrl.u32 %v4576, 7
    %v4578 = vsub.s32 1, %v4577
    %v4579 = vrot.slane %v4568, %v4578
    %v4580 = vlaneseq
    %v4581 = vshrl.u32 %v4580, 7
    %v4582 = vsub.s32 2, %v4581
    %v4583 = vrot.slane %v4568, %v4582
    %v4584 = vlaneseq
    %v4585 = vshrl.u32 %v4584, 7
    %v4586 = vsub.s32 3, %v4585
    %v4587 = vrot.slane %v4568, %v4586
    %v4592 = vmul.f32 %v4481, %v4575
    %v4593 = vmul.f32 %v4482, %v4579
    %v4594 = vmul.f32 %v4483, %v4583
    %v4595 = vmul.f32 %v4484, %v4587
    %v4600 = vcombine.low %v4592, %v4593
    %v4601 = vcombine.low %v4594, %v4595
    %v4603 = vunpack.c.l.s4 1966171168
    %v4604 = vunpack.c.0.s8 %v4603
    %v4605 = vlaneseq
    %v4606 = vshrl.u32 %v4605, 7
    %v4607 = vsub.s32 %v4604, %v4606
    %v4608 = vrot.slane %v4600, %v4607
    %v4610 = vunpack.c.l.s4 1966171168
    %v4611 = vunpack.c.0.s8 %v4610
    %v4612 = vlaneseq
    %v4613 = vshrl.u32 %v4612, 7
    %v4614 = vsub.s32 %v4611, %v4613
    %v4615 = vrot.slane %v4601, %v4614
    %v4616 = vcombine.low %v4608, %v4615
    %v4618 = vunpack.c.l.s4 1966171168
    %v4619 = vunpack.c.0.s8 %v4618
    %v4620 = vlaneseq
    %v4621 = vshrl.u32 %v4620, 7
    %v4622 = vsub.s32 %v4619, %v4621
    %v4623 = vrot.slane %v4616, %v4622
    %v4625 = vsub.f32 %v4570, %v4623
    %v4626 = vmul.f32 %v4369, %v4575
    %v4627 = vmul.f32 %v4371, %v4579
    %v4628 = vmul.f32 %v4451, %v4583
    %v4629 = vmul.f32 %v4453, %v4587
    %v4631 = vlaneseq
    %v4632 = vshrl.u32 %v4631, 7
    %v4633 = vsub.s32 0, %v4632
    %v4634 = vrot.slane %v4625, %v4633
    %v4635 = vlaneseq
    %v4636 = vshrl.u32 %v4635, 7
    %v4637 = vsub.s32 1, %v4636
    %v4638 = vrot.slane %v4625, %v4637
    %v4639 = vlaneseq
    %v4640 = vshrl.u32 %v4639, 7
    %v4641 = vsub.s32 2, %v4640
    %v4642 = vrot.slane %v4625, %v4641
    %v4643 = vlaneseq
    %v4644 = vshrl.u32 %v4643, 7
    %v4645 = vsub.s32 3, %v4644
    %v4646 = vrot.slane %v4625, %v4645
    %v4651 = vadd.f32 %v4626, %v4634
    %v4652 = vadd.f32 %v4627, %v4638
    %v4653 = vadd.f32 %v4628, %v4642
    %v4654 = vadd.f32 %v4629, %v4646
    %v4655 = vmax.f32 %v4651, 0.0
    %v4656 = vmax.f32 %v4652, 0.0
    %v4657 = vmax.f32 %v4653, 0.0
    %v4658 = vmax.f32 %v4654, 0.0
    %v4659 = vpack.c.bf16 %v4655, %v4655
    %v4660 = vpack.c.bf16 %v4656, %v4656
    %v4661 = vpack.c.bf16 %v4657, %v4657
    %v4662 = vpack.c.bf16 %v4658, %v4658
    %v4663 = vld [vmem:[#allocation9] sm:$0xf]
    %v4664 = vld [vmem:[#allocation9 + $0x4] sm:$0xf]
    %v4665 = vld [vmem:[#allocation9 + $0x8] sm:$0xf]
    %v4666 = vld [vmem:[#allocation9 + $0xc] sm:$0xf]
    %v4667 = vld [vmem:[#allocation9 + $0x10] sm:$0xf]
    %v4668 = vld [vmem:[#allocation9 + $0x14] sm:$0xf]
    %v4669 = vld [vmem:[#allocation9 + $0x18] sm:$0xf]
    %v4670 = vld [vmem:[#allocation9 + $0x1c] sm:$0xf]
    %v4671 = vld [vmem:[#allocation9 + $0x20] sm:$0xf]
    %v4672 = vld [vmem:[#allocation9 + $0x24] sm:$0xf]
    %v4673 = vld [vmem:[#allocation9 + $0x28] sm:$0xf]
    %v4674 = vld [vmem:[#allocation9 + $0x2c] sm:$0xf]
    %v4675 = vld [vmem:[#allocation9 + $0x30] sm:$0xf]
    %v4676 = vld [vmem:[#allocation9 + $0x34] sm:$0xf]
    %v4677 = vld [vmem:[#allocation9 + $0x38] sm:$0xf]
    %v4678 = vld [vmem:[#allocation9 + $0x3c] sm:$0xf]
    %v4679 = vld [vmem:[#allocation9 + $0x40] sm:$0xf]
    %v4680 = vld [vmem:[#allocation9 + $0x44] sm:$0xf]
    %v4681 = vld [vmem:[#allocation9 + $0x48] sm:$0xf]
    %v4682 = vld [vmem:[#allocation9 + $0x4c] sm:$0xf]
    %v4683 = vld [vmem:[#allocation9 + $0x50] sm:$0xf]
    %v4684 = vld [vmem:[#allocation9 + $0x54] sm:$0xf]
    %v4685 = vld [vmem:[#allocation9 + $0x58] sm:$0xf]
    %v4686 = vld [vmem:[#allocation9 + $0x5c] sm:$0xf]
    %v4687 = vld [vmem:[#allocation9 + $0x60] sm:$0xf]
    %v4688 = vld [vmem:[#allocation9 + $0x64] sm:$0xf]
    %v4689 = vld [vmem:[#allocation9 + $0x68] sm:$0xf]
    %v4690 = vld [vmem:[#allocation9 + $0x6c] sm:$0xf]
    %v4691 = vld [vmem:[#allocation9 + $0x70] sm:$0xf]
    %v4692 = vld [vmem:[#allocation9 + $0x74] sm:$0xf]
    %v4693 = vld [vmem:[#allocation9 + $0x78] sm:$0xf]
    %v4694 = vld [vmem:[#allocation9 + $0x7c] sm:$0xf]
    %v4695 = vld [vmem:[#allocation9 + $0x80] sm:$0xf]
    %v4696 = vld [vmem:[#allocation9 + $0x84] sm:$0xf]
    %v4697 = vld [vmem:[#allocation9 + $0x88] sm:$0xf]
    %v4698 = vld [vmem:[#allocation9 + $0x8c] sm:$0xf]
    %v4699 = vld [vmem:[#allocation9 + $0x90] sm:$0xf]
    %v4700 = vld [vmem:[#allocation9 + $0x94] sm:$0xf]
    %v4701 = vld [vmem:[#allocation9 + $0x98] sm:$0xf]
    %v4702 = vld [vmem:[#allocation9 + $0x9c] sm:$0xf]
    %v4703 = vld [vmem:[#allocation9 + $0xa0] sm:$0xf]
    %v4704 = vld [vmem:[#allocation9 + $0xa4] sm:$0xf]
    %v4705 = vld [vmem:[#allocation9 + $0xa8] sm:$0xf]
    %v4706 = vld [vmem:[#allocation9 + $0xac] sm:$0xf]
    %v4707 = vld [vmem:[#allocation9 + $0xb0] sm:$0xf]
    %v4708 = vld [vmem:[#allocation9 + $0xb4] sm:$0xf]
    %v4709 = vld [vmem:[#allocation9 + $0xb8] sm:$0xf]
    %v4710 = vld [vmem:[#allocation9 + $0xbc] sm:$0xf]
    %v4711 = vld [vmem:[#allocation9 + $0xc0] sm:$0xf]
    %v4712 = vld [vmem:[#allocation9 + $0xc4] sm:$0xf]
    %v4713 = vld [vmem:[#allocation9 + $0xc8] sm:$0xf]
    %v4714 = vld [vmem:[#allocation9 + $0xcc] sm:$0xf]
    %v4715 = vld [vmem:[#allocation9 + $0xd0] sm:$0xf]
    %v4716 = vld [vmem:[#allocation9 + $0xd4] sm:$0xf]
    %v4717 = vld [vmem:[#allocation9 + $0xd8] sm:$0xf]
    %v4718 = vld [vmem:[#allocation9 + $0xdc] sm:$0xf]
    %v4719 = vld [vmem:[#allocation9 + $0xe0] sm:$0xf]
    %v4720 = vld [vmem:[#allocation9 + $0xe4] sm:$0xf]
    %v4721 = vld [vmem:[#allocation9 + $0xe8] sm:$0xf]
    %v4722 = vld [vmem:[#allocation9 + $0xec] sm:$0xf]
    %v4723 = vld [vmem:[#allocation9 + $0xf0] sm:$0xf]
    %v4724 = vld [vmem:[#allocation9 + $0xf4] sm:$0xf]
    %v4725 = vld [vmem:[#allocation9 + $0xf8] sm:$0xf]
    %v4726 = vld [vmem:[#allocation9 + $0xfc] sm:$0xf]
    %v4727 = vld [vmem:[#allocation10] sm:$0x1]
    %v4729 = vlaneseq
    %v4730 = vshrl.u32 %v4729, 7
    %v4731 = vsub.s32 0, %v4730
    %v4732 = vrot.slane %v4727, %v4731
    %v4798 = vunpack.c.l.b16 %v4663
    %v4799 = vunpack.c.l.b16 %v4664
    %v4800 = vunpack.c.l.b16 %v4665
    %v4801 = vunpack.c.l.b16 %v4666
    %v4802 = vunpack.c.l.b16 %v4667
    %v4803 = vunpack.c.l.b16 %v4668
    %v4804 = vunpack.c.l.b16 %v4669
    %v4805 = vunpack.c.l.b16 %v4670
    %v4806 = vunpack.c.l.b16 %v4671
    %v4807 = vunpack.c.l.b16 %v4672
    %v4808 = vunpack.c.l.b16 %v4673
    %v4809 = vunpack.c.l.b16 %v4674
    %v4810 = vunpack.c.l.b16 %v4675
    %v4811 = vunpack.c.l.b16 %v4676
    %v4812 = vunpack.c.l.b16 %v4677
    %v4813 = vunpack.c.l.b16 %v4678
    %v4814 = vunpack.c.l.b16 %v4679
    %v4815 = vunpack.c.l.b16 %v4680
    %v4816 = vunpack.c.l.b16 %v4681
    %v4817 = vunpack.c.l.b16 %v4682
    %v4818 = vunpack.c.l.b16 %v4683
    %v4819 = vunpack.c.l.b16 %v4684
    %v4820 = vunpack.c.l.b16 %v4685
    %v4821 = vunpack.c.l.b16 %v4686
    %v4822 = vunpack.c.l.b16 %v4687
    %v4823 = vunpack.c.l.b16 %v4688
    %v4824 = vunpack.c.l.b16 %v4689
    %v4825 = vunpack.c.l.b16 %v4690
    %v4826 = vunpack.c.l.b16 %v4691
    %v4827 = vunpack.c.l.b16 %v4692
    %v4828 = vunpack.c.l.b16 %v4693
    %v4829 = vunpack.c.l.b16 %v4694
    %v4830 = vunpack.c.l.b16 %v4695
    %v4831 = vunpack.c.l.b16 %v4696
    %v4832 = vunpack.c.l.b16 %v4697
    %v4833 = vunpack.c.l.b16 %v4698
    %v4834 = vunpack.c.l.b16 %v4699
    %v4835 = vunpack.c.l.b16 %v4700
    %v4836 = vunpack.c.l.b16 %v4701
    %v4837 = vunpack.c.l.b16 %v4702
    %v4838 = vunpack.c.l.b16 %v4703
    %v4839 = vunpack.c.l.b16 %v4704
    %v4840 = vunpack.c.l.b16 %v4705
    %v4841 = vunpack.c.l.b16 %v4706
    %v4842 = vunpack.c.l.b16 %v4707
    %v4843 = vunpack.c.l.b16 %v4708
    %v4844 = vunpack.c.l.b16 %v4709
    %v4845 = vunpack.c.l.b16 %v4710
    %v4846 = vunpack.c.l.b16 %v4711
    %v4847 = vunpack.c.l.b16 %v4712
    %v4848 = vunpack.c.l.b16 %v4713
    %v4849 = vunpack.c.l.b16 %v4714
    %v4850 = vunpack.c.l.b16 %v4715
    %v4851 = vunpack.c.l.b16 %v4716
    %v4852 = vunpack.c.l.b16 %v4717
    %v4853 = vunpack.c.l.b16 %v4718
    %v4854 = vunpack.c.l.b16 %v4719
    %v4855 = vunpack.c.l.b16 %v4720
    %v4856 = vunpack.c.l.b16 %v4721
    %v4857 = vunpack.c.l.b16 %v4722
    %v4858 = vunpack.c.l.b16 %v4723
    %v4859 = vunpack.c.l.b16 %v4724
    %v4860 = vunpack.c.l.b16 %v4725
    %v4861 = vunpack.c.l.b16 %v4726
    %v4862 = vpack.c.b16 %v4799, %v4798
    %v4863 = vpack.c.b16 %v4801, %v4800
    %v4864 = vpack.c.b16 %v4803, %v4802
    %v4865 = vpack.c.b16 %v4805, %v4804
    %v4866 = vpack.c.b16 %v4807, %v4806
    %v4867 = vpack.c.b16 %v4809, %v4808
    %v4868 = vpack.c.b16 %v4811, %v4810
    %v4869 = vpack.c.b16 %v4813, %v4812
    %v4870 = vpack.c.b16 %v4815, %v4814
    %v4871 = vpack.c.b16 %v4817, %v4816
    %v4872 = vpack.c.b16 %v4819, %v4818
    %v4873 = vpack.c.b16 %v4821, %v4820
    %v4874 = vpack.c.b16 %v4823, %v4822
    %v4875 = vpack.c.b16 %v4825, %v4824
    %v4876 = vpack.c.b16 %v4827, %v4826
    %v4877 = vpack.c.b16 %v4829, %v4828
    %v4878 = vpack.c.b16 %v4831, %v4830
    %v4879 = vpack.c.b16 %v4833, %v4832
    %v4880 = vpack.c.b16 %v4835, %v4834
    %v4881 = vpack.c.b16 %v4837, %v4836
    %v4882 = vpack.c.b16 %v4839, %v4838
    %v4883 = vpack.c.b16 %v4841, %v4840
    %v4884 = vpack.c.b16 %v4843, %v4842
    %v4885 = vpack.c.b16 %v4845, %v4844
    %v4886 = vpack.c.b16 %v4847, %v4846
    %v4887 = vpack.c.b16 %v4849, %v4848
    %v4888 = vpack.c.b16 %v4851, %v4850
    %v4889 = vpack.c.b16 %v4853, %v4852
    %v4890 = vpack.c.b16 %v4855, %v4854
    %v4891 = vpack.c.b16 %v4857, %v4856
    %v4892 = vpack.c.b16 %v4859, %v4858
    %v4893 = vpack.c.b16 %v4861, %v4860
    %4926 = vmatprep.subr.bf16.mxu0 0
    %4927 = vmatpush1.bf16.msra.mxu0 %v4862
    %4928 = vmatprep.subr.bf16.mxu0 0
    %4929 = vmatpush1.bf16.msra.mxu0 %v4863
    %4930 = vmatprep.subr.bf16.mxu0 0
    %4931 = vmatpush1.bf16.msra.mxu0 %v4864
    %4932 = vmatprep.subr.bf16.mxu0 0
    %4933 = vmatpush1.bf16.msra.mxu0 %v4865
    %4934 = vmatprep.subr.bf16.mxu0 0
    %4935 = vmatpush1.bf16.msra.mxu0 %v4866
    %4936 = vmatprep.subr.bf16.mxu0 0
    %4937 = vmatpush1.bf16.msra.mxu0 %v4867
    %4938 = vmatprep.subr.bf16.mxu0 0
    %4939 = vmatpush1.bf16.msra.mxu0 %v4868
    %4940 = vmatprep.subr.bf16.mxu0 0
    %4941 = vmatpush1.bf16.msra.mxu0 %v4869
    %4942 = vmatprep.subr.bf16.mxu0 0
    %4943 = vmatpush1.bf16.msra.mxu0 %v4870
    %4944 = vmatprep.subr.bf16.mxu0 0
    %4945 = vmatpush1.bf16.msra.mxu0 %v4871
    %4946 = vmatprep.subr.bf16.mxu0 0
    %4947 = vmatpush1.bf16.msra.mxu0 %v4872
    %4948 = vmatprep.subr.bf16.mxu0 0
    %4949 = vmatpush1.bf16.msra.mxu0 %v4873
    %4950 = vmatprep.subr.bf16.mxu0 0
    %4951 = vmatpush1.bf16.msra.mxu0 %v4874
    %4952 = vmatprep.subr.bf16.mxu0 0
    %4953 = vmatpush1.bf16.msra.mxu0 %v4875
    %4954 = vmatprep.subr.bf16.mxu0 0
    %4955 = vmatpush1.bf16.msra.mxu0 %v4876
    %4956 = vmatprep.subr.bf16.mxu0 0
    %4957 = vmatpush1.bf16.msra.mxu0 %v4877
    %4958 = vmatprep.mubr.bf16.mxu0 %v4660
    %4959 = vmatmul.mubr.bf16.gmra.mrb[0].mxu0 %v4659
    %v4960 = vpop.f32.mrb[0].mxu0
    %v4961 = vadd.f32 %v4732, %v4960
    %v4962 = vpop.f32.mrb[0].mxu0
    %v4963 = vpop.f32.mrb[0].mxu0
    %v4964 = vpop.f32.mrb[0].mxu0
    %4965 = vdwg.mxu0
    %4966 = vmatprep.subr.bf16.mxu0 0
    %4967 = vmatpush1.bf16.msra.mxu0 %v4878
    %4968 = vmatprep.subr.bf16.mxu0 0
    %4969 = vmatpush1.bf16.msra.mxu0 %v4879
    %4970 = vmatprep.subr.bf16.mxu0 0
    %4971 = vmatpush1.bf16.msra.mxu0 %v4880
    %4972 = vmatprep.subr.bf16.mxu0 0
    %4973 = vmatpush1.bf16.msra.mxu0 %v4881
    %4974 = vmatprep.subr.bf16.mxu0 0
    %4975 = vmatpush1.bf16.msra.mxu0 %v4882
    %4976 = vmatprep.subr.bf16.mxu0 0
    %4977 = vmatpush1.bf16.msra.mxu0 %v4883
    %4978 = vmatprep.subr.bf16.mxu0 0
    %4979 = vmatpush1.bf16.msra.mxu0 %v4884
    %4980 = vmatprep.subr.bf16.mxu0 0
    %4981 = vmatpush1.bf16.msra.mxu0 %v4885
    %4982 = vmatprep.subr.bf16.mxu0 0
    %4983 = vmatpush1.bf16.msra.mxu0 %v4886
    %4984 = vmatprep.subr.bf16.mxu0 0
    %4985 = vmatpush1.bf16.msra.mxu0 %v4887
    %4986 = vmatprep.subr.bf16.mxu0 0
    %4987 = vmatpush1.bf16.msra.mxu0 %v4888
    %4988 = vmatprep.subr.bf16.mxu0 0
    %4989 = vmatpush1.bf16.msra.mxu0 %v4889
    %4990 = vmatprep.subr.bf16.mxu0 0
    %4991 = vmatpush1.bf16.msra.mxu0 %v4890
    %4992 = vmatprep.subr.bf16.mxu0 0
    %4993 = vmatpush1.bf16.msra.mxu0 %v4891
    %4994 = vmatprep.subr.bf16.mxu0 0
    %4995 = vmatpush1.bf16.msra.mxu0 %v4892
    %4996 = vmatprep.subr.bf16.mxu0 0
    %4997 = vmatpush1.bf16.msra.mxu0 %v4893
    %4998 = vmatprep.mubr.bf16.mxu0 %v4662
    %4999 = vmatmul.mubr.bf16.gmra.mrb[0].mxu0 %v4661
    %v5000 = vpop.f32.mrb[0].mxu0
    %v5001 = vadd.f32 %v4961, %v5000
    %v5002 = vpop.f32.mrb[0].mxu0
    %v5003 = vpop.f32.mrb[0].mxu0
    %v5004 = vpop.f32.mrb[0].mxu0
    %5005 = vdwg.mxu0
    %5006 = vst [vmem:[%s6] sm:$0xff] %v5001
    // Predicated region
    $region50: #{domain_classifier_forward.1} parent=1 // pred_check
      _
    $region51: #{domain_classifier_forward.1} parent=1 // pred_check_branch
      %5008 = sbr.rel (0) target = $region53
    $region52: #{domain_classifier_forward.1} parent=1 // pred_region
      _
    $region53: #{domain_classifier_forward.1} parent=1 // pred_fallthru
      _
    // Predicated region
    $region54: #{domain_classifier_forward.1} parent=1 // pred_check
      _
    $region55: #{domain_classifier_forward.1} parent=1 // pred_check_branch
      %5010 = sbr.rel (0) target = $region57
    $region56: #{domain_classifier_forward.1} parent=1 // pred_region
      _
    $region57: #{domain_classifier_forward.1} parent=1 // pred_fallthru
      _
    %5011 = vsyncpa [#allocation3], 1
    %5012 = vsyncpa [#allocation5], 1
    %5013 = vsyncpa [#allocation8], 1
    %5014 = vsyncpa [#allocation11], 1

</llo_original>
